<compile_context>
chip_gen: v5e
topology: v5e:2x2
jax: 0.10.0
libtpu: 0.0.40
codegen_flags: <defaults>
</compile_context>

<pallas_src>
import jax
import jax.numpy as jnp
from jax.experimental import pallas as pl
from jax.experimental.pallas import tpu as pltpu

H_SIZE = 256
N_BLOCKS = 35
K_GROUP = 7                       # residual blocks per grid step (35 = 5 * 7)
N_STEPS = N_BLOCKS // K_GROUP
MAX_TILE_B = 256                  # rows per batch tile (amortizes weight DMA)


def deep_critic_kernel(sa_ref, w0_ref, b0_ref, w1_ref, b1_ref, w2_ref, b2_ref,
                       wf_ref, bf_ref, out_ref, x_ref):
    step = pl.program_id(1)       # reduction axis over residual-block groups
    wdt = w1_ref.dtype            # matmul operand dtype (bf16 or f32 weights)

    # First step of each batch tile: zero the output block (hygiene — it is
    # revisited every step but only written on the last one) and run the input
    # projection; the 256-wide activation lives in VMEM scratch across steps.
    @pl.when(step == 0)
    def _():
        out_ref[...] = jnp.zeros_like(out_ref)
        x_ref[...] = (jnp.dot(sa_ref[...].astype(w0_ref.dtype), w0_ref[...],
                              preferred_element_type=jnp.float32)
                      + b0_ref[...])

    x = x_ref[...]

    # Statically unrolled loop over the K_GROUP weight/bias slabs resident in
    # VMEM for this grid step (all addressing static -> LLO-scheduler friendly).
    for j in range(K_GROUP):
        h = jnp.maximum(x, 0.0)
        h = jnp.dot(h.astype(wdt), w1_ref[j],
                    preferred_element_type=jnp.float32) + b1_ref[j]
        h = jnp.maximum(h, 0.0)
        h = jnp.dot(h.astype(wdt), w2_ref[j],
                    preferred_element_type=jnp.float32) + b2_ref[j]
        x = x + h

    x_ref[...] = x                # carry activation to the next grid step

    # Final head: relu -> Linear(256, 1), only on the last step.
    @pl.when(step == pl.num_programs(1) - 1)
    def _():
        xr = jnp.maximum(x, 0.0)
        out_ref[...] = (jnp.dot(xr.astype(wf_ref.dtype), wf_ref[...],
                                preferred_element_type=jnp.float32)
                        + bf_ref[...])


def deep_critic_forward(state, action, params):
    sa = jnp.concatenate([state, action], axis=1)   # glue in plain JAX
    B, in_dim = sa.shape
    w0, b0, w1, b1, w2, b2, wf, bf = params

    # Pad the batch to a sublane multiple and pick a batch-tile size.
    tile_b = min(max(8, ((B + 7) // 8) * 8), MAX_TILE_B)
    b_pad = ((B + tile_b - 1) // tile_b) * tile_b
    if b_pad != B:
        sa = jnp.pad(sa, ((0, b_pad - B), (0, 0)))
    n_btiles = b_pad // tile_b

    def resident(arr):
        nd = arr.ndim
        return pl.BlockSpec(arr.shape, lambda bi, si, _nd=nd: (0,) * _nd)

    # Weight / bias slabs streamed with the reduction-axis grid index.
    w_stream = pl.BlockSpec((K_GROUP, H_SIZE, H_SIZE), lambda bi, si: (si, 0, 0))
    b_stream = pl.BlockSpec((K_GROUP, 1, H_SIZE), lambda bi, si: (si, 0, 0))

    out = pl.pallas_call(
        deep_critic_kernel,
        out_shape=jax.ShapeDtypeStruct((b_pad, 1), jnp.float32),
        grid=(n_btiles, N_STEPS),
        in_specs=[
            pl.BlockSpec((tile_b, in_dim), lambda bi, si: (bi, 0)),  # sa
            resident(w0),            # (in_dim, 256)
            resident(b0),            # (1, 256)
            w_stream,                # (35, 256, 256) -> (7, 256, 256) per step
            b_stream,                # (35, 1, 256)   -> (7, 1, 256)  per step
            w_stream,
            b_stream,
            resident(wf),            # (256, 1)
            resident(bf),            # (1, 1)
        ],
        out_specs=pl.BlockSpec((tile_b, 1), lambda bi, si: (bi, 0)),
        scratch_shapes=[pltpu.VMEM((tile_b, H_SIZE), jnp.float32)],
        compiler_params=pltpu.CompilerParams(
            # batch tiles independent (v7x megacore), residual chain sequential
            dimension_semantics=("parallel", "arbitrary"),
            vmem_limit_bytes=32 * 1024 * 1024,   # v7x-safe; < 8 MiB used
        ),
    )(sa, w0, b0, w1, b1, w2, b2, wf, bf)
    return out[:B]


def init_params(key, s_dim, a_dim, weight_dtype=jnp.bfloat16):
    """Deterministic init mimicking torch.nn.Linear default (U[-1/sqrt(fan_in), +]).

    W1/W2 (the ~18 MB weight stream) are stored in `weight_dtype` (bf16 default);
    everything else stays f32.
    """
    in_dim = s_dim + a_dim
    ks = jax.random.split(key, 4)

    def lin(k, fan_in, fan_out):
        kw, kb = jax.random.split(k)
        bound = 1.0 / jnp.sqrt(fan_in)
        w = jax.random.uniform(kw, (fan_in, fan_out), jnp.float32, -bound, bound)
        b = jax.random.uniform(kb, (1, fan_out), jnp.float32, -bound, bound)
        return w, b

    def stacked(k, fan_in, fan_out):
        kw, kb = jax.random.split(k)
        bound = 1.0 / jnp.sqrt(fan_in)
        w = jax.random.uniform(kw, (N_BLOCKS, fan_in, fan_out), jnp.float32,
                               -bound, bound).astype(weight_dtype)
        b = jax.random.uniform(kb, (N_BLOCKS, 1, fan_out), jnp.float32,
                               -bound, bound)
        return w, b

    w0, b0 = lin(ks[0], in_dim, H_SIZE)
    w1, b1 = stacked(ks[1], H_SIZE, H_SIZE)
    w2, b2 = stacked(ks[2], H_SIZE, H_SIZE)
    wf, bf = lin(ks[3], H_SIZE, 1)
    return (w0, b0, w1, b1, w2, b2, wf, bf)


def deep_critic_reference(state, action, params):
    """Pure-JAX reference matching the kernel's dtype handling."""
    w0, b0, w1, b1, w2, b2, wf, bf = params
    wdt = w1.dtype
    sa = jnp.concatenate([state, action], axis=1)
    x = jnp.dot(sa.astype(w0.dtype), w0,
                preferred_element_type=jnp.float32) + b0
    for i in range(N_BLOCKS):
        h = jnp.maximum(x, 0.0)
        h = jnp.dot(h.astype(wdt), w1[i], preferred_element_type=jnp.float32) + b1[i]
        h = jnp.maximum(h, 0.0)
        h = jnp.dot(h.astype(wdt), w2[i], preferred_element_type=jnp.float32) + b2[i]
        x = x + h
    x = jnp.maximum(x, 0.0)
    return jnp.dot(x.astype(wf.dtype), wf, preferred_element_type=jnp.float32) + bf


if __name__ == "__main__":
    B, S_DIM, A_DIM = 8, 12, 4    # h_dim unused by the module (h_size=256 hardcoded)

    key = jax.random.PRNGKey(0)
    k_s, k_a, k_p = jax.random.split(key, 3)
    state = jax.random.normal(k_s, (B, S_DIM), jnp.float32)
    action = jax.random.normal(k_a, (B, A_DIM), jnp.float32)

    # --- default path: bf16 W1/W2 streaming, f32 accumulation / residuals ---
    # NOTE: the 35-block bf16 chain drifts vs a pure-f32 PyTorch forward; we
    # validate against a reference with identical dtype handling.
    params_bf16 = init_params(k_p, S_DIM, A_DIM, weight_dtype=jnp.bfloat16)
    q_bf16 = jax.block_until_ready(deep_critic_forward(state, action, params_bf16))
    q_bf16_ref = deep_critic_reference(state, action, params_bf16)
    assert q_bf16.shape == (B, 1)
    assert jnp.allclose(q_bf16, q_bf16_ref, atol=1e-2, rtol=1e-2), (q_bf16, q_bf16_ref)

    # --- f32 weights: exact parity with the PyTorch-style f32 forward pass ---
    params_f32 = init_params(k_p, S_DIM, A_DIM, weight_dtype=jnp.float32)
    q_f32 = jax.block_until_ready(deep_critic_forward(state, action, params_f32))
    q_f32_ref = deep_critic_reference(state, action, params_f32)
    assert jnp.allclose(q_f32, q_f32_ref, atol=1e-3, rtol=1e-3), (q_f32, q_f32_ref)

    print("KERNEL_OK")
</pallas_src>

<mosaic_0001>
module attributes {stable_mosaic.version = 11 : i64} {
  func.func @deep_critic_kernel(%arg0: i32, %arg1: i32, %arg2: memref<8x16xf32, #tpu.memory_space<vmem>>, %arg3: memref<16x256xf32, #tpu.memory_space<vmem>>, %arg4: memref<1x256xf32, #tpu.memory_space<vmem>>, %arg5: memref<7x256x256xbf16, #tpu.memory_space<vmem>>, %arg6: memref<7x1x256xf32, #tpu.memory_space<vmem>>, %arg7: memref<7x256x256xbf16, #tpu.memory_space<vmem>>, %arg8: memref<7x1x256xf32, #tpu.memory_space<vmem>>, %arg9: memref<256x1xf32, #tpu.memory_space<vmem>>, %arg10: memref<1x1xf32, #tpu.memory_space<vmem>>, %arg11: memref<8x1xf32, #tpu.memory_space<vmem>>, %arg12: memref<8x256xf32, #tpu.memory_space<vmem>>) attributes {dimension_semantics = [#tpu.dimension_semantics<parallel>, #tpu.dimension_semantics<arbitrary>], iteration_bounds = array<i64: 1, 5>, scalar_prefetch = 0 : i64, scratch_operands = 1 : i64, tpu.core_type = #tpu.core_type<tc>, window_params = [{transform_indices = @transform_0, window_bounds = array<i64: 8, 16>}, {pipeline_mode = #tpu.pipeline_mode<synchronous>, transform_indices = @transform_1, window_bounds = array<i64: 16, 256>}, {pipeline_mode = #tpu.pipeline_mode<synchronous>, transform_indices = @transform_2, window_bounds = array<i64: 1, 256>}, {transform_indices = @transform_3, window_bounds = array<i64: 7, 256, 256>}, {transform_indices = @transform_4, window_bounds = array<i64: 7, 1, 256>}, {transform_indices = @transform_5, window_bounds = array<i64: 7, 256, 256>}, {transform_indices = @transform_6, window_bounds = array<i64: 7, 1, 256>}, {pipeline_mode = #tpu.pipeline_mode<synchronous>, transform_indices = @transform_7, window_bounds = array<i64: 256, 1>}, {pipeline_mode = #tpu.pipeline_mode<synchronous>, transform_indices = @transform_8, window_bounds = array<i64: 1, 1>}, {transform_indices = @transform_9, window_bounds = array<i64: 8, 1>}]} {
    %c0_i32 = arith.constant 0 : i32
    %0 = arith.cmpi eq, %arg1, %c0_i32 : i32
    %1 = arith.extui %0 : i1 to i32
    %c0_i32_0 = arith.constant 0 : i32
    %2 = arith.cmpi ne, %1, %c0_i32_0 : i32
    scf.if %2 {
      %cst_110 = arith.constant 0.000000e+00 : f32
      %155 = vector.broadcast %cst_110 : f32 to vector<8x1xf32>
      %c0_111 = arith.constant 0 : index
      %c0_112 = arith.constant 0 : index
      %156 = vector.load %arg11[%c0_111, %c0_112] : memref<8x1xf32, #tpu.memory_space<vmem>>, vector<8x1xf32>
      tpu.vector_store %arg11[%c0_111, %c0_112], %155 {strides = array<i32>} : memref<8x1xf32, #tpu.memory_space<vmem>>, vector<8x1xf32>,
      %c0_113 = arith.constant 0 : index
      %c0_114 = arith.constant 0 : index
      %157 = vector.load %arg2[%c0_113, %c0_114] : memref<8x16xf32, #tpu.memory_space<vmem>>, vector<8x16xf32>
      %c0_115 = arith.constant 0 : index
      %c0_116 = arith.constant 0 : index
      %158 = vector.load %arg3[%c0_115, %c0_116] : memref<16x256xf32, #tpu.memory_space<vmem>>, vector<16x256xf32>
      %cst_117 = arith.constant dense<0.000000e+00> : vector<8x256xf32>
      %159 = tpu.matmul %157, %158, %cst_117 {dimension_numbers = #tpu.dot_dimension_numbers<[1], [0], [0], [1], [0, 0, 1, 1], [], []>} : vector<8x16xf32>, vector<16x256xf32>, vector<8x256xf32> -> vector<8x256xf32>
      %c0_118 = arith.constant 0 : index
      %c0_119 = arith.constant 0 : index
      %160 = vector.load %arg4[%c0_118, %c0_119] : memref<1x256xf32, #tpu.memory_space<vmem>>, vector<1x256xf32>
      %161 = vector.broadcast %160 : vector<1x256xf32> to vector<8x256xf32>
      %162 = arith.addf %159, %161 : vector<8x256xf32>
      %c0_120 = arith.constant 0 : index
      %c0_121 = arith.constant 0 : index
      %163 = vector.load %arg12[%c0_120, %c0_121] : memref<8x256xf32, #tpu.memory_space<vmem>>, vector<8x256xf32>
      tpu.vector_store %arg12[%c0_120, %c0_121], %162 {strides = array<i32>} : memref<8x256xf32, #tpu.memory_space<vmem>>, vector<8x256xf32>,
    } else {
    }
    %c0 = arith.constant 0 : index
    %c0_1 = arith.constant 0 : index
    %3 = vector.load %arg12[%c0, %c0_1] : memref<8x256xf32, #tpu.memory_space<vmem>>, vector<8x256xf32>
    %cst = arith.constant 0.000000e+00 : f32
    %4 = vector.broadcast %cst : f32 to vector<8x256xf32>
    %5 = arith.maximumf %3, %4 : vector<8x256xf32>
    %6 = arith.truncf %5 : vector<8x256xf32> to vector<8x256xbf16>
    %c0_2 = arith.constant 0 : index
    %c0_3 = arith.constant 0 : index
    %c0_4 = arith.constant 0 : index
    %7 = vector.load %arg5[%c0_2, %c0_3, %c0_4] : memref<7x256x256xbf16, #tpu.memory_space<vmem>>, vector<1x256x256xbf16>
    %8 = vector.shape_cast %7 : vector<1x256x256xbf16> to vector<256x256xbf16>
    %cst_5 = arith.constant dense<0.000000e+00> : vector<8x256xf32>
    %9 = tpu.matmul %6, %8, %cst_5 {dimension_numbers = #tpu.dot_dimension_numbers<[1], [0], [0], [1], [0, 0, 1, 1], [], []>} : vector<8x256xbf16>, vector<256x256xbf16>, vector<8x256xf32> -> vector<8x256xf32>
    %c0_6 = arith.constant 0 : index
    %c0_7 = arith.constant 0 : index
    %c0_8 = arith.constant 0 : index
    %10 = vector.load %arg6[%c0_6, %c0_7, %c0_8] : memref<7x1x256xf32, #tpu.memory_space<vmem>>, vector<1x1x256xf32>
    %11 = vector.shape_cast %10 : vector<1x1x256xf32> to vector<1x256xf32>
    %12 = vector.broadcast %11 : vector<1x256xf32> to vector<8x256xf32>
    %13 = arith.addf %9, %12 : vector<8x256xf32>
    %cst_9 = arith.constant 0.000000e+00 : f32
    %14 = vector.broadcast %cst_9 : f32 to vector<8x256xf32>
    %15 = arith.maximumf %13, %14 : vector<8x256xf32>
    %16 = arith.truncf %15 : vector<8x256xf32> to vector<8x256xbf16>
    %c0_10 = arith.constant 0 : index
    %c0_11 = arith.constant 0 : index
    %c0_12 = arith.constant 0 : index
    %17 = vector.load %arg7[%c0_10, %c0_11, %c0_12] : memref<7x256x256xbf16, #tpu.memory_space<vmem>>, vector<1x256x256xbf16>
    %18 = vector.shape_cast %17 : vector<1x256x256xbf16> to vector<256x256xbf16>
    %cst_13 = arith.constant dense<0.000000e+00> : vector<8x256xf32>
    %19 = tpu.matmul %16, %18, %cst_13 {dimension_numbers = #tpu.dot_dimension_numbers<[1], [0], [0], [1], [0, 0, 1, 1], [], []>} : vector<8x256xbf16>, vector<256x256xbf16>, vector<8x256xf32> -> vector<8x256xf32>
    %c0_14 = arith.constant 0 : index
    %c0_15 = arith.constant 0 : index
    %c0_16 = arith.constant 0 : index
    %20 = vector.load %arg8[%c0_14, %c0_15, %c0_16] : memref<7x1x256xf32, #tpu.memory_space<vmem>>, vector<1x1x256xf32>
    %21 = vector.shape_cast %20 : vector<1x1x256xf32> to vector<1x256xf32>
    %22 = vector.broadcast %21 : vector<1x256xf32> to vector<8x256xf32>
    %23 = arith.addf %19, %22 : vector<8x256xf32>
    %24 = arith.addf %3, %23 : vector<8x256xf32>
    %cst_17 = arith.constant 0.000000e+00 : f32
    %25 = vector.broadcast %cst_17 : f32 to vector<8x256xf32>
    %26 = arith.maximumf %24, %25 : vector<8x256xf32>
    %27 = arith.truncf %26 : vector<8x256xf32> to vector<8x256xbf16>
    %c1 = arith.constant 1 : index
    %c0_18 = arith.constant 0 : index
    %c0_19 = arith.constant 0 : index
    %28 = vector.load %arg5[%c1, %c0_18, %c0_19] : memref<7x256x256xbf16, #tpu.memory_space<vmem>>, vector<1x256x256xbf16>
    %29 = vector.shape_cast %28 : vector<1x256x256xbf16> to vector<256x256xbf16>
    %cst_20 = arith.constant dense<0.000000e+00> : vector<8x256xf32>
    %30 = tpu.matmul %27, %29, %cst_20 {dimension_numbers = #tpu.dot_dimension_numbers<[1], [0], [0], [1], [0, 0, 1, 1], [], []>} : vector<8x256xbf16>, vector<256x256xbf16>, vector<8x256xf32> -> vector<8x256xf32>
    %c1_21 = arith.constant 1 : index
    %c0_22 = arith.constant 0 : index
    %c0_23 = arith.constant 0 : index
    %31 = vector.load %arg6[%c1_21, %c0_22, %c0_23] : memref<7x1x256xf32, #tpu.memory_space<vmem>>, vector<1x1x256xf32>
    %32 = vector.shape_cast %31 : vector<1x1x256xf32> to vector<1x256xf32>
    %33 = vector.broadcast %32 : vector<1x256xf32> to vector<8x256xf32>
    %34 = arith.addf %30, %33 : vector<8x256xf32>
    %cst_24 = arith.constant 0.000000e+00 : f32
    %35 = vector.broadcast %cst_24 : f32 to vector<8x256xf32>
    %36 = arith.maximumf %34, %35 : vector<8x256xf32>
    %37 = arith.truncf %36 : vector<8x256xf32> to vector<8x256xbf16>
    %c1_25 = arith.constant 1 : index
    %c0_26 = arith.constant 0 : index
    %c0_27 = arith.constant 0 : index
    %38 = vector.load %arg7[%c1_25, %c0_26, %c0_27] : memref<7x256x256xbf16, #tpu.memory_space<vmem>>, vector<1x256x256xbf16>
    %39 = vector.shape_cast %38 : vector<1x256x256xbf16> to vector<256x256xbf16>
    %cst_28 = arith.constant dense<0.000000e+00> : vector<8x256xf32>
    %40 = tpu.matmul %37, %39, %cst_28 {dimension_numbers = #tpu.dot_dimension_numbers<[1], [0], [0], [1], [0, 0, 1, 1], [], []>} : vector<8x256xbf16>, vector<256x256xbf16>, vector<8x256xf32> -> vector<8x256xf32>
    %c1_29 = arith.constant 1 : index
    %c0_30 = arith.constant 0 : index
    %c0_31 = arith.constant 0 : index
    %41 = vector.load %arg8[%c1_29, %c0_30, %c0_31] : memref<7x1x256xf32, #tpu.memory_space<vmem>>, vector<1x1x256xf32>
    %42 = vector.shape_cast %41 : vector<1x1x256xf32> to vector<1x256xf32>
    %43 = vector.broadcast %42 : vector<1x256xf32> to vector<8x256xf32>
    %44 = arith.addf %40, %43 : vector<8x256xf32>
    %45 = arith.addf %24, %44 : vector<8x256xf32>
    %cst_32 = arith.constant 0.000000e+00 : f32
    %46 = vector.broadcast %cst_32 : f32 to vector<8x256xf32>
    %47 = arith.maximumf %45, %46 : vector<8x256xf32>
    %48 = arith.truncf %47 : vector<8x256xf32> to vector<8x256xbf16>
    %c2 = arith.constant 2 : index
    %c0_33 = arith.constant 0 : index
    %c0_34 = arith.constant 0 : index
    %49 = vector.load %arg5[%c2, %c0_33, %c0_34] : memref<7x256x256xbf16, #tpu.memory_space<vmem>>, vector<1x256x256xbf16>
    %50 = vector.shape_cast %49 : vector<1x256x256xbf16> to vector<256x256xbf16>
    %cst_35 = arith.constant dense<0.000000e+00> : vector<8x256xf32>
    %51 = tpu.matmul %48, %50, %cst_35 {dimension_numbers = #tpu.dot_dimension_numbers<[1], [0], [0], [1], [0, 0, 1, 1], [], []>} : vector<8x256xbf16>, vector<256x256xbf16>, vector<8x256xf32> -> vector<8x256xf32>
    %c2_36 = arith.constant 2 : index
    %c0_37 = arith.constant 0 : index
    %c0_38 = arith.constant 0 : index
    %52 = vector.load %arg6[%c2_36, %c0_37, %c0_38] : memref<7x1x256xf32, #tpu.memory_space<vmem>>, vector<1x1x256xf32>
    %53 = vector.shape_cast %52 : vector<1x1x256xf32> to vector<1x256xf32>
    %54 = vector.broadcast %53 : vector<1x256xf32> to vector<8x256xf32>
    %55 = arith.addf %51, %54 : vector<8x256xf32>
    %cst_39 = arith.constant 0.000000e+00 : f32
    %56 = vector.broadcast %cst_39 : f32 to vector<8x256xf32>
    %57 = arith.maximumf %55, %56 : vector<8x256xf32>
    %58 = arith.truncf %57 : vector<8x256xf32> to vector<8x256xbf16>
    %c2_40 = arith.constant 2 : index
    %c0_41 = arith.constant 0 : index
    %c0_42 = arith.constant 0 : index
    %59 = vector.load %arg7[%c2_40, %c0_41, %c0_42] : memref<7x256x256xbf16, #tpu.memory_space<vmem>>, vector<1x256x256xbf16>
    %60 = vector.shape_cast %59 : vector<1x256x256xbf16> to vector<256x256xbf16>
    %cst_43 = arith.constant dense<0.000000e+00> : vector<8x256xf32>
    %61 = tpu.matmul %58, %60, %cst_43 {dimension_numbers = #tpu.dot_dimension_numbers<[1], [0], [0], [1], [0, 0, 1, 1], [], []>} : vector<8x256xbf16>, vector<256x256xbf16>, vector<8x256xf32> -> vector<8x256xf32>
    %c2_44 = arith.constant 2 : index
    %c0_45 = arith.constant 0 : index
    %c0_46 = arith.constant 0 : index
    %62 = vector.load %arg8[%c2_44, %c0_45, %c0_46] : memref<7x1x256xf32, #tpu.memory_space<vmem>>, vector<1x1x256xf32>
    %63 = vector.shape_cast %62 : vector<1x1x256xf32> to vector<1x256xf32>
    %64 = vector.broadcast %63 : vector<1x256xf32> to vector<8x256xf32>
    %65 = arith.addf %61, %64 : vector<8x256xf32>
    %66 = arith.addf %45, %65 : vector<8x256xf32>
    %cst_47 = arith.constant 0.000000e+00 : f32
    %67 = vector.broadcast %cst_47 : f32 to vector<8x256xf32>
    %68 = arith.maximumf %66, %67 : vector<8x256xf32>
    %69 = arith.truncf %68 : vector<8x256xf32> to vector<8x256xbf16>
    %c3 = arith.constant 3 : index
    %c0_48 = arith.constant 0 : index
    %c0_49 = arith.constant 0 : index
    %70 = vector.load %arg5[%c3, %c0_48, %c0_49] : memref<7x256x256xbf16, #tpu.memory_space<vmem>>, vector<1x256x256xbf16>
    %71 = vector.shape_cast %70 : vector<1x256x256xbf16> to vector<256x256xbf16>
    %cst_50 = arith.constant dense<0.000000e+00> : vector<8x256xf32>
    %72 = tpu.matmul %69, %71, %cst_50 {dimension_numbers = #tpu.dot_dimension_numbers<[1], [0], [0], [1], [0, 0, 1, 1], [], []>} : vector<8x256xbf16>, vector<256x256xbf16>, vector<8x256xf32> -> vector<8x256xf32>
    %c3_51 = arith.constant 3 : index
    %c0_52 = arith.constant 0 : index
    %c0_53 = arith.constant 0 : index
    %73 = vector.load %arg6[%c3_51, %c0_52, %c0_53] : memref<7x1x256xf32, #tpu.memory_space<vmem>>, vector<1x1x256xf32>
    %74 = vector.shape_cast %73 : vector<1x1x256xf32> to vector<1x256xf32>
    %75 = vector.broadcast %74 : vector<1x256xf32> to vector<8x256xf32>
    %76 = arith.addf %72, %75 : vector<8x256xf32>
    %cst_54 = arith.constant 0.000000e+00 : f32
    %77 = vector.broadcast %cst_54 : f32 to vector<8x256xf32>
    %78 = arith.maximumf %76, %77 : vector<8x256xf32>
    %79 = arith.truncf %78 : vector<8x256xf32> to vector<8x256xbf16>
    %c3_55 = arith.constant 3 : index
    %c0_56 = arith.constant 0 : index
    %c0_57 = arith.constant 0 : index
    %80 = vector.load %arg7[%c3_55, %c0_56, %c0_57] : memref<7x256x256xbf16, #tpu.memory_space<vmem>>, vector<1x256x256xbf16>
    %81 = vector.shape_cast %80 : vector<1x256x256xbf16> to vector<256x256xbf16>
    %cst_58 = arith.constant dense<0.000000e+00> : vector<8x256xf32>
    %82 = tpu.matmul %79, %81, %cst_58 {dimension_numbers = #tpu.dot_dimension_numbers<[1], [0], [0], [1], [0, 0, 1, 1], [], []>} : vector<8x256xbf16>, vector<256x256xbf16>, vector<8x256xf32> -> vector<8x256xf32>
    %c3_59 = arith.constant 3 : index
    %c0_60 = arith.constant 0 : index
    %c0_61 = arith.constant 0 : index
    %83 = vector.load %arg8[%c3_59, %c0_60, %c0_61] : memref<7x1x256xf32, #tpu.memory_space<vmem>>, vector<1x1x256xf32>
    %84 = vector.shape_cast %83 : vector<1x1x256xf32> to vector<1x256xf32>
    %85 = vector.broadcast %84 : vector<1x256xf32> to vector<8x256xf32>
    %86 = arith.addf %82, %85 : vector<8x256xf32>
    %87 = arith.addf %66, %86 : vector<8x256xf32>
    %cst_62 = arith.constant 0.000000e+00 : f32
    %88 = vector.broadcast %cst_62 : f32 to vector<8x256xf32>
    %89 = arith.maximumf %87, %88 : vector<8x256xf32>
    %90 = arith.truncf %89 : vector<8x256xf32> to vector<8x256xbf16>
    %c4 = arith.constant 4 : index
    %c0_63 = arith.constant 0 : index
    %c0_64 = arith.constant 0 : index
    %91 = vector.load %arg5[%c4, %c0_63, %c0_64] : memref<7x256x256xbf16, #tpu.memory_space<vmem>>, vector<1x256x256xbf16>
    %92 = vector.shape_cast %91 : vector<1x256x256xbf16> to vector<256x256xbf16>
    %cst_65 = arith.constant dense<0.000000e+00> : vector<8x256xf32>
    %93 = tpu.matmul %90, %92, %cst_65 {dimension_numbers = #tpu.dot_dimension_numbers<[1], [0], [0], [1], [0, 0, 1, 1], [], []>} : vector<8x256xbf16>, vector<256x256xbf16>, vector<8x256xf32> -> vector<8x256xf32>
    %c4_66 = arith.constant 4 : index
    %c0_67 = arith.constant 0 : index
    %c0_68 = arith.constant 0 : index
    %94 = vector.load %arg6[%c4_66, %c0_67, %c0_68] : memref<7x1x256xf32, #tpu.memory_space<vmem>>, vector<1x1x256xf32>
    %95 = vector.shape_cast %94 : vector<1x1x256xf32> to vector<1x256xf32>
    %96 = vector.broadcast %95 : vector<1x256xf32> to vector<8x256xf32>
    %97 = arith.addf %93, %96 : vector<8x256xf32>
    %cst_69 = arith.constant 0.000000e+00 : f32
    %98 = vector.broadcast %cst_69 : f32 to vector<8x256xf32>
    %99 = arith.maximumf %97, %98 : vector<8x256xf32>
    %100 = arith.truncf %99 : vector<8x256xf32> to vector<8x256xbf16>
    %c4_70 = arith.constant 4 : index
    %c0_71 = arith.constant 0 : index
    %c0_72 = arith.constant 0 : index
    %101 = vector.load %arg7[%c4_70, %c0_71, %c0_72] : memref<7x256x256xbf16, #tpu.memory_space<vmem>>, vector<1x256x256xbf16>
    %102 = vector.shape_cast %101 : vector<1x256x256xbf16> to vector<256x256xbf16>
    %cst_73 = arith.constant dense<0.000000e+00> : vector<8x256xf32>
    %103 = tpu.matmul %100, %102, %cst_73 {dimension_numbers = #tpu.dot_dimension_numbers<[1], [0], [0], [1], [0, 0, 1, 1], [], []>} : vector<8x256xbf16>, vector<256x256xbf16>, vector<8x256xf32> -> vector<8x256xf32>
    %c4_74 = arith.constant 4 : index
    %c0_75 = arith.constant 0 : index
    %c0_76 = arith.constant 0 : index
    %104 = vector.load %arg8[%c4_74, %c0_75, %c0_76] : memref<7x1x256xf32, #tpu.memory_space<vmem>>, vector<1x1x256xf32>
    %105 = vector.shape_cast %104 : vector<1x1x256xf32> to vector<1x256xf32>
    %106 = vector.broadcast %105 : vector<1x256xf32> to vector<8x256xf32>
    %107 = arith.addf %103, %106 : vector<8x256xf32>
    %108 = arith.addf %87, %107 : vector<8x256xf32>
    %cst_77 = arith.constant 0.000000e+00 : f32
    %109 = vector.broadcast %cst_77 : f32 to vector<8x256xf32>
    %110 = arith.maximumf %108, %109 : vector<8x256xf32>
    %111 = arith.truncf %110 : vector<8x256xf32> to vector<8x256xbf16>
    %c5 = arith.constant 5 : index
    %c0_78 = arith.constant 0 : index
    %c0_79 = arith.constant 0 : index
    %112 = vector.load %arg5[%c5, %c0_78, %c0_79] : memref<7x256x256xbf16, #tpu.memory_space<vmem>>, vector<1x256x256xbf16>
    %113 = vector.shape_cast %112 : vector<1x256x256xbf16> to vector<256x256xbf16>
    %cst_80 = arith.constant dense<0.000000e+00> : vector<8x256xf32>
    %114 = tpu.matmul %111, %113, %cst_80 {dimension_numbers = #tpu.dot_dimension_numbers<[1], [0], [0], [1], [0, 0, 1, 1], [], []>} : vector<8x256xbf16>, vector<256x256xbf16>, vector<8x256xf32> -> vector<8x256xf32>
    %c5_81 = arith.constant 5 : index
    %c0_82 = arith.constant 0 : index
    %c0_83 = arith.constant 0 : index
    %115 = vector.load %arg6[%c5_81, %c0_82, %c0_83] : memref<7x1x256xf32, #tpu.memory_space<vmem>>, vector<1x1x256xf32>
    %116 = vector.shape_cast %115 : vector<1x1x256xf32> to vector<1x256xf32>
    %117 = vector.broadcast %116 : vector<1x256xf32> to vector<8x256xf32>
    %118 = arith.addf %114, %117 : vector<8x256xf32>
    %cst_84 = arith.constant 0.000000e+00 : f32
    %119 = vector.broadcast %cst_84 : f32 to vector<8x256xf32>
    %120 = arith.maximumf %118, %119 : vector<8x256xf32>
    %121 = arith.truncf %120 : vector<8x256xf32> to vector<8x256xbf16>
    %c5_85 = arith.constant 5 : index
    %c0_86 = arith.constant 0 : index
    %c0_87 = arith.constant 0 : index
    %122 = vector.load %arg7[%c5_85, %c0_86, %c0_87] : memref<7x256x256xbf16, #tpu.memory_space<vmem>>, vector<1x256x256xbf16>
    %123 = vector.shape_cast %122 : vector<1x256x256xbf16> to vector<256x256xbf16>
    %cst_88 = arith.constant dense<0.000000e+00> : vector<8x256xf32>
    %124 = tpu.matmul %121, %123, %cst_88 {dimension_numbers = #tpu.dot_dimension_numbers<[1], [0], [0], [1], [0, 0, 1, 1], [], []>} : vector<8x256xbf16>, vector<256x256xbf16>, vector<8x256xf32> -> vector<8x256xf32>
    %c5_89 = arith.constant 5 : index
    %c0_90 = arith.constant 0 : index
    %c0_91 = arith.constant 0 : index
    %125 = vector.load %arg8[%c5_89, %c0_90, %c0_91] : memref<7x1x256xf32, #tpu.memory_space<vmem>>, vector<1x1x256xf32>
    %126 = vector.shape_cast %125 : vector<1x1x256xf32> to vector<1x256xf32>
    %127 = vector.broadcast %126 : vector<1x256xf32> to vector<8x256xf32>
    %128 = arith.addf %124, %127 : vector<8x256xf32>
    %129 = arith.addf %108, %128 : vector<8x256xf32>
    %cst_92 = arith.constant 0.000000e+00 : f32
    %130 = vector.broadcast %cst_92 : f32 to vector<8x256xf32>
    %131 = arith.maximumf %129, %130 : vector<8x256xf32>
    %132 = arith.truncf %131 : vector<8x256xf32> to vector<8x256xbf16>
    %c6 = arith.constant 6 : index
    %c0_93 = arith.constant 0 : index
    %c0_94 = arith.constant 0 : index
    %133 = vector.load %arg5[%c6, %c0_93, %c0_94] : memref<7x256x256xbf16, #tpu.memory_space<vmem>>, vector<1x256x256xbf16>
    %134 = vector.shape_cast %133 : vector<1x256x256xbf16> to vector<256x256xbf16>
    %cst_95 = arith.constant dense<0.000000e+00> : vector<8x256xf32>
    %135 = tpu.matmul %132, %134, %cst_95 {dimension_numbers = #tpu.dot_dimension_numbers<[1], [0], [0], [1], [0, 0, 1, 1], [], []>} : vector<8x256xbf16>, vector<256x256xbf16>, vector<8x256xf32> -> vector<8x256xf32>
    %c6_96 = arith.constant 6 : index
    %c0_97 = arith.constant 0 : index
    %c0_98 = arith.constant 0 : index
    %136 = vector.load %arg6[%c6_96, %c0_97, %c0_98] : memref<7x1x256xf32, #tpu.memory_space<vmem>>, vector<1x1x256xf32>
    %137 = vector.shape_cast %136 : vector<1x1x256xf32> to vector<1x256xf32>
    %138 = vector.broadcast %137 : vector<1x256xf32> to vector<8x256xf32>
    %139 = arith.addf %135, %138 : vector<8x256xf32>
    %cst_99 = arith.constant 0.000000e+00 : f32
    %140 = vector.broadcast %cst_99 : f32 to vector<8x256xf32>
    %141 = arith.maximumf %139, %140 : vector<8x256xf32>
    %142 = arith.truncf %141 : vector<8x256xf32> to vector<8x256xbf16>
    %c6_100 = arith.constant 6 : index
    %c0_101 = arith.constant 0 : index
    %c0_102 = arith.constant 0 : index
    %143 = vector.load %arg7[%c6_100, %c0_101, %c0_102] : memref<7x256x256xbf16, #tpu.memory_space<vmem>>, vector<1x256x256xbf16>
    %144 = vector.shape_cast %143 : vector<1x256x256xbf16> to vector<256x256xbf16>
    %cst_103 = arith.constant dense<0.000000e+00> : vector<8x256xf32>
    %145 = tpu.matmul %142, %144, %cst_103 {dimension_numbers = #tpu.dot_dimension_numbers<[1], [0], [0], [1], [0, 0, 1, 1], [], []>} : vector<8x256xbf16>, vector<256x256xbf16>, vector<8x256xf32> -> vector<8x256xf32>
    %c6_104 = arith.constant 6 : index
    %c0_105 = arith.constant 0 : index
    %c0_106 = arith.constant 0 : index
    %146 = vector.load %arg8[%c6_104, %c0_105, %c0_106] : memref<7x1x256xf32, #tpu.memory_space<vmem>>, vector<1x1x256xf32>
    %147 = vector.shape_cast %146 : vector<1x1x256xf32> to vector<1x256xf32>
    %148 = vector.broadcast %147 : vector<1x256xf32> to vector<8x256xf32>
    %149 = arith.addf %145, %148 : vector<8x256xf32>
    %150 = arith.addf %129, %149 : vector<8x256xf32>
    %c0_107 = arith.constant 0 : index
    %c0_108 = arith.constant 0 : index
    %151 = vector.load %arg12[%c0_107, %c0_108] : memref<8x256xf32, #tpu.memory_space<vmem>>, vector<8x256xf32>
    tpu.vector_store %arg12[%c0_107, %c0_108], %150 {strides = array<i32>} : memref<8x256xf32, #tpu.memory_space<vmem>>, vector<8x256xf32>,
    %c4_i32 = arith.constant 4 : i32
    %152 = arith.cmpi eq, %arg1, %c4_i32 : i32
    %153 = arith.extui %152 : i1 to i32
    %c0_i32_109 = arith.constant 0 : i32
    %154 = arith.cmpi ne, %153, %c0_i32_109 : i32
    scf.if %154 {
      %cst_110 = arith.constant 0.000000e+00 : f32
      %155 = vector.broadcast %cst_110 : f32 to vector<8x256xf32>
      %156 = arith.maximumf %150, %155 : vector<8x256xf32>
      %c0_111 = arith.constant 0 : index
      %c0_112 = arith.constant 0 : index
      %157 = vector.load %arg9[%c0_111, %c0_112] : memref<256x1xf32, #tpu.memory_space<vmem>>, vector<256x1xf32>
      %cst_113 = arith.constant dense<0.000000e+00> : vector<8x1xf32>
      %158 = tpu.matmul %156, %157, %cst_113 {dimension_numbers = #tpu.dot_dimension_numbers<[1], [0], [0], [1], [0, 0, 1, 1], [], []>} : vector<8x256xf32>, vector<256x1xf32>, vector<8x1xf32> -> vector<8x1xf32>
      %c0_114 = arith.constant 0 : index
      %c0_115 = arith.constant 0 : index
      %159 = vector.load %arg10[%c0_114, %c0_115] : memref<1x1xf32, #tpu.memory_space<vmem>>, vector<1x1xf32>
      %160 = vector.broadcast %159 : vector<1x1xf32> to vector<8x1xf32>
      %161 = arith.addf %158, %160 : vector<8x1xf32>
      %c0_116 = arith.constant 0 : index
      %c0_117 = arith.constant 0 : index
      %162 = vector.load %arg11[%c0_116, %c0_117] : memref<8x1xf32, #tpu.memory_space<vmem>>, vector<8x1xf32>
      tpu.vector_store %arg11[%c0_116, %c0_117], %161 {strides = array<i32>} : memref<8x1xf32, #tpu.memory_space<vmem>>, vector<8x1xf32>,
    } else {
    }
    return
  }
  func.func @transform_0(%arg0: i32, %arg1: i32) -> (i32, i32) {
    %c0_i32 = arith.constant 0 : i32
    %c0_i32_0 = arith.constant 0 : i32
    return %arg0, %c0_i32 : i32, i32
  }
  func.func @transform_1(%arg0: i32, %arg1: i32) -> (i32, i32) {
    %c0_i32 = arith.constant 0 : i32
    %c0_i32_0 = arith.constant 0 : i32
    %c0_i32_1 = arith.constant 0 : i32
    return %c0_i32, %c0_i32_0 : i32, i32
  }
  func.func @transform_2(%arg0: i32, %arg1: i32) -> (i32, i32) {
    %c0_i32 = arith.constant 0 : i32
    %c0_i32_0 = arith.constant 0 : i32
    %c0_i32_1 = arith.constant 0 : i32
    return %c0_i32, %c0_i32_0 : i32, i32
  }
  func.func @transform_3(%arg0: i32, %arg1: i32) -> (i32, i32, i32) {
    %c0_i32 = arith.constant 0 : i32
    %c0_i32_0 = arith.constant 0 : i32
    %c0_i32_1 = arith.constant 0 : i32
    return %arg1, %c0_i32, %c0_i32_0 : i32, i32, i32
  }
  func.func @transform_4(%arg0: i32, %arg1: i32) -> (i32, i32, i32) {
    %c0_i32 = arith.constant 0 : i32
    %c0_i32_0 = arith.constant 0 : i32
    %c0_i32_1 = arith.constant 0 : i32
    return %arg1, %c0_i32, %c0_i32_0 : i32, i32, i32
  }
  func.func @transform_5(%arg0: i32, %arg1: i32) -> (i32, i32, i32) {
    %c0_i32 = arith.constant 0 : i32
    %c0_i32_0 = arith.constant 0 : i32
    %c0_i32_1 = arith.constant 0 : i32
    return %arg1, %c0_i32, %c0_i32_0 : i32, i32, i32
  }
  func.func @transform_6(%arg0: i32, %arg1: i32) -> (i32, i32, i32) {
    %c0_i32 = arith.constant 0 : i32
    %c0_i32_0 = arith.constant 0 : i32
    %c0_i32_1 = arith.constant 0 : i32
    return %arg1, %c0_i32, %c0_i32_0 : i32, i32, i32
  }
  func.func @transform_7(%arg0: i32, %arg1: i32) -> (i32, i32) {
    %c0_i32 = arith.constant 0 : i32
    %c0_i32_0 = arith.constant 0 : i32
    %c0_i32_1 = arith.constant 0 : i32
    return %c0_i32, %c0_i32_0 : i32, i32
  }
  func.func @transform_8(%arg0: i32, %arg1: i32) -> (i32, i32) {
    %c0_i32 = arith.constant 0 : i32
    %c0_i32_0 = arith.constant 0 : i32
    %c0_i32_1 = arith.constant 0 : i32
    return %c0_i32, %c0_i32_0 : i32, i32
  }
  func.func @transform_9(%arg0: i32, %arg1: i32) -> (i32, i32) {
    %c0_i32 = arith.constant 0 : i32
    %c0_i32_0 = arith.constant 0 : i32
    return %arg0, %c0_i32 : i32, i32
  }
}

</mosaic_0001>

<llo_original>
// kernel: tpu_custom_call.1
$region0: #{tpu_custom_call.1}
  #allocation0 [shape = 'u32[]', space=smem, size = 0x4, offset = 0x4, fixed_abs, tag = 'smem constant byte address 0x4 - core index']
  #allocation1 [shape = 'u32[72,128]{1,0:T(1,128)}', space=vmem, size = 0x9000, scoped, tag = 'internal scratch']
  #allocation2 [shape = 'f32[8,256]{1,0:T(8,128)}', space=vmem, size = 0x2000, scoped, tag = 'scratch operand']
  #allocation3 [shape = 'f32[1,1]{1,0:T(1,128)S(1)}', space=vmem, size = 0x200, scoped, tag = 'scoped memory for tpu_custom_call.1']
  %s0 = inlined_call_operand.hbm [shape: f32[8,16], index: 0, kind: input, shape index: {}]
  %s1 = inlined_call_operand.hbm [shape: f32[16,256], index: 1, kind: input, shape index: {}]
  %s2 = inlined_call_operand.hbm [shape: f32[1,256], index: 2, kind: input, shape index: {}]
  %s3 = inlined_call_operand.hbm [shape: bf16[35,256,256], index: 3, kind: input, shape index: {}]
  %s4 = inlined_call_operand.hbm [shape: f32[35,1,256], index: 4, kind: input, shape index: {}]
  %s5 = inlined_call_operand.hbm [shape: bf16[35,256,256], index: 5, kind: input, shape index: {}]
  %s6 = inlined_call_operand.hbm [shape: f32[35,1,256], index: 6, kind: input, shape index: {}]
  %s7 = inlined_call_operand.vmem [shape: f32[256,1], index: 7, kind: input, shape index: {}]
  %s8 = inlined_call_operand.<no memory space> [shape: f32[1,1], index: 8, kind: input, shape index: {}]
  %s9 = inlined_call_operand.vmem [shape: f32[8,1], index: 9, kind: output, shape index: {}]
  %s10 = sld [smem:[#allocation0]]
  $region105: #{tpu_custom_call.1} parent=0
    _
  %s12 = ssub.s32 1, %s10
  %s13 = scalar_select 0, %s12, %s10
  %v14 = vstv %s8
  %15 = vst [vmem:[#allocation3] sm:$0x1] %v14
  $region1: #{tpu_custom_call.1} parent=0
    #allocation4 [shape = 'u8[4096]{0}', space=vmem, size = 0x1000, scoped, tag = 'input window, operand 0, single buffered']
    #allocation5 [shape = 's32[2]{0}', space=sflag, size = 0x8, scoped, tag = 'scoped memory for tpu_custom_call.1']
    #allocation6 [shape = 'u8[16384]{0}', space=vmem, size = 0x4000, scoped, tag = 'input window, operand 1, single buffered']
    #allocation7 [shape = 's32[1]{0}', space=sflag, size = 0x4, scoped, tag = 'scoped memory for tpu_custom_call.1']
    #allocation8 [shape = 'u8[1024]{0}', space=vmem, size = 0x400, scoped, tag = 'input window, operand 2, single buffered']
    #allocation9 [shape = 'u8[1835008]{0}', space=vmem, size = 0x1c0000, scoped, tag = 'input window, operand 3']
    #allocation10 [shape = 's32[2]{0}', space=sflag, size = 0x8, scoped, tag = 'scoped memory for tpu_custom_call.1']
    #allocation11 [shape = 'u8[14336]{0}', space=vmem, size = 0x3800, scoped, tag = 'input window, operand 4']
    #allocation12 [shape = 'u8[1835008]{0}', space=vmem, size = 0x1c0000, scoped, tag = 'input window, operand 5']
    #allocation13 [shape = 's32[2]{0}', space=sflag, size = 0x8, scoped, tag = 'scoped memory for tpu_custom_call.1']
    #allocation14 [shape = 'u8[14336]{0}', space=vmem, size = 0x3800, scoped, tag = 'input window, operand 6']
    %16 = vsyncpa [#allocation5], 0
    %17 = vsyncpa [#allocation7], 0
    %18 = vsyncpa [#allocation10], 0
    %s19 = scalar_lea.sflag [#allocation10], 1
    %20 = vsyncpa %s19, 0
    %21 = vsyncpa [#allocation13], 0
    %s22 = scalar_lea.sflag [#allocation13], 1
    %23 = vsyncpa %s22, 0
    loop: start=0, step=1, limit=7
    $region2: #{tpu_custom_call.1} parent=1 // loop_pre_header
      _
    $region3: #{tpu_custom_call.1} parent=1 // loop_header
      %s25 = sphi 0, %s29
      %p26 = scmp.ge.s32.totalorder %s25, 7
      %s32 = sphi 0, %s44
      %s33 = sphi 0, %s40
      %s34 = sphi 0, %s32
      %s35 = sphi 0, %s33
      %s36 = sphi 0, %s34
      %s37 = sphi 0, %s35
      %s47 = sphi 0, %s49
      %s50 = sphi 0, %s47
      %s51 = sphi 0, %s50
      %s67 = sphi 0, %s51
      %s71 = sphi 0, %s71
      %s73 = sphi 0, %s71
      %s74 = sphi 0, %s73
      %s88 = sphi 0, %s74
      %s92 = sphi 0, %s92
      %s94 = sphi 0, %s92
      %s95 = sphi 0, %s94
      %s109 = sphi 0, %s95
      %s115 = sphi 0, %s117
      %s118 = sphi 0, %s115
      %s119 = sphi 0, %s118
      %s135 = sphi 0, %s119
      %s141 = sphi 0, %s143
      %s144 = sphi 0, %s141
      %s145 = sphi 0, %s144
      %s161 = sphi 0, %s145
      %s167 = sphi 0, %s169
      %s170 = sphi 0, %s167
      %s171 = sphi 0, %s170
      %s187 = sphi 0, %s171
      %s193 = sphi 0, %s195
      %s196 = sphi 0, %s193
      %s197 = sphi 0, %s196
      %s213 = sphi 0, %s197
      %s217 = sphi 0, %s217
      %s219 = sphi 0, %s217
      %s220 = sphi 0, %s219
      %s234 = sphi 0, %s220
      %s238 = sphi 0, %s238
      %s240 = sphi 0, %s238
      %s241 = sphi 0, %s240
      %s255 = sphi 0, %s241
      %s261 = sphi 0, %s263
      %s264 = sphi 0, %s261
      %s265 = sphi 0, %s264
      %s281 = sphi 0, %s265
    $region4: #{tpu_custom_call.1} parent=1 // loop_header_branch
      %28 = sbr.rel (%p26) target = $region8
    $region5: #{tpu_custom_call.1} parent=1 // loop_body
      %s30 = ssub.s32 %s25, 1
      %s31 = ssub.s32 %s25, 2
      %s38 = sadd.s32 1, %s33
      %p39 = scmp.ge.s32.totalorder %s38, 5
      %s40 = scalar_select %p39, 0, %s38
      %s41 = sadd.s32 1, %s32
      %s42 = scalar_select %p39, %s41, %s32
      %p43 = scmp.ge.s32.totalorder %s42, 1
      %s44 = scalar_select %p43, 0, %s42
      %s45 = ssub.s32 %s32, %s44
      %p46 = scmp.eq.s32.totalorder %s45, 0
      %s48 = sadd.s32 %s47, 1
      %s49 = scalar_select %p46, %s47, %s48
      %p52 = pneg %p46
      %p53 = scmp.eq.s32.totalorder %s25, 4
      %p54 = por %p52, %p53
      %p55 = scmp.ne.s32.totalorder %s47, %s50
      %p56 = scmp.eq.s32.totalorder %s25, 0
      %p57 = por %p55, %p56
      %p58 = scmp.ne.s32.totalorder %s47, %s50
      %p59 = scmp.eq.s32.totalorder %s30, 4
      %p60 = por %p58, %p59
      %p61 = scmp.ne.s32.totalorder %s50, %s51
      %p62 = scmp.eq.s32.totalorder %s30, 0
      %p63 = por %p61, %p62
      %p64 = scmp.ne.s32.totalorder %s50, %s51
      %p65 = scmp.eq.s32.totalorder %s31, 4
      %p66 = por %p64, %p65
      %p68 = scmp.ne.s32.totalorder %s51, %s67
      %p69 = scmp.eq.s32.totalorder %s31, 0
      %p70 = por %p68, %p69
      %s72 = sadd.s32 %s71, 1
      %p75 = scmp.eq.s32.totalorder %s25, 4
      %p76 = scmp.ne.s32.totalorder %s71, %s73
      %p77 = scmp.eq.s32.totalorder %s25, 0
      %p78 = por %p76, %p77
      %p79 = scmp.ne.s32.totalorder %s71, %s73
      %p80 = scmp.eq.s32.totalorder %s30, 4
      %p81 = por %p79, %p80
      %p82 = scmp.ne.s32.totalorder %s73, %s74
      %p83 = scmp.eq.s32.totalorder %s30, 0
      %p84 = por %p82, %p83
      %p85 = scmp.ne.s32.totalorder %s73, %s74
      %p86 = scmp.eq.s32.totalorder %s31, 4
      %p87 = por %p85, %p86
      %p89 = scmp.ne.s32.totalorder %s74, %s88
      %p90 = scmp.eq.s32.totalorder %s31, 0
      %p91 = por %p89, %p90
      %s93 = sadd.s32 %s92, 1
      %p96 = scmp.eq.s32.totalorder %s25, 4
      %p97 = scmp.ne.s32.totalorder %s92, %s94
      %p98 = scmp.eq.s32.totalorder %s25, 0
      %p99 = por %p97, %p98
      %p100 = scmp.ne.s32.totalorder %s92, %s94
      %p101 = scmp.eq.s32.totalorder %s30, 4
      %p102 = por %p100, %p101
      %p103 = scmp.ne.s32.totalorder %s94, %s95
      %p104 = scmp.eq.s32.totalorder %s30, 0
      %p105 = por %p103, %p104
      %p106 = scmp.ne.s32.totalorder %s94, %s95
      %p107 = scmp.eq.s32.totalorder %s31, 4
      %p108 = por %p106, %p107
      %p110 = scmp.ne.s32.totalorder %s95, %s109
      %p111 = scmp.eq.s32.totalorder %s31, 0
      %p112 = por %p110, %p111
      %s113 = ssub.s32 %s33, %s40
      %p114 = scmp.eq.s32.totalorder %s113, 0
      %s116 = sadd.s32 %s115, 1
      %s117 = scalar_select %p114, %s115, %s116
      %p120 = pneg %p114
      %p121 = scmp.eq.s32.totalorder %s25, 4
      %p122 = por %p120, %p121
      %p123 = scmp.ne.s32.totalorder %s115, %s118
      %p124 = scmp.eq.s32.totalorder %s25, 0
      %p125 = por %p123, %p124
      %p126 = scmp.ne.s32.totalorder %s115, %s118
      %p127 = scmp.eq.s32.totalorder %s30, 4
      %p128 = por %p126, %p127
      %p129 = scmp.ne.s32.totalorder %s118, %s119
      %p130 = scmp.eq.s32.totalorder %s30, 0
      %p131 = por %p129, %p130
      %p132 = scmp.ne.s32.totalorder %s118, %s119
      %p133 = scmp.eq.s32.totalorder %s31, 4
      %p134 = por %p132, %p133
      %p136 = scmp.ne.s32.totalorder %s119, %s135
      %p137 = scmp.eq.s32.totalorder %s31, 0
      %p138 = por %p136, %p137
      %s139 = ssub.s32 %s33, %s40
      %p140 = scmp.eq.s32.totalorder %s139, 0
      %s142 = sadd.s32 %s141, 1
      %s143 = scalar_select %p140, %s141, %s142
      %p146 = pneg %p140
      %p147 = scmp.eq.s32.totalorder %s25, 4
      %p148 = por %p146, %p147
      %p149 = scmp.ne.s32.totalorder %s141, %s144
      %p150 = scmp.eq.s32.totalorder %s25, 0
      %p151 = por %p149, %p150
      %p152 = scmp.ne.s32.totalorder %s141, %s144
      %p153 = scmp.eq.s32.totalorder %s30, 4
      %p154 = por %p152, %p153
      %p155 = scmp.ne.s32.totalorder %s144, %s145
      %p156 = scmp.eq.s32.totalorder %s30, 0
      %p157 = por %p155, %p156
      %p158 = scmp.ne.s32.totalorder %s144, %s145
      %p159 = scmp.eq.s32.totalorder %s31, 4
      %p160 = por %p158, %p159
      %p162 = scmp.ne.s32.totalorder %s145, %s161
      %p163 = scmp.eq.s32.totalorder %s31, 0
      %p164 = por %p162, %p163
      %s165 = ssub.s32 %s33, %s40
      %p166 = scmp.eq.s32.totalorder %s165, 0
      %s168 = sadd.s32 %s167, 1
      %s169 = scalar_select %p166, %s167, %s168
      %p172 = pneg %p166
      %p173 = scmp.eq.s32.totalorder %s25, 4
      %p174 = por %p172, %p173
      %p175 = scmp.ne.s32.totalorder %s167, %s170
      %p176 = scmp.eq.s32.totalorder %s25, 0
      %p177 = por %p175, %p176
      %p178 = scmp.ne.s32.totalorder %s167, %s170
      %p179 = scmp.eq.s32.totalorder %s30, 4
      %p180 = por %p178, %p179
      %p181 = scmp.ne.s32.totalorder %s170, %s171
      %p182 = scmp.eq.s32.totalorder %s30, 0
      %p183 = por %p181, %p182
      %p184 = scmp.ne.s32.totalorder %s170, %s171
      %p185 = scmp.eq.s32.totalorder %s31, 4
      %p186 = por %p184, %p185
      %p188 = scmp.ne.s32.totalorder %s171, %s187
      %p189 = scmp.eq.s32.totalorder %s31, 0
      %p190 = por %p188, %p189
      %s191 = ssub.s32 %s33, %s40
      %p192 = scmp.eq.s32.totalorder %s191, 0
      %s194 = sadd.s32 %s193, 1
      %s195 = scalar_select %p192, %s193, %s194
      %p198 = pneg %p192
      %p199 = scmp.eq.s32.totalorder %s25, 4
      %p200 = por %p198, %p199
      %p201 = scmp.ne.s32.totalorder %s193, %s196
      %p202 = scmp.eq.s32.totalorder %s25, 0
      %p203 = por %p201, %p202
      %p204 = scmp.ne.s32.totalorder %s193, %s196
      %p205 = scmp.eq.s32.totalorder %s30, 4
      %p206 = por %p204, %p205
      %p207 = scmp.ne.s32.totalorder %s196, %s197
      %p208 = scmp.eq.s32.totalorder %s30, 0
      %p209 = por %p207, %p208
      %p210 = scmp.ne.s32.totalorder %s196, %s197
      %p211 = scmp.eq.s32.totalorder %s31, 4
      %p212 = por %p210, %p211
      %p214 = scmp.ne.s32.totalorder %s197, %s213
      %p215 = scmp.eq.s32.totalorder %s31, 0
      %p216 = por %p214, %p215
      %s218 = sadd.s32 %s217, 1
      %p221 = scmp.eq.s32.totalorder %s25, 4
      %p222 = scmp.ne.s32.totalorder %s217, %s219
      %p223 = scmp.eq.s32.totalorder %s25, 0
      %p224 = por %p222, %p223
      %p225 = scmp.ne.s32.totalorder %s217, %s219
      %p226 = scmp.eq.s32.totalorder %s30, 4
      %p227 = por %p225, %p226
      %p228 = scmp.ne.s32.totalorder %s219, %s220
      %p229 = scmp.eq.s32.totalorder %s30, 0
      %p230 = por %p228, %p229
      %p231 = scmp.ne.s32.totalorder %s219, %s220
      %p232 = scmp.eq.s32.totalorder %s31, 4
      %p233 = por %p231, %p232
      %p235 = scmp.ne.s32.totalorder %s220, %s234
      %p236 = scmp.eq.s32.totalorder %s31, 0
      %p237 = por %p235, %p236
      %s239 = sadd.s32 %s238, 1
      %p242 = scmp.eq.s32.totalorder %s25, 4
      %p243 = scmp.ne.s32.totalorder %s238, %s240
      %p244 = scmp.eq.s32.totalorder %s25, 0
      %p245 = por %p243, %p244
      %p246 = scmp.ne.s32.totalorder %s238, %s240
      %p247 = scmp.eq.s32.totalorder %s30, 4
      %p248 = por %p246, %p247
      %p249 = scmp.ne.s32.totalorder %s240, %s241
      %p250 = scmp.eq.s32.totalorder %s30, 0
      %p251 = por %p249, %p250
      %p252 = scmp.ne.s32.totalorder %s240, %s241
      %p253 = scmp.eq.s32.totalorder %s31, 4
      %p254 = por %p252, %p253
      %p256 = scmp.ne.s32.totalorder %s241, %s255
      %p257 = scmp.eq.s32.totalorder %s31, 0
      %p258 = por %p256, %p257
      %s259 = ssub.s32 %s32, %s44
      %p260 = scmp.eq.s32.totalorder %s259, 0
      %s262 = sadd.s32 %s261, 1
      %s263 = scalar_select %p260, %s261, %s262
      %p266 = pneg %p260
      %p267 = scmp.eq.s32.totalorder %s25, 4
      %p268 = por %p266, %p267
      %p269 = scmp.ne.s32.totalorder %s261, %s264
      %p270 = scmp.eq.s32.totalorder %s25, 0
      %p271 = por %p269, %p270
      %p272 = scmp.ne.s32.totalorder %s261, %s264
      %p273 = scmp.eq.s32.totalorder %s30, 4
      %p274 = por %p272, %p273
      %p275 = scmp.ne.s32.totalorder %s264, %s265
      %p276 = scmp.eq.s32.totalorder %s30, 0
      %p277 = por %p275, %p276
      %p278 = scmp.ne.s32.totalorder %s264, %s265
      %p279 = scmp.eq.s32.totalorder %s31, 4
      %p280 = por %p278, %p279
      %p282 = scmp.ne.s32.totalorder %s265, %s281
      %p283 = scmp.eq.s32.totalorder %s31, 0
      %p284 = por %p282, %p283
      %p285 = scmp.le.s32.totalorder 1, %s25
      %p286 = scmp.lt.s32.totalorder %s25, 6
      %p287 = pnand %p285, %p286
      %p288 = pneg %p287
      // Predicated region
      $region9: #{tpu_custom_call.1} parent=5 // pred_check
        _
      $region10: #{tpu_custom_call.1} parent=5 // pred_check_branch
        %290 = sbr.rel (%p287) target = $region12
      $region11: #{tpu_custom_call.1} parent=5 // pred_region
        %s291 = ssub.s32 %s25, 1
        // Predicated region
        $region13: #{tpu_custom_call.1} parent=11 // pred_check
          %p292 = pneg %p63
        $region14: #{tpu_custom_call.1} parent=11 // pred_check_branch
          %294 = sbr.rel (%p292) target = $region16
        $region15: #{tpu_custom_call.1} parent=11 // pred_region
          %296 = vsyncadd [#allocation5], 0
          %s297 = smul.addr %s34, 8
          %s298 = scalar_lea.hbm %s0, %s297
          %s300 = sshll.u32 %s298, 4
          %s301 = int_to_ptr.hbm [resolvable:$true] %s300
          %s302 = sshll.u32 [#allocation4], 4
          %s303 = int_to_ptr.vmem [resolvable:$true] %s302
          %305 = dma.hbm_to_vmem [thread:$0]  %s301, 128, %s303, [#allocation5]
        $region16: #{tpu_custom_call.1} parent=11 // pred_fallthru
          _
        // Predicated region
        $region17: #{tpu_custom_call.1} parent=11 // pred_check
          %p306 = pneg %p84
        $region18: #{tpu_custom_call.1} parent=11 // pred_check_branch
          %308 = sbr.rel (%p306) target = $region20
        $region19: #{tpu_custom_call.1} parent=11 // pred_region
          %310 = vsyncadd [#allocation7], 0
          %s311 = sshll.u32 %s1, 4
          %s312 = int_to_ptr.hbm [resolvable:$true] %s311
          %s313 = sshll.u32 [#allocation6], 4
          %s314 = int_to_ptr.vmem [resolvable:$true] %s313
          %319 = dma.hbm_to_vmem [thread:$0]  %s312, 512, %s314, [#allocation7], 256, 256, 16
        $region20: #{tpu_custom_call.1} parent=11 // pred_fallthru
          _
        // Predicated region
        $region21: #{tpu_custom_call.1} parent=11 // pred_check
          %p320 = pneg %p105
        $region22: #{tpu_custom_call.1} parent=11 // pred_check_branch
          %322 = sbr.rel (%p320) target = $region24
        $region23: #{tpu_custom_call.1} parent=11 // pred_region
          %324 = vsyncadd [#allocation7], 0
          %s326 = sshll.u32 %s2, 4
          %s327 = int_to_ptr.hbm [resolvable:$true] %s326
          %s328 = sshll.u32 [#allocation8], 4
          %s329 = int_to_ptr.vmem [resolvable:$true] %s328
          %331 = dma.hbm_to_vmem [thread:$0]  %s327, 32, %s329, [#allocation7]
        $region24: #{tpu_custom_call.1} parent=11 // pred_fallthru
          _
        // Predicated region
        $region25: #{tpu_custom_call.1} parent=11 // pred_check
          %p332 = pneg %p230
        $region26: #{tpu_custom_call.1} parent=11 // pred_check_branch
          %334 = sbr.rel (%p332) target = $region28
        $region27: #{tpu_custom_call.1} parent=11 // pred_region
          _
        $region28: #{tpu_custom_call.1} parent=11 // pred_fallthru
          _
        // Predicated region
        $region29: #{tpu_custom_call.1} parent=11 // pred_check
          %p335 = pneg %p251
        $region30: #{tpu_custom_call.1} parent=11 // pred_check_branch
          %337 = sbr.rel (%p335) target = $region32
        $region31: #{tpu_custom_call.1} parent=11 // pred_region
          _
        $region32: #{tpu_custom_call.1} parent=11 // pred_fallthru
          _
      $region12: #{tpu_custom_call.1} parent=5 // pred_fallthru
        _
      %p338 = scmp.lt.s32.totalorder %s25, 5
      // Predicated region
      $region33: #{tpu_custom_call.1} parent=5 // pred_check
        %p339 = pneg %p338
      $region34: #{tpu_custom_call.1} parent=5 // pred_check_branch
        %341 = sbr.rel (%p339) target = $region36
      $region35: #{tpu_custom_call.1} parent=5 // pred_region
        // Predicated region
        $region37: #{tpu_custom_call.1} parent=35 // pred_check
          %p342 = pneg %p125
        $region38: #{tpu_custom_call.1} parent=35 // pred_check_branch
          %344 = sbr.rel (%p342) target = $region40
        $region39: #{tpu_custom_call.1} parent=35 // pred_region
          %s345 = sand.u32 %s25, 1
          %s346 = scalar_lea.sflag [#allocation10], %s345
          %s347 = sand.u32 %s115, 1
          %s348 = smul.addr %s347, 1792
          %s349 = scalar_lea.vmem [#allocation9], %s348
          %s350 = smul.u32 7, %s33
          %352 = vsyncadd %s346, 0
          %s353 = smul.addr %s350, 64
          %s354 = smul.addr %s353, 4
          %s355 = scalar_lea.hbm %s3, %s354
          %s356 = sshll.u32 %s355, 4
          %s357 = int_to_ptr.hbm [resolvable:$true] %s356
          %s358 = sshll.u32 %s349, 4
          %s359 = int_to_ptr.vmem [resolvable:$true] %s358
          %364 = dma.hbm_to_vmem [thread:$0]  %s357, 28672, %s359, %s346, 128, 128, 8
        $region40: #{tpu_custom_call.1} parent=35 // pred_fallthru
          _
        // Predicated region
        $region41: #{tpu_custom_call.1} parent=35 // pred_check
          %p365 = pneg %p151
        $region42: #{tpu_custom_call.1} parent=35 // pred_check_branch
          %367 = sbr.rel (%p365) target = $region44
        $region43: #{tpu_custom_call.1} parent=35 // pred_region
          %s368 = sand.u32 %s25, 1
          %s369 = scalar_lea.sflag [#allocation10], %s368
          %s370 = sand.u32 %s141, 1
          %s371 = smul.addr %s370, 14
          %s372 = scalar_lea.vmem [#allocation11], %s371
          %s373 = smul.u32 7, %s33
          %375 = vsyncadd %s369, 0
          %s376 = smul.addr %s373, 2
          %s377 = scalar_lea.hbm %s4, %s376
          %s378 = sshll.u32 %s377, 4
          %s379 = int_to_ptr.hbm [resolvable:$true] %s378
          %s380 = sshll.u32 %s372, 4
          %s381 = int_to_ptr.vmem [resolvable:$true] %s380
          %386 = dma.hbm_to_vmem [thread:$0]  %s379, 224, %s381, %s369, 32, 32, 2
        $region44: #{tpu_custom_call.1} parent=35 // pred_fallthru
          _
        // Predicated region
        $region45: #{tpu_custom_call.1} parent=35 // pred_check
          %p387 = pneg %p177
        $region46: #{tpu_custom_call.1} parent=35 // pred_check_branch
          %389 = sbr.rel (%p387) target = $region48
        $region47: #{tpu_custom_call.1} parent=35 // pred_region
          %s390 = sand.u32 %s25, 1
          %s391 = scalar_lea.sflag [#allocation13], %s390
          %s392 = sand.u32 %s167, 1
          %s393 = smul.addr %s392, 1792
          %s394 = scalar_lea.vmem [#allocation12], %s393
          %s395 = smul.u32 7, %s33
          %397 = vsyncadd %s391, 0
          %s398 = smul.addr %s395, 64
          %s399 = smul.addr %s398, 4
          %s400 = scalar_lea.hbm %s5, %s399
          %s401 = sshll.u32 %s400, 4
          %s402 = int_to_ptr.hbm [resolvable:$true] %s401
          %s403 = sshll.u32 %s394, 4
          %s404 = int_to_ptr.vmem [resolvable:$true] %s403
          %409 = dma.hbm_to_vmem [thread:$0]  %s402, 28672, %s404, %s391, 128, 128, 8
        $region48: #{tpu_custom_call.1} parent=35 // pred_fallthru
          _
        // Predicated region
        $region49: #{tpu_custom_call.1} parent=35 // pred_check
          %p410 = pneg %p203
        $region50: #{tpu_custom_call.1} parent=35 // pred_check_branch
          %412 = sbr.rel (%p410) target = $region52
        $region51: #{tpu_custom_call.1} parent=35 // pred_region
          %s413 = sand.u32 %s25, 1
          %s414 = scalar_lea.sflag [#allocation13], %s413
          %s415 = sand.u32 %s193, 1
          %s416 = smul.addr %s415, 14
          %s417 = scalar_lea.vmem [#allocation14], %s416
          %s418 = smul.u32 7, %s33
          %420 = vsyncadd %s414, 0
          %s421 = smul.addr %s418, 2
          %s422 = scalar_lea.hbm %s6, %s421
          %s423 = sshll.u32 %s422, 4
          %s424 = int_to_ptr.hbm [resolvable:$true] %s423
          %s425 = sshll.u32 %s417, 4
          %s426 = int_to_ptr.vmem [resolvable:$true] %s425
          %431 = dma.hbm_to_vmem [thread:$0]  %s424, 224, %s426, %s414, 32, 32, 2
        $region52: #{tpu_custom_call.1} parent=35 // pred_fallthru
          _
      $region36: #{tpu_custom_call.1} parent=5 // pred_fallthru
        _
      %p432 = scmp.le.s32.totalorder 1, %s25
      %p433 = scmp.lt.s32.totalorder %s25, 6
      %p434 = pnand %p432, %p433
      %p435 = pneg %p434
      // Predicated region
      $region53: #{tpu_custom_call.1} parent=5 // pred_check
        _
      $region54: #{tpu_custom_call.1} parent=5 // pred_check_branch
        %437 = sbr.rel (%p434) target = $region56
      $region55: #{tpu_custom_call.1} parent=5 // pred_region
        %s438 = ssub.s32 %s25, 1
        // Predicated region
        $region57: #{tpu_custom_call.1} parent=55 // pred_check
          %p439 = pneg %p63
        $region58: #{tpu_custom_call.1} parent=55 // pred_check_branch
          %441 = sbr.rel (%p439) target = $region60
        $region59: #{tpu_custom_call.1} parent=55 // pred_region
          %443 = dma.done [#allocation5], 128
        $region60: #{tpu_custom_call.1} parent=55 // pred_fallthru
          _
        // Predicated region
        $region61: #{tpu_custom_call.1} parent=55 // pred_check
          %p444 = pneg %p84
        $region62: #{tpu_custom_call.1} parent=55 // pred_check_branch
          %446 = sbr.rel (%p444) target = $region64
        $region63: #{tpu_custom_call.1} parent=55 // pred_region
          %448 = dma.done [#allocation7], 512
        $region64: #{tpu_custom_call.1} parent=55 // pred_fallthru
          _
        // Predicated region
        $region65: #{tpu_custom_call.1} parent=55 // pred_check
          %p449 = pneg %p105
        $region66: #{tpu_custom_call.1} parent=55 // pred_check_branch
          %451 = sbr.rel (%p449) target = $region68
        $region67: #{tpu_custom_call.1} parent=55 // pred_region
          %453 = dma.done [#allocation7], 32
        $region68: #{tpu_custom_call.1} parent=55 // pred_fallthru
          _
        %s454 = sand.u32 %s30, 1
        %s455 = scalar_lea.sflag [#allocation10], %s454
        %s456 = sand.u32 %s118, 1
        %s457 = smul.addr %s456, 1792
        %s458 = scalar_lea.vmem [#allocation9], %s457
        // Predicated region
        $region69: #{tpu_custom_call.1} parent=55 // pred_check
          %p459 = pneg %p131
        $region70: #{tpu_custom_call.1} parent=55 // pred_check_branch
          %461 = sbr.rel (%p459) target = $region72
        $region71: #{tpu_custom_call.1} parent=55 // pred_region
          %463 = dma.done %s455, 28672
        $region72: #{tpu_custom_call.1} parent=55 // pred_fallthru
          _
        %s464 = sand.u32 %s30, 1
        %s465 = scalar_lea.sflag [#allocation10], %s464
        %s466 = sand.u32 %s144, 1
        %s467 = smul.addr %s466, 14
        %s468 = scalar_lea.vmem [#allocation11], %s467
        // Predicated region
        $region73: #{tpu_custom_call.1} parent=55 // pred_check
          %p469 = pneg %p157
        $region74: #{tpu_custom_call.1} parent=55 // pred_check_branch
          %471 = sbr.rel (%p469) target = $region76
        $region75: #{tpu_custom_call.1} parent=55 // pred_region
          %473 = dma.done %s465, 224
        $region76: #{tpu_custom_call.1} parent=55 // pred_fallthru
          _
        %s474 = sand.u32 %s30, 1
        %s475 = scalar_lea.sflag [#allocation13], %s474
        %s476 = sand.u32 %s170, 1
        %s477 = smul.addr %s476, 1792
        %s478 = scalar_lea.vmem [#allocation12], %s477
        // Predicated region
        $region77: #{tpu_custom_call.1} parent=55 // pred_check
          %p479 = pneg %p183
        $region78: #{tpu_custom_call.1} parent=55 // pred_check_branch
          %481 = sbr.rel (%p479) target = $region80
        $region79: #{tpu_custom_call.1} parent=55 // pred_region
          %483 = dma.done %s475, 28672
        $region80: #{tpu_custom_call.1} parent=55 // pred_fallthru
          _
        %s484 = sand.u32 %s30, 1
        %s485 = scalar_lea.sflag [#allocation13], %s484
        %s486 = sand.u32 %s196, 1
        %s487 = smul.addr %s486, 14
        %s488 = scalar_lea.vmem [#allocation14], %s487
        // Predicated region
        $region81: #{tpu_custom_call.1} parent=55 // pred_check
          %p489 = pneg %p209
        $region82: #{tpu_custom_call.1} parent=55 // pred_check_branch
          %491 = sbr.rel (%p489) target = $region84
        $region83: #{tpu_custom_call.1} parent=55 // pred_region
          %493 = dma.done %s485, 224
        $region84: #{tpu_custom_call.1} parent=55 // pred_fallthru
          _
        %p494 = pneg %p63
        %p495 = pneg %p60
        %p496 = pneg %p84
        %p497 = pneg %p81
        %p498 = pneg %p105
        %p499 = pneg %p102
        %s500 = sand.u32 %s30, 1
        %s501 = scalar_lea.sflag [#allocation10], %s500
        %s502 = sand.u32 %s118, 1
        %s503 = smul.addr %s502, 1792
        %s504 = scalar_lea.vmem [#allocation9], %s503
        %p505 = pneg %p131
        %p506 = pneg %p128
        %s507 = sand.u32 %s30, 1
        %s508 = scalar_lea.sflag [#allocation10], %s507
        %s509 = sand.u32 %s144, 1
        %s510 = smul.addr %s509, 14
        %s511 = scalar_lea.vmem [#allocation11], %s510
        %p512 = pneg %p157
        %p513 = pneg %p154
        %s514 = sand.u32 %s30, 1
        %s515 = scalar_lea.sflag [#allocation13], %s514
        %s516 = sand.u32 %s170, 1
        %s517 = smul.addr %s516, 1792
        %s518 = scalar_lea.vmem [#allocation12], %s517
        %p519 = pneg %p183
        %p520 = pneg %p180
        %s521 = sand.u32 %s30, 1
        %s522 = scalar_lea.sflag [#allocation13], %s521
        %s523 = sand.u32 %s196, 1
        %s524 = smul.addr %s523, 14
        %s525 = scalar_lea.vmem [#allocation14], %s524
        %p526 = pneg %p209
        %p527 = pneg %p206
        %p528 = pneg %p230
        %p529 = pneg %p227
        %p530 = pneg %p251
        %p531 = pneg %p248
        %p532 = pneg %p277
        %p533 = pneg %p274
        %p534 = scmp.lt.s32.totalorder %s34, 0
        %s535 = scalar_select %p534, %s34, 0
        %s536 = smul.addr %s535, 8
        %s537 = scalar_lea.vmem %s9, %s536
        %s538 = smul.u32 7, %s35
        %s539 = smul.u32 7, %s35
        %s540 = smul.u32 7, %s35
        %s541 = smul.u32 7, %s35
        %p542 = scmp.lt.s32.totalorder %s34, 0
        %s543 = scalar_select %p542, %s34, 0
        %s544 = smul.addr %s543, 8
        %s545 = scalar_lea.vmem %s9, %s544
        %p546 = scmp.eq.s32.totalorder %s35, 0
        // Predicated region
        $region85: #{tpu_custom_call.1} parent=55 // pred_check
          %p547 = pneg %p546
        $region86: #{tpu_custom_call.1} parent=55 // pred_check_branch
          %549 = sbr.rel (%p547) target = $region88
        $region87: #{tpu_custom_call.1} parent=55 // pred_region
          %vm550 = vcmask 7168
          %551 = vst.msk [vmem:[%s545] sm:$0xff] %vm550, 0.0
          %v552 = vld [vmem:[#allocation4] sm:$0xff]
          %v553 = vld [vmem:[#allocation6] sm:$0xff]
          %v554 = vld [vmem:[#allocation6 + $0x8] sm:$0xff]
          %v555 = vld [vmem:[#allocation6 + $0x10] sm:$0xff]
          %v556 = vld [vmem:[#allocation6 + $0x18] sm:$0xff]
          %v557 = vld [vmem:[#allocation8] sm:$0x3]
          %v559 = vperm.slane %v557, 0
          %v560 = vperm.slane %v557, 1
          %vm563 = vcmask 130048
          %v565 = vsel %vm563, %v552, 0
          %567 = vmatpush.msra.mxu0 0.0
          %568 = vmatpush.msra.mxu0 0.0
          %569 = vmatpush.msra.mxu0 0.0
          %570 = vmatpush.msra.mxu0 0.0
          %571 = vmatpush.msra.mxu0 0.0
          %572 = vmatpush.msra.mxu0 0.0
          %573 = vmatpush.msra.mxu0 0.0
          %574 = vmatpush.msra.mxu0 0.0
          %575 = vmatpush.msra.mxu0 0.0
          %576 = vmatpush.msra.mxu0 0.0
          %577 = vmatpush.msra.mxu0 0.0
          %578 = vmatpush.msra.mxu0 0.0
          %579 = vmatpush.msra.mxu0 0.0
          %580 = vmatpush.msra.mxu0 0.0
          %581 = vmatpush.msra.mxu0 %v555
          %582 = vmatpush.msra.mxu0 %v553
          %583 = vmatmul.f32.gmra.mxu0 %v565
          %v584 = vpop.f32.mrf.mxu0
          %v585 = vadd.f32 %v559, %v584
          %586 = vdwg.mxu0
          %587 = vmatpush.msra.mxu0 0.0
          %588 = vmatpush.msra.mxu0 0.0
          %589 = vmatpush.msra.mxu0 0.0
          %590 = vmatpush.msra.mxu0 0.0
          %591 = vmatpush.msra.mxu0 0.0
          %592 = vmatpush.msra.mxu0 0.0
          %593 = vmatpush.msra.mxu0 0.0
          %594 = vmatpush.msra.mxu0 0.0
          %595 = vmatpush.msra.mxu0 0.0
          %596 = vmatpush.msra.mxu0 0.0
          %597 = vmatpush.msra.mxu0 0.0
          %598 = vmatpush.msra.mxu0 0.0
          %599 = vmatpush.msra.mxu0 0.0
          %600 = vmatpush.msra.mxu0 0.0
          %601 = vmatpush.msra.mxu0 %v556
          %602 = vmatpush.msra.mxu0 %v554
          %603 = vmatmul.f32.gmra.mxu0 %v565
          %v604 = vpop.f32.mrf.mxu0
          %v605 = vadd.f32 %v560, %v604
          %606 = vdwg.mxu0
          %607 = vst [vmem:[#allocation2] sm:$0xff] %v585
          %608 = vst [vmem:[#allocation2 + $0x8] sm:$0xff] %v605
        $region88: #{tpu_custom_call.1} parent=55 // pred_fallthru
          _
        %v609 = vld [vmem:[#allocation2] sm:$0xff]
        %v610 = vld [vmem:[#allocation2 + $0x8] sm:$0xff]
        %v611 = vmax.f32 %v609, 0.0
        %v612 = vmax.f32 %v610, 0.0
        %v613 = vpack.c.bf16 %v611, %v611
        %v614 = vpack.c.bf16 %v612, %v612
        %v615 = vld [vmem:[%s458] sm:$0xff]
        %v616 = vld [vmem:[%s458 + $0x8] sm:$0xff]
        %v617 = vld [vmem:[%s458 + $0x10] sm:$0xff]
        %v618 = vld [vmem:[%s458 + $0x18] sm:$0xff]
        %v619 = vld [vmem:[%s458 + $0x20] sm:$0xff]
        %v620 = vld [vmem:[%s458 + $0x28] sm:$0xff]
        %v621 = vld [vmem:[%s458 + $0x30] sm:$0xff]
        %v622 = vld [vmem:[%s458 + $0x38] sm:$0xff]
        %v623 = vld [vmem:[%s458 + $0x40] sm:$0xff]
        %v624 = vld [vmem:[%s458 + $0x48] sm:$0xff]
        %v625 = vld [vmem:[%s458 + $0x50] sm:$0xff]
        %v626 = vld [vmem:[%s458 + $0x58] sm:$0xff]
        %v627 = vld [vmem:[%s458 + $0x60] sm:$0xff]
        %v628 = vld [vmem:[%s458 + $0x68] sm:$0xff]
        %v629 = vld [vmem:[%s458 + $0x70] sm:$0xff]
        %v630 = vld [vmem:[%s458 + $0x78] sm:$0xff]
        %v631 = vld [vmem:[%s458 + $0x80] sm:$0xff]
        %v632 = vld [vmem:[%s458 + $0x88] sm:$0xff]
        %v633 = vld [vmem:[%s458 + $0x90] sm:$0xff]
        %v634 = vld [vmem:[%s458 + $0x98] sm:$0xff]
        %v635 = vld [vmem:[%s458 + $0xa0] sm:$0xff]
        %v636 = vld [vmem:[%s458 + $0xa8] sm:$0xff]
        %v637 = vld [vmem:[%s458 + $0xb0] sm:$0xff]
        %v638 = vld [vmem:[%s458 + $0xb8] sm:$0xff]
        %v639 = vld [vmem:[%s458 + $0xc0] sm:$0xff]
        %v640 = vld [vmem:[%s458 + $0xc8] sm:$0xff]
        %v641 = vld [vmem:[%s458 + $0xd0] sm:$0xff]
        %v642 = vld [vmem:[%s458 + $0xd8] sm:$0xff]
        %v643 = vld [vmem:[%s458 + $0xe0] sm:$0xff]
        %v644 = vld [vmem:[%s458 + $0xe8] sm:$0xff]
        %v645 = vld [vmem:[%s458 + $0xf0] sm:$0xff]
        %v646 = vld [vmem:[%s458 + $0xf8] sm:$0xff]
        %v647 = vld [vmem:[%s468] sm:$0x3]
        %v649 = vperm.slane %v647, 0
        %v650 = vperm.slane %v647, 1
        %v685 = vunpack.c.l.b16 %v615
        %v686 = vunpack.c.h.b16 %v615
        %v687 = vunpack.c.l.b16 %v616
        %v688 = vunpack.c.h.b16 %v616
        %v689 = vunpack.c.l.b16 %v617
        %v690 = vunpack.c.h.b16 %v617
        %v691 = vunpack.c.l.b16 %v618
        %v692 = vunpack.c.h.b16 %v618
        %v693 = vunpack.c.l.b16 %v619
        %v694 = vunpack.c.h.b16 %v619
        %v695 = vunpack.c.l.b16 %v620
        %v696 = vunpack.c.h.b16 %v620
        %v697 = vunpack.c.l.b16 %v621
        %v698 = vunpack.c.h.b16 %v621
        %v699 = vunpack.c.l.b16 %v622
        %v700 = vunpack.c.h.b16 %v622
        %v701 = vunpack.c.l.b16 %v623
        %v702 = vunpack.c.h.b16 %v623
        %v703 = vunpack.c.l.b16 %v624
        %v704 = vunpack.c.h.b16 %v624
        %v705 = vunpack.c.l.b16 %v625
        %v706 = vunpack.c.h.b16 %v625
        %v707 = vunpack.c.l.b16 %v626
        %v708 = vunpack.c.h.b16 %v626
        %v709 = vunpack.c.l.b16 %v627
        %v710 = vunpack.c.h.b16 %v627
        %v711 = vunpack.c.l.b16 %v628
        %v712 = vunpack.c.h.b16 %v628
        %v713 = vunpack.c.l.b16 %v629
        %v714 = vunpack.c.h.b16 %v629
        %v715 = vunpack.c.l.b16 %v630
        %v716 = vunpack.c.h.b16 %v630
        %v717 = vunpack.c.l.b16 %v631
        %v718 = vunpack.c.h.b16 %v631
        %v719 = vunpack.c.l.b16 %v632
        %v720 = vunpack.c.h.b16 %v632
        %v721 = vunpack.c.l.b16 %v633
        %v722 = vunpack.c.h.b16 %v633
        %v723 = vunpack.c.l.b16 %v634
        %v724 = vunpack.c.h.b16 %v634
        %v725 = vunpack.c.l.b16 %v635
        %v726 = vunpack.c.h.b16 %v635
        %v727 = vunpack.c.l.b16 %v636
        %v728 = vunpack.c.h.b16 %v636
        %v729 = vunpack.c.l.b16 %v637
        %v730 = vunpack.c.h.b16 %v637
        %v731 = vunpack.c.l.b16 %v638
        %v732 = vunpack.c.h.b16 %v638
        %v733 = vunpack.c.l.b16 %v639
        %v734 = vunpack.c.h.b16 %v639
        %v735 = vunpack.c.l.b16 %v640
        %v736 = vunpack.c.h.b16 %v640
        %v737 = vunpack.c.l.b16 %v641
        %v738 = vunpack.c.h.b16 %v641
        %v739 = vunpack.c.l.b16 %v642
        %v740 = vunpack.c.h.b16 %v642
        %v741 = vunpack.c.l.b16 %v643
        %v742 = vunpack.c.h.b16 %v643
        %v743 = vunpack.c.l.b16 %v644
        %v744 = vunpack.c.h.b16 %v644
        %v745 = vunpack.c.l.b16 %v645
        %v746 = vunpack.c.h.b16 %v645
        %v747 = vunpack.c.l.b16 %v646
        %v748 = vunpack.c.h.b16 %v646
        %v749 = vpack.c.b16 %v687, %v685
        %v750 = vpack.c.b16 %v688, %v686
        %v751 = vpack.c.b16 %v691, %v689
        %v752 = vpack.c.b16 %v692, %v690
        %v753 = vpack.c.b16 %v695, %v693
        %v754 = vpack.c.b16 %v696, %v694
        %v755 = vpack.c.b16 %v699, %v697
        %v756 = vpack.c.b16 %v700, %v698
        %v757 = vpack.c.b16 %v703, %v701
        %v758 = vpack.c.b16 %v704, %v702
        %v759 = vpack.c.b16 %v707, %v705
        %v760 = vpack.c.b16 %v708, %v706
        %v761 = vpack.c.b16 %v711, %v709
        %v762 = vpack.c.b16 %v712, %v710
        %v763 = vpack.c.b16 %v715, %v713
        %v764 = vpack.c.b16 %v716, %v714
        %v765 = vpack.c.b16 %v719, %v717
        %v766 = vpack.c.b16 %v720, %v718
        %v767 = vpack.c.b16 %v723, %v721
        %v768 = vpack.c.b16 %v724, %v722
        %v769 = vpack.c.b16 %v727, %v725
        %v770 = vpack.c.b16 %v728, %v726
        %v771 = vpack.c.b16 %v731, %v729
        %v772 = vpack.c.b16 %v732, %v730
        %v773 = vpack.c.b16 %v735, %v733
        %v774 = vpack.c.b16 %v736, %v734
        %v775 = vpack.c.b16 %v739, %v737
        %v776 = vpack.c.b16 %v740, %v738
        %v777 = vpack.c.b16 %v743, %v741
        %v778 = vpack.c.b16 %v744, %v742
        %v779 = vpack.c.b16 %v747, %v745
        %v780 = vpack.c.b16 %v748, %v746
        %813 = vmatpush.bf16.msra.mxu0 %v763
        %814 = vmatpush.bf16.msra.mxu0 %v761
        %815 = vmatpush.bf16.msra.mxu0 %v759
        %816 = vmatpush.bf16.msra.mxu0 %v757
        %817 = vmatpush.bf16.msra.mxu0 %v755
        %818 = vmatpush.bf16.msra.mxu0 %v753
        %819 = vmatpush.bf16.msra.mxu0 %v751
        %820 = vmatpush.bf16.msra.mxu0 %v749
        %821 = vmatmul.bf16.gmra.mxu0 %v613
        %v822 = vpop.f32.mrf.mxu0
        %v823 = vadd.f32 %v649, %v822
        %v824 = vpop.f32.mrf.mxu0
        %825 = vdwg.mxu0
        %826 = vmatpush.bf16.msra.mxu0 %v779
        %827 = vmatpush.bf16.msra.mxu0 %v777
        %828 = vmatpush.bf16.msra.mxu0 %v775
        %829 = vmatpush.bf16.msra.mxu0 %v773
        %830 = vmatpush.bf16.msra.mxu0 %v771
        %831 = vmatpush.bf16.msra.mxu0 %v769
        %832 = vmatpush.bf16.msra.mxu0 %v767
        %833 = vmatpush.bf16.msra.mxu0 %v765
        %834 = vmatmul.bf16.gmra.mxu0 %v614
        %v835 = vpop.f32.mrf.mxu0
        %v836 = vadd.f32 %v823, %v835
        %v837 = vpop.f32.mrf.mxu0
        %838 = vdwg.mxu0
        %839 = vmatpush.bf16.msra.mxu0 %v764
        %840 = vmatpush.bf16.msra.mxu0 %v762
        %841 = vmatpush.bf16.msra.mxu0 %v760
        %842 = vmatpush.bf16.msra.mxu0 %v758
        %843 = vmatpush.bf16.msra.mxu0 %v756
        %844 = vmatpush.bf16.msra.mxu0 %v754
        %845 = vmatpush.bf16.msra.mxu0 %v752
        %846 = vmatpush.bf16.msra.mxu0 %v750
        %847 = vmatmul.bf16.gmra.mxu0 %v613
        %v848 = vpop.f32.mrf.mxu0
        %v849 = vadd.f32 %v650, %v848
        %v850 = vpop.f32.mrf.mxu0
        %851 = vdwg.mxu0
        %852 = vmatpush.bf16.msra.mxu0 %v780
        %853 = vmatpush.bf16.msra.mxu0 %v778
        %854 = vmatpush.bf16.msra.mxu0 %v776
        %855 = vmatpush.bf16.msra.mxu0 %v774
        %856 = vmatpush.bf16.msra.mxu0 %v772
        %857 = vmatpush.bf16.msra.mxu0 %v770
        %858 = vmatpush.bf16.msra.mxu0 %v768
        %859 = vmatpush.bf16.msra.mxu0 %v766
        %860 = vmatmul.bf16.gmra.mxu0 %v614
        %v861 = vpop.f32.mrf.mxu0
        %v862 = vadd.f32 %v849, %v861
        %v863 = vpop.f32.mrf.mxu0
        %864 = vdwg.mxu0
        %v865 = vmax.f32 %v836, 0.0
        %v866 = vmax.f32 %v862, 0.0
        %v867 = vpack.c.bf16 %v865, %v865
        %v868 = vpack.c.bf16 %v866, %v866
        %v869 = vld [vmem:[%s478] sm:$0xff]
        %v870 = vld [vmem:[%s478 + $0x8] sm:$0xff]
        %v871 = vld [vmem:[%s478 + $0x10] sm:$0xff]
        %v872 = vld [vmem:[%s478 + $0x18] sm:$0xff]
        %v873 = vld [vmem:[%s478 + $0x20] sm:$0xff]
        %v874 = vld [vmem:[%s478 + $0x28] sm:$0xff]
        %v875 = vld [vmem:[%s478 + $0x30] sm:$0xff]
        %v876 = vld [vmem:[%s478 + $0x38] sm:$0xff]
        %v877 = vld [vmem:[%s478 + $0x40] sm:$0xff]
        %v878 = vld [vmem:[%s478 + $0x48] sm:$0xff]
        %v879 = vld [vmem:[%s478 + $0x50] sm:$0xff]
        %v880 = vld [vmem:[%s478 + $0x58] sm:$0xff]
        %v881 = vld [vmem:[%s478 + $0x60] sm:$0xff]
        %v882 = vld [vmem:[%s478 + $0x68] sm:$0xff]
        %v883 = vld [vmem:[%s478 + $0x70] sm:$0xff]
        %v884 = vld [vmem:[%s478 + $0x78] sm:$0xff]
        %v885 = vld [vmem:[%s478 + $0x80] sm:$0xff]
        %v886 = vld [vmem:[%s478 + $0x88] sm:$0xff]
        %v887 = vld [vmem:[%s478 + $0x90] sm:$0xff]
        %v888 = vld [vmem:[%s478 + $0x98] sm:$0xff]
        %v889 = vld [vmem:[%s478 + $0xa0] sm:$0xff]
        %v890 = vld [vmem:[%s478 + $0xa8] sm:$0xff]
        %v891 = vld [vmem:[%s478 + $0xb0] sm:$0xff]
        %v892 = vld [vmem:[%s478 + $0xb8] sm:$0xff]
        %v893 = vld [vmem:[%s478 + $0xc0] sm:$0xff]
        %v894 = vld [vmem:[%s478 + $0xc8] sm:$0xff]
        %v895 = vld [vmem:[%s478 + $0xd0] sm:$0xff]
        %v896 = vld [vmem:[%s478 + $0xd8] sm:$0xff]
        %v897 = vld [vmem:[%s478 + $0xe0] sm:$0xff]
        %v898 = vld [vmem:[%s478 + $0xe8] sm:$0xff]
        %v899 = vld [vmem:[%s478 + $0xf0] sm:$0xff]
        %v900 = vld [vmem:[%s478 + $0xf8] sm:$0xff]
        %v901 = vld [vmem:[%s488] sm:$0x3]
        %v903 = vperm.slane %v901, 0
        %v904 = vperm.slane %v901, 1
        %v939 = vunpack.c.l.b16 %v869
        %v940 = vunpack.c.h.b16 %v869
        %v941 = vunpack.c.l.b16 %v870
        %v942 = vunpack.c.h.b16 %v870
        %v943 = vunpack.c.l.b16 %v871
        %v944 = vunpack.c.h.b16 %v871
        %v945 = vunpack.c.l.b16 %v872
        %v946 = vunpack.c.h.b16 %v872
        %v947 = vunpack.c.l.b16 %v873
        %v948 = vunpack.c.h.b16 %v873
        %v949 = vunpack.c.l.b16 %v874
        %v950 = vunpack.c.h.b16 %v874
        %v951 = vunpack.c.l.b16 %v875
        %v952 = vunpack.c.h.b16 %v875
        %v953 = vunpack.c.l.b16 %v876
        %v954 = vunpack.c.h.b16 %v876
        %v955 = vunpack.c.l.b16 %v877
        %v956 = vunpack.c.h.b16 %v877
        %v957 = vunpack.c.l.b16 %v878
        %v958 = vunpack.c.h.b16 %v878
        %v959 = vunpack.c.l.b16 %v879
        %v960 = vunpack.c.h.b16 %v879
        %v961 = vunpack.c.l.b16 %v880
        %v962 = vunpack.c.h.b16 %v880
        %v963 = vunpack.c.l.b16 %v881
        %v964 = vunpack.c.h.b16 %v881
        %v965 = vunpack.c.l.b16 %v882
        %v966 = vunpack.c.h.b16 %v882
        %v967 = vunpack.c.l.b16 %v883
        %v968 = vunpack.c.h.b16 %v883
        %v969 = vunpack.c.l.b16 %v884
        %v970 = vunpack.c.h.b16 %v884
        %v971 = vunpack.c.l.b16 %v885
        %v972 = vunpack.c.h.b16 %v885
        %v973 = vunpack.c.l.b16 %v886
        %v974 = vunpack.c.h.b16 %v886
        %v975 = vunpack.c.l.b16 %v887
        %v976 = vunpack.c.h.b16 %v887
        %v977 = vunpack.c.l.b16 %v888
        %v978 = vunpack.c.h.b16 %v888
        %v979 = vunpack.c.l.b16 %v889
        %v980 = vunpack.c.h.b16 %v889
        %v981 = vunpack.c.l.b16 %v890
        %v982 = vunpack.c.h.b16 %v890
        %v983 = vunpack.c.l.b16 %v891
        %v984 = vunpack.c.h.b16 %v891
        %v985 = vunpack.c.l.b16 %v892
        %v986 = vunpack.c.h.b16 %v892
        %v987 = vunpack.c.l.b16 %v893
        %v988 = vunpack.c.h.b16 %v893
        %v989 = vunpack.c.l.b16 %v894
        %v990 = vunpack.c.h.b16 %v894
        %v991 = vunpack.c.l.b16 %v895
        %v992 = vunpack.c.h.b16 %v895
        %v993 = vunpack.c.l.b16 %v896
        %v994 = vunpack.c.h.b16 %v896
        %v995 = vunpack.c.l.b16 %v897
        %v996 = vunpack.c.h.b16 %v897
        %v997 = vunpack.c.l.b16 %v898
        %v998 = vunpack.c.h.b16 %v898
        %v999 = vunpack.c.l.b16 %v899
        %v1000 = vunpack.c.h.b16 %v899
        %v1001 = vunpack.c.l.b16 %v900
        %v1002 = vunpack.c.h.b16 %v900
        %v1003 = vpack.c.b16 %v941, %v939
        %v1004 = vpack.c.b16 %v942, %v940
        %v1005 = vpack.c.b16 %v945, %v943
        %v1006 = vpack.c.b16 %v946, %v944
        %v1007 = vpack.c.b16 %v949, %v947
        %v1008 = vpack.c.b16 %v950, %v948
        %v1009 = vpack.c.b16 %v953, %v951
        %v1010 = vpack.c.b16 %v954, %v952
        %v1011 = vpack.c.b16 %v957, %v955
        %v1012 = vpack.c.b16 %v958, %v956
        %v1013 = vpack.c.b16 %v961, %v959
        %v1014 = vpack.c.b16 %v962, %v960
        %v1015 = vpack.c.b16 %v965, %v963
        %v1016 = vpack.c.b16 %v966, %v964
        %v1017 = vpack.c.b16 %v969, %v967
        %v1018 = vpack.c.b16 %v970, %v968
        %v1019 = vpack.c.b16 %v973, %v971
        %v1020 = vpack.c.b16 %v974, %v972
        %v1021 = vpack.c.b16 %v977, %v975
        %v1022 = vpack.c.b16 %v978, %v976
        %v1023 = vpack.c.b16 %v981, %v979
        %v1024 = vpack.c.b16 %v982, %v980
        %v1025 = vpack.c.b16 %v985, %v983
        %v1026 = vpack.c.b16 %v986, %v984
        %v1027 = vpack.c.b16 %v989, %v987
        %v1028 = vpack.c.b16 %v990, %v988
        %v1029 = vpack.c.b16 %v993, %v991
        %v1030 = vpack.c.b16 %v994, %v992
        %v1031 = vpack.c.b16 %v997, %v995
        %v1032 = vpack.c.b16 %v998, %v996
        %v1033 = vpack.c.b16 %v1001, %v999
        %v1034 = vpack.c.b16 %v1002, %v1000
        %1067 = vmatpush.bf16.msra.mxu0 %v1017
        %1068 = vmatpush.bf16.msra.mxu0 %v1015
        %1069 = vmatpush.bf16.msra.mxu0 %v1013
        %1070 = vmatpush.bf16.msra.mxu0 %v1011
        %1071 = vmatpush.bf16.msra.mxu0 %v1009
        %1072 = vmatpush.bf16.msra.mxu0 %v1007
        %1073 = vmatpush.bf16.msra.mxu0 %v1005
        %1074 = vmatpush.bf16.msra.mxu0 %v1003
        %1075 = vmatmul.bf16.gmra.mxu0 %v867
        %v1076 = vpop.f32.mrf.mxu0
        %v1077 = vadd.f32 %v903, %v1076
        %v1078 = vpop.f32.mrf.mxu0
        %1079 = vdwg.mxu0
        %1080 = vmatpush.bf16.msra.mxu0 %v1033
        %1081 = vmatpush.bf16.msra.mxu0 %v1031
        %1082 = vmatpush.bf16.msra.mxu0 %v1029
        %1083 = vmatpush.bf16.msra.mxu0 %v1027
        %1084 = vmatpush.bf16.msra.mxu0 %v1025
        %1085 = vmatpush.bf16.msra.mxu0 %v1023
        %1086 = vmatpush.bf16.msra.mxu0 %v1021
        %1087 = vmatpush.bf16.msra.mxu0 %v1019
        %1088 = vmatmul.bf16.gmra.mxu0 %v868
        %v1089 = vpop.f32.mrf.mxu0
        %v1090 = vadd.f32 %v1077, %v1089
        %v1091 = vpop.f32.mrf.mxu0
        %1092 = vdwg.mxu0
        %1093 = vmatpush.bf16.msra.mxu0 %v1018
        %1094 = vmatpush.bf16.msra.mxu0 %v1016
        %1095 = vmatpush.bf16.msra.mxu0 %v1014
        %1096 = vmatpush.bf16.msra.mxu0 %v1012
        %1097 = vmatpush.bf16.msra.mxu0 %v1010
        %1098 = vmatpush.bf16.msra.mxu0 %v1008
        %1099 = vmatpush.bf16.msra.mxu0 %v1006
        %1100 = vmatpush.bf16.msra.mxu0 %v1004
        %1101 = vmatmul.bf16.gmra.mxu0 %v867
        %v1102 = vpop.f32.mrf.mxu0
        %v1103 = vadd.f32 %v904, %v1102
        %v1104 = vpop.f32.mrf.mxu0
        %1105 = vdwg.mxu0
        %1106 = vmatpush.bf16.msra.mxu0 %v1034
        %1107 = vmatpush.bf16.msra.mxu0 %v1032
        %1108 = vmatpush.bf16.msra.mxu0 %v1030
        %1109 = vmatpush.bf16.msra.mxu0 %v1028
        %1110 = vmatpush.bf16.msra.mxu0 %v1026
        %1111 = vmatpush.bf16.msra.mxu0 %v1024
        %1112 = vmatpush.bf16.msra.mxu0 %v1022
        %1113 = vmatpush.bf16.msra.mxu0 %v1020
        %1114 = vmatmul.bf16.gmra.mxu0 %v868
        %v1115 = vpop.f32.mrf.mxu0
        %v1116 = vadd.f32 %v1103, %v1115
        %v1117 = vpop.f32.mrf.mxu0
        %1118 = vdwg.mxu0
        %v1119 = vadd.f32 %v609, %v1090
        %v1120 = vadd.f32 %v610, %v1116
        %v1121 = vmax.f32 %v1119, 0.0
        %v1122 = vmax.f32 %v1120, 0.0
        %v1123 = vpack.c.bf16 %v1121, %v1121
        %v1124 = vpack.c.bf16 %v1122, %v1122
        %s1125 = scalar_lea.vmem %s458, 256 [#allocation9]
        %v1126 = vld [vmem:[%s1125] sm:$0xff]
        %v1127 = vld [vmem:[%s1125 + $0x8] sm:$0xff]
        %v1128 = vld [vmem:[%s1125 + $0x10] sm:$0xff]
        %v1129 = vld [vmem:[%s1125 + $0x18] sm:$0xff]
        %v1130 = vld [vmem:[%s1125 + $0x20] sm:$0xff]
        %v1131 = vld [vmem:[%s1125 + $0x28] sm:$0xff]
        %v1132 = vld [vmem:[%s1125 + $0x30] sm:$0xff]
        %v1133 = vld [vmem:[%s1125 + $0x38] sm:$0xff]
        %v1134 = vld [vmem:[%s1125 + $0x40] sm:$0xff]
        %v1135 = vld [vmem:[%s1125 + $0x48] sm:$0xff]
        %v1136 = vld [vmem:[%s1125 + $0x50] sm:$0xff]
        %v1137 = vld [vmem:[%s1125 + $0x58] sm:$0xff]
        %v1138 = vld [vmem:[%s1125 + $0x60] sm:$0xff]
        %v1139 = vld [vmem:[%s1125 + $0x68] sm:$0xff]
        %v1140 = vld [vmem:[%s1125 + $0x70] sm:$0xff]
        %v1141 = vld [vmem:[%s1125 + $0x78] sm:$0xff]
        %v1142 = vld [vmem:[%s1125 + $0x80] sm:$0xff]
        %v1143 = vld [vmem:[%s1125 + $0x88] sm:$0xff]
        %v1144 = vld [vmem:[%s1125 + $0x90] sm:$0xff]
        %v1145 = vld [vmem:[%s1125 + $0x98] sm:$0xff]
        %v1146 = vld [vmem:[%s1125 + $0xa0] sm:$0xff]
        %v1147 = vld [vmem:[%s1125 + $0xa8] sm:$0xff]
        %v1148 = vld [vmem:[%s1125 + $0xb0] sm:$0xff]
        %v1149 = vld [vmem:[%s1125 + $0xb8] sm:$0xff]
        %v1150 = vld [vmem:[%s1125 + $0xc0] sm:$0xff]
        %v1151 = vld [vmem:[%s1125 + $0xc8] sm:$0xff]
        %v1152 = vld [vmem:[%s1125 + $0xd0] sm:$0xff]
        %v1153 = vld [vmem:[%s1125 + $0xd8] sm:$0xff]
        %v1154 = vld [vmem:[%s1125 + $0xe0] sm:$0xff]
        %v1155 = vld [vmem:[%s1125 + $0xe8] sm:$0xff]
        %v1156 = vld [vmem:[%s1125 + $0xf0] sm:$0xff]
        %v1157 = vld [vmem:[%s1125 + $0xf8] sm:$0xff]
        %s1158 = scalar_lea.vmem %s468, 2 [#allocation11]
        %v1159 = vld [vmem:[%s1158] sm:$0x3]
        %v1161 = vperm.slane %v1159, 0
        %v1162 = vperm.slane %v1159, 1
        %v1197 = vunpack.c.l.b16 %v1126
        %v1198 = vunpack.c.h.b16 %v1126
        %v1199 = vunpack.c.l.b16 %v1127
        %v1200 = vunpack.c.h.b16 %v1127
        %v1201 = vunpack.c.l.b16 %v1128
        %v1202 = vunpack.c.h.b16 %v1128
        %v1203 = vunpack.c.l.b16 %v1129
        %v1204 = vunpack.c.h.b16 %v1129
        %v1205 = vunpack.c.l.b16 %v1130
        %v1206 = vunpack.c.h.b16 %v1130
        %v1207 = vunpack.c.l.b16 %v1131
        %v1208 = vunpack.c.h.b16 %v1131
        %v1209 = vunpack.c.l.b16 %v1132
        %v1210 = vunpack.c.h.b16 %v1132
        %v1211 = vunpack.c.l.b16 %v1133
        %v1212 = vunpack.c.h.b16 %v1133
        %v1213 = vunpack.c.l.b16 %v1134
        %v1214 = vunpack.c.h.b16 %v1134
        %v1215 = vunpack.c.l.b16 %v1135
        %v1216 = vunpack.c.h.b16 %v1135
        %v1217 = vunpack.c.l.b16 %v1136
        %v1218 = vunpack.c.h.b16 %v1136
        %v1219 = vunpack.c.l.b16 %v1137
        %v1220 = vunpack.c.h.b16 %v1137
        %v1221 = vunpack.c.l.b16 %v1138
        %v1222 = vunpack.c.h.b16 %v1138
        %v1223 = vunpack.c.l.b16 %v1139
        %v1224 = vunpack.c.h.b16 %v1139
        %v1225 = vunpack.c.l.b16 %v1140
        %v1226 = vunpack.c.h.b16 %v1140
        %v1227 = vunpack.c.l.b16 %v1141
        %v1228 = vunpack.c.h.b16 %v1141
        %v1229 = vunpack.c.l.b16 %v1142
        %v1230 = vunpack.c.h.b16 %v1142
        %v1231 = vunpack.c.l.b16 %v1143
        %v1232 = vunpack.c.h.b16 %v1143
        %v1233 = vunpack.c.l.b16 %v1144
        %v1234 = vunpack.c.h.b16 %v1144
        %v1235 = vunpack.c.l.b16 %v1145
        %v1236 = vunpack.c.h.b16 %v1145
        %v1237 = vunpack.c.l.b16 %v1146
        %v1238 = vunpack.c.h.b16 %v1146
        %v1239 = vunpack.c.l.b16 %v1147
        %v1240 = vunpack.c.h.b16 %v1147
        %v1241 = vunpack.c.l.b16 %v1148
        %v1242 = vunpack.c.h.b16 %v1148
        %v1243 = vunpack.c.l.b16 %v1149
        %v1244 = vunpack.c.h.b16 %v1149
        %v1245 = vunpack.c.l.b16 %v1150
        %v1246 = vunpack.c.h.b16 %v1150
        %v1247 = vunpack.c.l.b16 %v1151
        %v1248 = vunpack.c.h.b16 %v1151
        %v1249 = vunpack.c.l.b16 %v1152
        %v1250 = vunpack.c.h.b16 %v1152
        %v1251 = vunpack.c.l.b16 %v1153
        %v1252 = vunpack.c.h.b16 %v1153
        %v1253 = vunpack.c.l.b16 %v1154
        %v1254 = vunpack.c.h.b16 %v1154
        %v1255 = vunpack.c.l.b16 %v1155
        %v1256 = vunpack.c.h.b16 %v1155
        %v1257 = vunpack.c.l.b16 %v1156
        %v1258 = vunpack.c.h.b16 %v1156
        %v1259 = vunpack.c.l.b16 %v1157
        %v1260 = vunpack.c.h.b16 %v1157
        %v1261 = vpack.c.b16 %v1199, %v1197
        %v1262 = vpack.c.b16 %v1200, %v1198
        %v1263 = vpack.c.b16 %v1203, %v1201
        %v1264 = vpack.c.b16 %v1204, %v1202
        %v1265 = vpack.c.b16 %v1207, %v1205
        %v1266 = vpack.c.b16 %v1208, %v1206
        %v1267 = vpack.c.b16 %v1211, %v1209
        %v1268 = vpack.c.b16 %v1212, %v1210
        %v1269 = vpack.c.b16 %v1215, %v1213
        %v1270 = vpack.c.b16 %v1216, %v1214
        %v1271 = vpack.c.b16 %v1219, %v1217
        %v1272 = vpack.c.b16 %v1220, %v1218
        %v1273 = vpack.c.b16 %v1223, %v1221
        %v1274 = vpack.c.b16 %v1224, %v1222
        %v1275 = vpack.c.b16 %v1227, %v1225
        %v1276 = vpack.c.b16 %v1228, %v1226
        %v1277 = vpack.c.b16 %v1231, %v1229
        %v1278 = vpack.c.b16 %v1232, %v1230
        %v1279 = vpack.c.b16 %v1235, %v1233
        %v1280 = vpack.c.b16 %v1236, %v1234
        %v1281 = vpack.c.b16 %v1239, %v1237
        %v1282 = vpack.c.b16 %v1240, %v1238
        %v1283 = vpack.c.b16 %v1243, %v1241
        %v1284 = vpack.c.b16 %v1244, %v1242
        %v1285 = vpack.c.b16 %v1247, %v1245
        %v1286 = vpack.c.b16 %v1248, %v1246
        %v1287 = vpack.c.b16 %v1251, %v1249
        %v1288 = vpack.c.b16 %v1252, %v1250
        %v1289 = vpack.c.b16 %v1255, %v1253
        %v1290 = vpack.c.b16 %v1256, %v1254
        %v1291 = vpack.c.b16 %v1259, %v1257
        %v1292 = vpack.c.b16 %v1260, %v1258
        %1325 = vmatpush.bf16.msra.mxu0 %v1275
        %1326 = vmatpush.bf16.msra.mxu0 %v1273
        %1327 = vmatpush.bf16.msra.mxu0 %v1271
        %1328 = vmatpush.bf16.msra.mxu0 %v1269
        %1329 = vmatpush.bf16.msra.mxu0 %v1267
        %1330 = vmatpush.bf16.msra.mxu0 %v1265
        %1331 = vmatpush.bf16.msra.mxu0 %v1263
        %1332 = vmatpush.bf16.msra.mxu0 %v1261
        %1333 = vmatmul.bf16.gmra.mxu0 %v1123
        %v1334 = vpop.f32.mrf.mxu0
        %v1335 = vadd.f32 %v1161, %v1334
        %v1336 = vpop.f32.mrf.mxu0
        %1337 = vdwg.mxu0
        %1338 = vmatpush.bf16.msra.mxu0 %v1291
        %1339 = vmatpush.bf16.msra.mxu0 %v1289
        %1340 = vmatpush.bf16.msra.mxu0 %v1287
        %1341 = vmatpush.bf16.msra.mxu0 %v1285
        %1342 = vmatpush.bf16.msra.mxu0 %v1283
        %1343 = vmatpush.bf16.msra.mxu0 %v1281
        %1344 = vmatpush.bf16.msra.mxu0 %v1279
        %1345 = vmatpush.bf16.msra.mxu0 %v1277
        %1346 = vmatmul.bf16.gmra.mxu0 %v1124
        %v1347 = vpop.f32.mrf.mxu0
        %v1348 = vadd.f32 %v1335, %v1347
        %v1349 = vpop.f32.mrf.mxu0
        %1350 = vdwg.mxu0
        %1351 = vmatpush.bf16.msra.mxu0 %v1276
        %1352 = vmatpush.bf16.msra.mxu0 %v1274
        %1353 = vmatpush.bf16.msra.mxu0 %v1272
        %1354 = vmatpush.bf16.msra.mxu0 %v1270
        %1355 = vmatpush.bf16.msra.mxu0 %v1268
        %1356 = vmatpush.bf16.msra.mxu0 %v1266
        %1357 = vmatpush.bf16.msra.mxu0 %v1264
        %1358 = vmatpush.bf16.msra.mxu0 %v1262
        %1359 = vmatmul.bf16.gmra.mxu0 %v1123
        %v1360 = vpop.f32.mrf.mxu0
        %v1361 = vadd.f32 %v1162, %v1360
        %v1362 = vpop.f32.mrf.mxu0
        %1363 = vdwg.mxu0
        %1364 = vmatpush.bf16.msra.mxu0 %v1292
        %1365 = vmatpush.bf16.msra.mxu0 %v1290
        %1366 = vmatpush.bf16.msra.mxu0 %v1288
        %1367 = vmatpush.bf16.msra.mxu0 %v1286
        %1368 = vmatpush.bf16.msra.mxu0 %v1284
        %1369 = vmatpush.bf16.msra.mxu0 %v1282
        %1370 = vmatpush.bf16.msra.mxu0 %v1280
        %1371 = vmatpush.bf16.msra.mxu0 %v1278
        %1372 = vmatmul.bf16.gmra.mxu0 %v1124
        %v1373 = vpop.f32.mrf.mxu0
        %v1374 = vadd.f32 %v1361, %v1373
        %v1375 = vpop.f32.mrf.mxu0
        %1376 = vdwg.mxu0
        %v1377 = vmax.f32 %v1348, 0.0
        %v1378 = vmax.f32 %v1374, 0.0
        %v1379 = vpack.c.bf16 %v1377, %v1377
        %v1380 = vpack.c.bf16 %v1378, %v1378
        %s1381 = scalar_lea.vmem %s478, 256 [#allocation12]
        %v1382 = vld [vmem:[%s1381] sm:$0xff]
        %v1383 = vld [vmem:[%s1381 + $0x8] sm:$0xff]
        %v1384 = vld [vmem:[%s1381 + $0x10] sm:$0xff]
        %v1385 = vld [vmem:[%s1381 + $0x18] sm:$0xff]
        %v1386 = vld [vmem:[%s1381 + $0x20] sm:$0xff]
        %v1387 = vld [vmem:[%s1381 + $0x28] sm:$0xff]
        %v1388 = vld [vmem:[%s1381 + $0x30] sm:$0xff]
        %v1389 = vld [vmem:[%s1381 + $0x38] sm:$0xff]
        %v1390 = vld [vmem:[%s1381 + $0x40] sm:$0xff]
        %v1391 = vld [vmem:[%s1381 + $0x48] sm:$0xff]
        %v1392 = vld [vmem:[%s1381 + $0x50] sm:$0xff]
        %v1393 = vld [vmem:[%s1381 + $0x58] sm:$0xff]
        %v1394 = vld [vmem:[%s1381 + $0x60] sm:$0xff]
        %v1395 = vld [vmem:[%s1381 + $0x68] sm:$0xff]
        %v1396 = vld [vmem:[%s1381 + $0x70] sm:$0xff]
        %v1397 = vld [vmem:[%s1381 + $0x78] sm:$0xff]
        %v1398 = vld [vmem:[%s1381 + $0x80] sm:$0xff]
        %v1399 = vld [vmem:[%s1381 + $0x88] sm:$0xff]
        %v1400 = vld [vmem:[%s1381 + $0x90] sm:$0xff]
        %v1401 = vld [vmem:[%s1381 + $0x98] sm:$0xff]
        %v1402 = vld [vmem:[%s1381 + $0xa0] sm:$0xff]
        %v1403 = vld [vmem:[%s1381 + $0xa8] sm:$0xff]
        %v1404 = vld [vmem:[%s1381 + $0xb0] sm:$0xff]
        %v1405 = vld [vmem:[%s1381 + $0xb8] sm:$0xff]
        %v1406 = vld [vmem:[%s1381 + $0xc0] sm:$0xff]
        %v1407 = vld [vmem:[%s1381 + $0xc8] sm:$0xff]
        %v1408 = vld [vmem:[%s1381 + $0xd0] sm:$0xff]
        %v1409 = vld [vmem:[%s1381 + $0xd8] sm:$0xff]
        %v1410 = vld [vmem:[%s1381 + $0xe0] sm:$0xff]
        %v1411 = vld [vmem:[%s1381 + $0xe8] sm:$0xff]
        %v1412 = vld [vmem:[%s1381 + $0xf0] sm:$0xff]
        %v1413 = vld [vmem:[%s1381 + $0xf8] sm:$0xff]
        %s1414 = scalar_lea.vmem %s488, 2 [#allocation14]
        %v1415 = vld [vmem:[%s1414] sm:$0x3]
        %v1417 = vperm.slane %v1415, 0
        %v1418 = vperm.slane %v1415, 1
        %v1453 = vunpack.c.l.b16 %v1382
        %v1454 = vunpack.c.h.b16 %v1382
        %v1455 = vunpack.c.l.b16 %v1383
        %v1456 = vunpack.c.h.b16 %v1383
        %v1457 = vunpack.c.l.b16 %v1384
        %v1458 = vunpack.c.h.b16 %v1384
        %v1459 = vunpack.c.l.b16 %v1385
        %v1460 = vunpack.c.h.b16 %v1385
        %v1461 = vunpack.c.l.b16 %v1386
        %v1462 = vunpack.c.h.b16 %v1386
        %v1463 = vunpack.c.l.b16 %v1387
        %v1464 = vunpack.c.h.b16 %v1387
        %v1465 = vunpack.c.l.b16 %v1388
        %v1466 = vunpack.c.h.b16 %v1388
        %v1467 = vunpack.c.l.b16 %v1389
        %v1468 = vunpack.c.h.b16 %v1389
        %v1469 = vunpack.c.l.b16 %v1390
        %v1470 = vunpack.c.h.b16 %v1390
        %v1471 = vunpack.c.l.b16 %v1391
        %v1472 = vunpack.c.h.b16 %v1391
        %v1473 = vunpack.c.l.b16 %v1392
        %v1474 = vunpack.c.h.b16 %v1392
        %v1475 = vunpack.c.l.b16 %v1393
        %v1476 = vunpack.c.h.b16 %v1393
        %v1477 = vunpack.c.l.b16 %v1394
        %v1478 = vunpack.c.h.b16 %v1394
        %v1479 = vunpack.c.l.b16 %v1395
        %v1480 = vunpack.c.h.b16 %v1395
        %v1481 = vunpack.c.l.b16 %v1396
        %v1482 = vunpack.c.h.b16 %v1396
        %v1483 = vunpack.c.l.b16 %v1397
        %v1484 = vunpack.c.h.b16 %v1397
        %v1485 = vunpack.c.l.b16 %v1398
        %v1486 = vunpack.c.h.b16 %v1398
        %v1487 = vunpack.c.l.b16 %v1399
        %v1488 = vunpack.c.h.b16 %v1399
        %v1489 = vunpack.c.l.b16 %v1400
        %v1490 = vunpack.c.h.b16 %v1400
        %v1491 = vunpack.c.l.b16 %v1401
        %v1492 = vunpack.c.h.b16 %v1401
        %v1493 = vunpack.c.l.b16 %v1402
        %v1494 = vunpack.c.h.b16 %v1402
        %v1495 = vunpack.c.l.b16 %v1403
        %v1496 = vunpack.c.h.b16 %v1403
        %v1497 = vunpack.c.l.b16 %v1404
        %v1498 = vunpack.c.h.b16 %v1404
        %v1499 = vunpack.c.l.b16 %v1405
        %v1500 = vunpack.c.h.b16 %v1405
        %v1501 = vunpack.c.l.b16 %v1406
        %v1502 = vunpack.c.h.b16 %v1406
        %v1503 = vunpack.c.l.b16 %v1407
        %v1504 = vunpack.c.h.b16 %v1407
        %v1505 = vunpack.c.l.b16 %v1408
        %v1506 = vunpack.c.h.b16 %v1408
        %v1507 = vunpack.c.l.b16 %v1409
        %v1508 = vunpack.c.h.b16 %v1409
        %v1509 = vunpack.c.l.b16 %v1410
        %v1510 = vunpack.c.h.b16 %v1410
        %v1511 = vunpack.c.l.b16 %v1411
        %v1512 = vunpack.c.h.b16 %v1411
        %v1513 = vunpack.c.l.b16 %v1412
        %v1514 = vunpack.c.h.b16 %v1412
        %v1515 = vunpack.c.l.b16 %v1413
        %v1516 = vunpack.c.h.b16 %v1413
        %v1517 = vpack.c.b16 %v1455, %v1453
        %v1518 = vpack.c.b16 %v1456, %v1454
        %v1519 = vpack.c.b16 %v1459, %v1457
        %v1520 = vpack.c.b16 %v1460, %v1458
        %v1521 = vpack.c.b16 %v1463, %v1461
        %v1522 = vpack.c.b16 %v1464, %v1462
        %v1523 = vpack.c.b16 %v1467, %v1465
        %v1524 = vpack.c.b16 %v1468, %v1466
        %v1525 = vpack.c.b16 %v1471, %v1469
        %v1526 = vpack.c.b16 %v1472, %v1470
        %v1527 = vpack.c.b16 %v1475, %v1473
        %v1528 = vpack.c.b16 %v1476, %v1474
        %v1529 = vpack.c.b16 %v1479, %v1477
        %v1530 = vpack.c.b16 %v1480, %v1478
        %v1531 = vpack.c.b16 %v1483, %v1481
        %v1532 = vpack.c.b16 %v1484, %v1482
        %v1533 = vpack.c.b16 %v1487, %v1485
        %v1534 = vpack.c.b16 %v1488, %v1486
        %v1535 = vpack.c.b16 %v1491, %v1489
        %v1536 = vpack.c.b16 %v1492, %v1490
        %v1537 = vpack.c.b16 %v1495, %v1493
        %v1538 = vpack.c.b16 %v1496, %v1494
        %v1539 = vpack.c.b16 %v1499, %v1497
        %v1540 = vpack.c.b16 %v1500, %v1498
        %v1541 = vpack.c.b16 %v1503, %v1501
        %v1542 = vpack.c.b16 %v1504, %v1502
        %v1543 = vpack.c.b16 %v1507, %v1505
        %v1544 = vpack.c.b16 %v1508, %v1506
        %v1545 = vpack.c.b16 %v1511, %v1509
        %v1546 = vpack.c.b16 %v1512, %v1510
        %v1547 = vpack.c.b16 %v1515, %v1513
        %v1548 = vpack.c.b16 %v1516, %v1514
        %1581 = vmatpush.bf16.msra.mxu0 %v1531
        %1582 = vmatpush.bf16.msra.mxu0 %v1529
        %1583 = vmatpush.bf16.msra.mxu0 %v1527
        %1584 = vmatpush.bf16.msra.mxu0 %v1525
        %1585 = vmatpush.bf16.msra.mxu0 %v1523
        %1586 = vmatpush.bf16.msra.mxu0 %v1521
        %1587 = vmatpush.bf16.msra.mxu0 %v1519
        %1588 = vmatpush.bf16.msra.mxu0 %v1517
        %1589 = vmatmul.bf16.gmra.mxu0 %v1379
        %v1590 = vpop.f32.mrf.mxu0
        %v1591 = vadd.f32 %v1417, %v1590
        %v1592 = vpop.f32.mrf.mxu0
        %1593 = vdwg.mxu0
        %1594 = vmatpush.bf16.msra.mxu0 %v1547
        %1595 = vmatpush.bf16.msra.mxu0 %v1545
        %1596 = vmatpush.bf16.msra.mxu0 %v1543
        %1597 = vmatpush.bf16.msra.mxu0 %v1541
        %1598 = vmatpush.bf16.msra.mxu0 %v1539
        %1599 = vmatpush.bf16.msra.mxu0 %v1537
        %1600 = vmatpush.bf16.msra.mxu0 %v1535
        %1601 = vmatpush.bf16.msra.mxu0 %v1533
        %1602 = vmatmul.bf16.gmra.mxu0 %v1380
        %v1603 = vpop.f32.mrf.mxu0
        %v1604 = vadd.f32 %v1591, %v1603
        %v1605 = vpop.f32.mrf.mxu0
        %1606 = vdwg.mxu0
        %1607 = vmatpush.bf16.msra.mxu0 %v1532
        %1608 = vmatpush.bf16.msra.mxu0 %v1530
        %1609 = vmatpush.bf16.msra.mxu0 %v1528
        %1610 = vmatpush.bf16.msra.mxu0 %v1526
        %1611 = vmatpush.bf16.msra.mxu0 %v1524
        %1612 = vmatpush.bf16.msra.mxu0 %v1522
        %1613 = vmatpush.bf16.msra.mxu0 %v1520
        %1614 = vmatpush.bf16.msra.mxu0 %v1518
        %1615 = vmatmul.bf16.gmra.mxu0 %v1379
        %v1616 = vpop.f32.mrf.mxu0
        %v1617 = vadd.f32 %v1418, %v1616
        %v1618 = vpop.f32.mrf.mxu0
        %1619 = vdwg.mxu0
        %1620 = vmatpush.bf16.msra.mxu0 %v1548
        %1621 = vmatpush.bf16.msra.mxu0 %v1546
        %1622 = vmatpush.bf16.msra.mxu0 %v1544
        %1623 = vmatpush.bf16.msra.mxu0 %v1542
        %1624 = vmatpush.bf16.msra.mxu0 %v1540
        %1625 = vmatpush.bf16.msra.mxu0 %v1538
        %1626 = vmatpush.bf16.msra.mxu0 %v1536
        %1627 = vmatpush.bf16.msra.mxu0 %v1534
        %1628 = vmatmul.bf16.gmra.mxu0 %v1380
        %v1629 = vpop.f32.mrf.mxu0
        %v1630 = vadd.f32 %v1617, %v1629
        %v1631 = vpop.f32.mrf.mxu0
        %1632 = vdwg.mxu0
        %v1633 = vadd.f32 %v1119, %v1604
        %v1634 = vadd.f32 %v1120, %v1630
        %v1635 = vmax.f32 %v1633, 0.0
        %v1636 = vmax.f32 %v1634, 0.0
        %v1637 = vpack.c.bf16 %v1635, %v1635
        %v1638 = vpack.c.bf16 %v1636, %v1636
        %s1639 = scalar_lea.vmem %s458, 512 [#allocation9]
        %v1640 = vld [vmem:[%s1639] sm:$0xff]
        %v1641 = vld [vmem:[%s1639 + $0x8] sm:$0xff]
        %v1642 = vld [vmem:[%s1639 + $0x10] sm:$0xff]
        %v1643 = vld [vmem:[%s1639 + $0x18] sm:$0xff]
        %v1644 = vld [vmem:[%s1639 + $0x20] sm:$0xff]
        %v1645 = vld [vmem:[%s1639 + $0x28] sm:$0xff]
        %v1646 = vld [vmem:[%s1639 + $0x30] sm:$0xff]
        %v1647 = vld [vmem:[%s1639 + $0x38] sm:$0xff]
        %v1648 = vld [vmem:[%s1639 + $0x40] sm:$0xff]
        %v1649 = vld [vmem:[%s1639 + $0x48] sm:$0xff]
        %v1650 = vld [vmem:[%s1639 + $0x50] sm:$0xff]
        %v1651 = vld [vmem:[%s1639 + $0x58] sm:$0xff]
        %v1652 = vld [vmem:[%s1639 + $0x60] sm:$0xff]
        %v1653 = vld [vmem:[%s1639 + $0x68] sm:$0xff]
        %v1654 = vld [vmem:[%s1639 + $0x70] sm:$0xff]
        %v1655 = vld [vmem:[%s1639 + $0x78] sm:$0xff]
        %v1656 = vld [vmem:[%s1639 + $0x80] sm:$0xff]
        %v1657 = vld [vmem:[%s1639 + $0x88] sm:$0xff]
        %v1658 = vld [vmem:[%s1639 + $0x90] sm:$0xff]
        %v1659 = vld [vmem:[%s1639 + $0x98] sm:$0xff]
        %v1660 = vld [vmem:[%s1639 + $0xa0] sm:$0xff]
        %v1661 = vld [vmem:[%s1639 + $0xa8] sm:$0xff]
        %v1662 = vld [vmem:[%s1639 + $0xb0] sm:$0xff]
        %v1663 = vld [vmem:[%s1639 + $0xb8] sm:$0xff]
        %v1664 = vld [vmem:[%s1639 + $0xc0] sm:$0xff]
        %v1665 = vld [vmem:[%s1639 + $0xc8] sm:$0xff]
        %v1666 = vld [vmem:[%s1639 + $0xd0] sm:$0xff]
        %v1667 = vld [vmem:[%s1639 + $0xd8] sm:$0xff]
        %v1668 = vld [vmem:[%s1639 + $0xe0] sm:$0xff]
        %v1669 = vld [vmem:[%s1639 + $0xe8] sm:$0xff]
        %v1670 = vld [vmem:[%s1639 + $0xf0] sm:$0xff]
        %v1671 = vld [vmem:[%s1639 + $0xf8] sm:$0xff]
        %s1672 = scalar_lea.vmem %s468, 4 [#allocation11]
        %v1673 = vld [vmem:[%s1672] sm:$0x3]
        %v1675 = vperm.slane %v1673, 0
        %v1676 = vperm.slane %v1673, 1
        %v1711 = vunpack.c.l.b16 %v1640
        %v1712 = vunpack.c.h.b16 %v1640
        %v1713 = vunpack.c.l.b16 %v1641
        %v1714 = vunpack.c.h.b16 %v1641
        %v1715 = vunpack.c.l.b16 %v1642
        %v1716 = vunpack.c.h.b16 %v1642
        %v1717 = vunpack.c.l.b16 %v1643
        %v1718 = vunpack.c.h.b16 %v1643
        %v1719 = vunpack.c.l.b16 %v1644
        %v1720 = vunpack.c.h.b16 %v1644
        %v1721 = vunpack.c.l.b16 %v1645
        %v1722 = vunpack.c.h.b16 %v1645
        %v1723 = vunpack.c.l.b16 %v1646
        %v1724 = vunpack.c.h.b16 %v1646
        %v1725 = vunpack.c.l.b16 %v1647
        %v1726 = vunpack.c.h.b16 %v1647
        %v1727 = vunpack.c.l.b16 %v1648
        %v1728 = vunpack.c.h.b16 %v1648
        %v1729 = vunpack.c.l.b16 %v1649
        %v1730 = vunpack.c.h.b16 %v1649
        %v1731 = vunpack.c.l.b16 %v1650
        %v1732 = vunpack.c.h.b16 %v1650
        %v1733 = vunpack.c.l.b16 %v1651
        %v1734 = vunpack.c.h.b16 %v1651
        %v1735 = vunpack.c.l.b16 %v1652
        %v1736 = vunpack.c.h.b16 %v1652
        %v1737 = vunpack.c.l.b16 %v1653
        %v1738 = vunpack.c.h.b16 %v1653
        %v1739 = vunpack.c.l.b16 %v1654
        %v1740 = vunpack.c.h.b16 %v1654
        %v1741 = vunpack.c.l.b16 %v1655
        %v1742 = vunpack.c.h.b16 %v1655
        %v1743 = vunpack.c.l.b16 %v1656
        %v1744 = vunpack.c.h.b16 %v1656
        %v1745 = vunpack.c.l.b16 %v1657
        %v1746 = vunpack.c.h.b16 %v1657
        %v1747 = vunpack.c.l.b16 %v1658
        %v1748 = vunpack.c.h.b16 %v1658
        %v1749 = vunpack.c.l.b16 %v1659
        %v1750 = vunpack.c.h.b16 %v1659
        %v1751 = vunpack.c.l.b16 %v1660
        %v1752 = vunpack.c.h.b16 %v1660
        %v1753 = vunpack.c.l.b16 %v1661
        %v1754 = vunpack.c.h.b16 %v1661
        %v1755 = vunpack.c.l.b16 %v1662
        %v1756 = vunpack.c.h.b16 %v1662
        %v1757 = vunpack.c.l.b16 %v1663
        %v1758 = vunpack.c.h.b16 %v1663
        %v1759 = vunpack.c.l.b16 %v1664
        %v1760 = vunpack.c.h.b16 %v1664
        %v1761 = vunpack.c.l.b16 %v1665
        %v1762 = vunpack.c.h.b16 %v1665
        %v1763 = vunpack.c.l.b16 %v1666
        %v1764 = vunpack.c.h.b16 %v1666
        %v1765 = vunpack.c.l.b16 %v1667
        %v1766 = vunpack.c.h.b16 %v1667
        %v1767 = vunpack.c.l.b16 %v1668
        %v1768 = vunpack.c.h.b16 %v1668
        %v1769 = vunpack.c.l.b16 %v1669
        %v1770 = vunpack.c.h.b16 %v1669
        %v1771 = vunpack.c.l.b16 %v1670
        %v1772 = vunpack.c.h.b16 %v1670
        %v1773 = vunpack.c.l.b16 %v1671
        %v1774 = vunpack.c.h.b16 %v1671
        %v1775 = vpack.c.b16 %v1713, %v1711
        %v1776 = vpack.c.b16 %v1714, %v1712
        %v1777 = vpack.c.b16 %v1717, %v1715
        %v1778 = vpack.c.b16 %v1718, %v1716
        %v1779 = vpack.c.b16 %v1721, %v1719
        %v1780 = vpack.c.b16 %v1722, %v1720
        %v1781 = vpack.c.b16 %v1725, %v1723
        %v1782 = vpack.c.b16 %v1726, %v1724
        %v1783 = vpack.c.b16 %v1729, %v1727
        %v1784 = vpack.c.b16 %v1730, %v1728
        %v1785 = vpack.c.b16 %v1733, %v1731
        %v1786 = vpack.c.b16 %v1734, %v1732
        %v1787 = vpack.c.b16 %v1737, %v1735
        %v1788 = vpack.c.b16 %v1738, %v1736
        %v1789 = vpack.c.b16 %v1741, %v1739
        %v1790 = vpack.c.b16 %v1742, %v1740
        %v1791 = vpack.c.b16 %v1745, %v1743
        %v1792 = vpack.c.b16 %v1746, %v1744
        %v1793 = vpack.c.b16 %v1749, %v1747
        %v1794 = vpack.c.b16 %v1750, %v1748
        %v1795 = vpack.c.b16 %v1753, %v1751
        %v1796 = vpack.c.b16 %v1754, %v1752
        %v1797 = vpack.c.b16 %v1757, %v1755
        %v1798 = vpack.c.b16 %v1758, %v1756
        %v1799 = vpack.c.b16 %v1761, %v1759
        %v1800 = vpack.c.b16 %v1762, %v1760
        %v1801 = vpack.c.b16 %v1765, %v1763
        %v1802 = vpack.c.b16 %v1766, %v1764
        %v1803 = vpack.c.b16 %v1769, %v1767
        %v1804 = vpack.c.b16 %v1770, %v1768
        %v1805 = vpack.c.b16 %v1773, %v1771
        %v1806 = vpack.c.b16 %v1774, %v1772
        %1839 = vmatpush.bf16.msra.mxu0 %v1789
        %1840 = vmatpush.bf16.msra.mxu0 %v1787
        %1841 = vmatpush.bf16.msra.mxu0 %v1785
        %1842 = vmatpush.bf16.msra.mxu0 %v1783
        %1843 = vmatpush.bf16.msra.mxu0 %v1781
        %1844 = vmatpush.bf16.msra.mxu0 %v1779
        %1845 = vmatpush.bf16.msra.mxu0 %v1777
        %1846 = vmatpush.bf16.msra.mxu0 %v1775
        %1847 = vmatmul.bf16.gmra.mxu0 %v1637
        %v1848 = vpop.f32.mrf.mxu0
        %v1849 = vadd.f32 %v1675, %v1848
        %v1850 = vpop.f32.mrf.mxu0
        %1851 = vdwg.mxu0
        %1852 = vmatpush.bf16.msra.mxu0 %v1805
        %1853 = vmatpush.bf16.msra.mxu0 %v1803
        %1854 = vmatpush.bf16.msra.mxu0 %v1801
        %1855 = vmatpush.bf16.msra.mxu0 %v1799
        %1856 = vmatpush.bf16.msra.mxu0 %v1797
        %1857 = vmatpush.bf16.msra.mxu0 %v1795
        %1858 = vmatpush.bf16.msra.mxu0 %v1793
        %1859 = vmatpush.bf16.msra.mxu0 %v1791
        %1860 = vmatmul.bf16.gmra.mxu0 %v1638
        %v1861 = vpop.f32.mrf.mxu0
        %v1862 = vadd.f32 %v1849, %v1861
        %v1863 = vpop.f32.mrf.mxu0
        %1864 = vdwg.mxu0
        %1865 = vmatpush.bf16.msra.mxu0 %v1790
        %1866 = vmatpush.bf16.msra.mxu0 %v1788
        %1867 = vmatpush.bf16.msra.mxu0 %v1786
        %1868 = vmatpush.bf16.msra.mxu0 %v1784
        %1869 = vmatpush.bf16.msra.mxu0 %v1782
        %1870 = vmatpush.bf16.msra.mxu0 %v1780
        %1871 = vmatpush.bf16.msra.mxu0 %v1778
        %1872 = vmatpush.bf16.msra.mxu0 %v1776
        %1873 = vmatmul.bf16.gmra.mxu0 %v1637
        %v1874 = vpop.f32.mrf.mxu0
        %v1875 = vadd.f32 %v1676, %v1874
        %v1876 = vpop.f32.mrf.mxu0
        %1877 = vdwg.mxu0
        %1878 = vmatpush.bf16.msra.mxu0 %v1806
        %1879 = vmatpush.bf16.msra.mxu0 %v1804
        %1880 = vmatpush.bf16.msra.mxu0 %v1802
        %1881 = vmatpush.bf16.msra.mxu0 %v1800
        %1882 = vmatpush.bf16.msra.mxu0 %v1798
        %1883 = vmatpush.bf16.msra.mxu0 %v1796
        %1884 = vmatpush.bf16.msra.mxu0 %v1794
        %1885 = vmatpush.bf16.msra.mxu0 %v1792
        %1886 = vmatmul.bf16.gmra.mxu0 %v1638
        %v1887 = vpop.f32.mrf.mxu0
        %v1888 = vadd.f32 %v1875, %v1887
        %v1889 = vpop.f32.mrf.mxu0
        %1890 = vdwg.mxu0
        %v1891 = vmax.f32 %v1862, 0.0
        %v1892 = vmax.f32 %v1888, 0.0
        %v1893 = vpack.c.bf16 %v1891, %v1891
        %v1894 = vpack.c.bf16 %v1892, %v1892
        %s1895 = scalar_lea.vmem %s478, 512 [#allocation12]
        %v1896 = vld [vmem:[%s1895] sm:$0xff]
        %v1897 = vld [vmem:[%s1895 + $0x8] sm:$0xff]
        %v1898 = vld [vmem:[%s1895 + $0x10] sm:$0xff]
        %v1899 = vld [vmem:[%s1895 + $0x18] sm:$0xff]
        %v1900 = vld [vmem:[%s1895 + $0x20] sm:$0xff]
        %v1901 = vld [vmem:[%s1895 + $0x28] sm:$0xff]
        %v1902 = vld [vmem:[%s1895 + $0x30] sm:$0xff]
        %v1903 = vld [vmem:[%s1895 + $0x38] sm:$0xff]
        %v1904 = vld [vmem:[%s1895 + $0x40] sm:$0xff]
        %v1905 = vld [vmem:[%s1895 + $0x48] sm:$0xff]
        %v1906 = vld [vmem:[%s1895 + $0x50] sm:$0xff]
        %v1907 = vld [vmem:[%s1895 + $0x58] sm:$0xff]
        %v1908 = vld [vmem:[%s1895 + $0x60] sm:$0xff]
        %v1909 = vld [vmem:[%s1895 + $0x68] sm:$0xff]
        %v1910 = vld [vmem:[%s1895 + $0x70] sm:$0xff]
        %v1911 = vld [vmem:[%s1895 + $0x78] sm:$0xff]
        %v1912 = vld [vmem:[%s1895 + $0x80] sm:$0xff]
        %v1913 = vld [vmem:[%s1895 + $0x88] sm:$0xff]
        %v1914 = vld [vmem:[%s1895 + $0x90] sm:$0xff]
        %v1915 = vld [vmem:[%s1895 + $0x98] sm:$0xff]
        %v1916 = vld [vmem:[%s1895 + $0xa0] sm:$0xff]
        %v1917 = vld [vmem:[%s1895 + $0xa8] sm:$0xff]
        %v1918 = vld [vmem:[%s1895 + $0xb0] sm:$0xff]
        %v1919 = vld [vmem:[%s1895 + $0xb8] sm:$0xff]
        %v1920 = vld [vmem:[%s1895 + $0xc0] sm:$0xff]
        %v1921 = vld [vmem:[%s1895 + $0xc8] sm:$0xff]
        %v1922 = vld [vmem:[%s1895 + $0xd0] sm:$0xff]
        %v1923 = vld [vmem:[%s1895 + $0xd8] sm:$0xff]
        %v1924 = vld [vmem:[%s1895 + $0xe0] sm:$0xff]
        %v1925 = vld [vmem:[%s1895 + $0xe8] sm:$0xff]
        %v1926 = vld [vmem:[%s1895 + $0xf0] sm:$0xff]
        %v1927 = vld [vmem:[%s1895 + $0xf8] sm:$0xff]
        %s1928 = scalar_lea.vmem %s488, 4 [#allocation14]
        %v1929 = vld [vmem:[%s1928] sm:$0x3]
        %v1931 = vperm.slane %v1929, 0
        %v1932 = vperm.slane %v1929, 1
        %v1967 = vunpack.c.l.b16 %v1896
        %v1968 = vunpack.c.h.b16 %v1896
        %v1969 = vunpack.c.l.b16 %v1897
        %v1970 = vunpack.c.h.b16 %v1897
        %v1971 = vunpack.c.l.b16 %v1898
        %v1972 = vunpack.c.h.b16 %v1898
        %v1973 = vunpack.c.l.b16 %v1899
        %v1974 = vunpack.c.h.b16 %v1899
        %v1975 = vunpack.c.l.b16 %v1900
        %v1976 = vunpack.c.h.b16 %v1900
        %v1977 = vunpack.c.l.b16 %v1901
        %v1978 = vunpack.c.h.b16 %v1901
        %v1979 = vunpack.c.l.b16 %v1902
        %v1980 = vunpack.c.h.b16 %v1902
        %v1981 = vunpack.c.l.b16 %v1903
        %v1982 = vunpack.c.h.b16 %v1903
        %v1983 = vunpack.c.l.b16 %v1904
        %v1984 = vunpack.c.h.b16 %v1904
        %v1985 = vunpack.c.l.b16 %v1905
        %v1986 = vunpack.c.h.b16 %v1905
        %v1987 = vunpack.c.l.b16 %v1906
        %v1988 = vunpack.c.h.b16 %v1906
        %v1989 = vunpack.c.l.b16 %v1907
        %v1990 = vunpack.c.h.b16 %v1907
        %v1991 = vunpack.c.l.b16 %v1908
        %v1992 = vunpack.c.h.b16 %v1908
        %v1993 = vunpack.c.l.b16 %v1909
        %v1994 = vunpack.c.h.b16 %v1909
        %v1995 = vunpack.c.l.b16 %v1910
        %v1996 = vunpack.c.h.b16 %v1910
        %v1997 = vunpack.c.l.b16 %v1911
        %v1998 = vunpack.c.h.b16 %v1911
        %v1999 = vunpack.c.l.b16 %v1912
        %v2000 = vunpack.c.h.b16 %v1912
        %v2001 = vunpack.c.l.b16 %v1913
        %v2002 = vunpack.c.h.b16 %v1913
        %v2003 = vunpack.c.l.b16 %v1914
        %v2004 = vunpack.c.h.b16 %v1914
        %v2005 = vunpack.c.l.b16 %v1915
        %v2006 = vunpack.c.h.b16 %v1915
        %v2007 = vunpack.c.l.b16 %v1916
        %v2008 = vunpack.c.h.b16 %v1916
        %v2009 = vunpack.c.l.b16 %v1917
        %v2010 = vunpack.c.h.b16 %v1917
        %v2011 = vunpack.c.l.b16 %v1918
        %v2012 = vunpack.c.h.b16 %v1918
        %v2013 = vunpack.c.l.b16 %v1919
        %v2014 = vunpack.c.h.b16 %v1919
        %v2015 = vunpack.c.l.b16 %v1920
        %v2016 = vunpack.c.h.b16 %v1920
        %v2017 = vunpack.c.l.b16 %v1921
        %v2018 = vunpack.c.h.b16 %v1921
        %v2019 = vunpack.c.l.b16 %v1922
        %v2020 = vunpack.c.h.b16 %v1922
        %v2021 = vunpack.c.l.b16 %v1923
        %v2022 = vunpack.c.h.b16 %v1923
        %v2023 = vunpack.c.l.b16 %v1924
        %v2024 = vunpack.c.h.b16 %v1924
        %v2025 = vunpack.c.l.b16 %v1925
        %v2026 = vunpack.c.h.b16 %v1925
        %v2027 = vunpack.c.l.b16 %v1926
        %v2028 = vunpack.c.h.b16 %v1926
        %v2029 = vunpack.c.l.b16 %v1927
        %v2030 = vunpack.c.h.b16 %v1927
        %v2031 = vpack.c.b16 %v1969, %v1967
        %v2032 = vpack.c.b16 %v1970, %v1968
        %v2033 = vpack.c.b16 %v1973, %v1971
        %v2034 = vpack.c.b16 %v1974, %v1972
        %v2035 = vpack.c.b16 %v1977, %v1975
        %v2036 = vpack.c.b16 %v1978, %v1976
        %v2037 = vpack.c.b16 %v1981, %v1979
        %v2038 = vpack.c.b16 %v1982, %v1980
        %v2039 = vpack.c.b16 %v1985, %v1983
        %v2040 = vpack.c.b16 %v1986, %v1984
        %v2041 = vpack.c.b16 %v1989, %v1987
        %v2042 = vpack.c.b16 %v1990, %v1988
        %v2043 = vpack.c.b16 %v1993, %v1991
        %v2044 = vpack.c.b16 %v1994, %v1992
        %v2045 = vpack.c.b16 %v1997, %v1995
        %v2046 = vpack.c.b16 %v1998, %v1996
        %v2047 = vpack.c.b16 %v2001, %v1999
        %v2048 = vpack.c.b16 %v2002, %v2000
        %v2049 = vpack.c.b16 %v2005, %v2003
        %v2050 = vpack.c.b16 %v2006, %v2004
        %v2051 = vpack.c.b16 %v2009, %v2007
        %v2052 = vpack.c.b16 %v2010, %v2008
        %v2053 = vpack.c.b16 %v2013, %v2011
        %v2054 = vpack.c.b16 %v2014, %v2012
        %v2055 = vpack.c.b16 %v2017, %v2015
        %v2056 = vpack.c.b16 %v2018, %v2016
        %v2057 = vpack.c.b16 %v2021, %v2019
        %v2058 = vpack.c.b16 %v2022, %v2020
        %v2059 = vpack.c.b16 %v2025, %v2023
        %v2060 = vpack.c.b16 %v2026, %v2024
        %v2061 = vpack.c.b16 %v2029, %v2027
        %v2062 = vpack.c.b16 %v2030, %v2028
        %2095 = vmatpush.bf16.msra.mxu0 %v2045
        %2096 = vmatpush.bf16.msra.mxu0 %v2043
        %2097 = vmatpush.bf16.msra.mxu0 %v2041
        %2098 = vmatpush.bf16.msra.mxu0 %v2039
        %2099 = vmatpush.bf16.msra.mxu0 %v2037
        %2100 = vmatpush.bf16.msra.mxu0 %v2035
        %2101 = vmatpush.bf16.msra.mxu0 %v2033
        %2102 = vmatpush.bf16.msra.mxu0 %v2031
        %2103 = vmatmul.bf16.gmra.mxu0 %v1893
        %v2104 = vpop.f32.mrf.mxu0
        %v2105 = vadd.f32 %v1931, %v2104
        %v2106 = vpop.f32.mrf.mxu0
        %2107 = vdwg.mxu0
        %2108 = vmatpush.bf16.msra.mxu0 %v2061
        %2109 = vmatpush.bf16.msra.mxu0 %v2059
        %2110 = vmatpush.bf16.msra.mxu0 %v2057
        %2111 = vmatpush.bf16.msra.mxu0 %v2055
        %2112 = vmatpush.bf16.msra.mxu0 %v2053
        %2113 = vmatpush.bf16.msra.mxu0 %v2051
        %2114 = vmatpush.bf16.msra.mxu0 %v2049
        %2115 = vmatpush.bf16.msra.mxu0 %v2047
        %2116 = vmatmul.bf16.gmra.mxu0 %v1894
        %v2117 = vpop.f32.mrf.mxu0
        %v2118 = vadd.f32 %v2105, %v2117
        %v2119 = vpop.f32.mrf.mxu0
        %2120 = vdwg.mxu0
        %2121 = vmatpush.bf16.msra.mxu0 %v2046
        %2122 = vmatpush.bf16.msra.mxu0 %v2044
        %2123 = vmatpush.bf16.msra.mxu0 %v2042
        %2124 = vmatpush.bf16.msra.mxu0 %v2040
        %2125 = vmatpush.bf16.msra.mxu0 %v2038
        %2126 = vmatpush.bf16.msra.mxu0 %v2036
        %2127 = vmatpush.bf16.msra.mxu0 %v2034
        %2128 = vmatpush.bf16.msra.mxu0 %v2032
        %2129 = vmatmul.bf16.gmra.mxu0 %v1893
        %v2130 = vpop.f32.mrf.mxu0
        %v2131 = vadd.f32 %v1932, %v2130
        %v2132 = vpop.f32.mrf.mxu0
        %2133 = vdwg.mxu0
        %2134 = vmatpush.bf16.msra.mxu0 %v2062
        %2135 = vmatpush.bf16.msra.mxu0 %v2060
        %2136 = vmatpush.bf16.msra.mxu0 %v2058
        %2137 = vmatpush.bf16.msra.mxu0 %v2056
        %2138 = vmatpush.bf16.msra.mxu0 %v2054
        %2139 = vmatpush.bf16.msra.mxu0 %v2052
        %2140 = vmatpush.bf16.msra.mxu0 %v2050
        %2141 = vmatpush.bf16.msra.mxu0 %v2048
        %2142 = vmatmul.bf16.gmra.mxu0 %v1894
        %v2143 = vpop.f32.mrf.mxu0
        %v2144 = vadd.f32 %v2131, %v2143
        %v2145 = vpop.f32.mrf.mxu0
        %2146 = vdwg.mxu0
        %v2147 = vadd.f32 %v1633, %v2118
        %v2148 = vadd.f32 %v1634, %v2144
        %v2149 = vmax.f32 %v2147, 0.0
        %v2150 = vmax.f32 %v2148, 0.0
        %v2151 = vpack.c.bf16 %v2149, %v2149
        %v2152 = vpack.c.bf16 %v2150, %v2150
        %s2153 = scalar_lea.vmem %s458, 768 [#allocation9]
        %v2154 = vld [vmem:[%s2153] sm:$0xff]
        %v2155 = vld [vmem:[%s2153 + $0x8] sm:$0xff]
        %v2156 = vld [vmem:[%s2153 + $0x10] sm:$0xff]
        %v2157 = vld [vmem:[%s2153 + $0x18] sm:$0xff]
        %v2158 = vld [vmem:[%s2153 + $0x20] sm:$0xff]
        %v2159 = vld [vmem:[%s2153 + $0x28] sm:$0xff]
        %v2160 = vld [vmem:[%s2153 + $0x30] sm:$0xff]
        %v2161 = vld [vmem:[%s2153 + $0x38] sm:$0xff]
        %v2162 = vld [vmem:[%s2153 + $0x40] sm:$0xff]
        %v2163 = vld [vmem:[%s2153 + $0x48] sm:$0xff]
        %v2164 = vld [vmem:[%s2153 + $0x50] sm:$0xff]
        %v2165 = vld [vmem:[%s2153 + $0x58] sm:$0xff]
        %v2166 = vld [vmem:[%s2153 + $0x60] sm:$0xff]
        %v2167 = vld [vmem:[%s2153 + $0x68] sm:$0xff]
        %v2168 = vld [vmem:[%s2153 + $0x70] sm:$0xff]
        %v2169 = vld [vmem:[%s2153 + $0x78] sm:$0xff]
        %v2170 = vld [vmem:[%s2153 + $0x80] sm:$0xff]
        %v2171 = vld [vmem:[%s2153 + $0x88] sm:$0xff]
        %v2172 = vld [vmem:[%s2153 + $0x90] sm:$0xff]
        %v2173 = vld [vmem:[%s2153 + $0x98] sm:$0xff]
        %v2174 = vld [vmem:[%s2153 + $0xa0] sm:$0xff]
        %v2175 = vld [vmem:[%s2153 + $0xa8] sm:$0xff]
        %v2176 = vld [vmem:[%s2153 + $0xb0] sm:$0xff]
        %v2177 = vld [vmem:[%s2153 + $0xb8] sm:$0xff]
        %v2178 = vld [vmem:[%s2153 + $0xc0] sm:$0xff]
        %v2179 = vld [vmem:[%s2153 + $0xc8] sm:$0xff]
        %v2180 = vld [vmem:[%s2153 + $0xd0] sm:$0xff]
        %v2181 = vld [vmem:[%s2153 + $0xd8] sm:$0xff]
        %v2182 = vld [vmem:[%s2153 + $0xe0] sm:$0xff]
        %v2183 = vld [vmem:[%s2153 + $0xe8] sm:$0xff]
        %v2184 = vld [vmem:[%s2153 + $0xf0] sm:$0xff]
        %v2185 = vld [vmem:[%s2153 + $0xf8] sm:$0xff]
        %s2186 = scalar_lea.vmem %s468, 6 [#allocation11]
        %v2187 = vld [vmem:[%s2186] sm:$0x3]
        %v2189 = vperm.slane %v2187, 0
        %v2190 = vperm.slane %v2187, 1
        %v2225 = vunpack.c.l.b16 %v2154
        %v2226 = vunpack.c.h.b16 %v2154
        %v2227 = vunpack.c.l.b16 %v2155
        %v2228 = vunpack.c.h.b16 %v2155
        %v2229 = vunpack.c.l.b16 %v2156
        %v2230 = vunpack.c.h.b16 %v2156
        %v2231 = vunpack.c.l.b16 %v2157
        %v2232 = vunpack.c.h.b16 %v2157
        %v2233 = vunpack.c.l.b16 %v2158
        %v2234 = vunpack.c.h.b16 %v2158
        %v2235 = vunpack.c.l.b16 %v2159
        %v2236 = vunpack.c.h.b16 %v2159
        %v2237 = vunpack.c.l.b16 %v2160
        %v2238 = vunpack.c.h.b16 %v2160
        %v2239 = vunpack.c.l.b16 %v2161
        %v2240 = vunpack.c.h.b16 %v2161
        %v2241 = vunpack.c.l.b16 %v2162
        %v2242 = vunpack.c.h.b16 %v2162
        %v2243 = vunpack.c.l.b16 %v2163
        %v2244 = vunpack.c.h.b16 %v2163
        %v2245 = vunpack.c.l.b16 %v2164
        %v2246 = vunpack.c.h.b16 %v2164
        %v2247 = vunpack.c.l.b16 %v2165
        %v2248 = vunpack.c.h.b16 %v2165
        %v2249 = vunpack.c.l.b16 %v2166
        %v2250 = vunpack.c.h.b16 %v2166
        %v2251 = vunpack.c.l.b16 %v2167
        %v2252 = vunpack.c.h.b16 %v2167
        %v2253 = vunpack.c.l.b16 %v2168
        %v2254 = vunpack.c.h.b16 %v2168
        %v2255 = vunpack.c.l.b16 %v2169
        %v2256 = vunpack.c.h.b16 %v2169
        %v2257 = vunpack.c.l.b16 %v2170
        %v2258 = vunpack.c.h.b16 %v2170
        %v2259 = vunpack.c.l.b16 %v2171
        %v2260 = vunpack.c.h.b16 %v2171
        %v2261 = vunpack.c.l.b16 %v2172
        %v2262 = vunpack.c.h.b16 %v2172
        %v2263 = vunpack.c.l.b16 %v2173
        %v2264 = vunpack.c.h.b16 %v2173
        %v2265 = vunpack.c.l.b16 %v2174
        %v2266 = vunpack.c.h.b16 %v2174
        %v2267 = vunpack.c.l.b16 %v2175
        %v2268 = vunpack.c.h.b16 %v2175
        %v2269 = vunpack.c.l.b16 %v2176
        %v2270 = vunpack.c.h.b16 %v2176
        %v2271 = vunpack.c.l.b16 %v2177
        %v2272 = vunpack.c.h.b16 %v2177
        %v2273 = vunpack.c.l.b16 %v2178
        %v2274 = vunpack.c.h.b16 %v2178
        %v2275 = vunpack.c.l.b16 %v2179
        %v2276 = vunpack.c.h.b16 %v2179
        %v2277 = vunpack.c.l.b16 %v2180
        %v2278 = vunpack.c.h.b16 %v2180
        %v2279 = vunpack.c.l.b16 %v2181
        %v2280 = vunpack.c.h.b16 %v2181
        %v2281 = vunpack.c.l.b16 %v2182
        %v2282 = vunpack.c.h.b16 %v2182
        %v2283 = vunpack.c.l.b16 %v2183
        %v2284 = vunpack.c.h.b16 %v2183
        %v2285 = vunpack.c.l.b16 %v2184
        %v2286 = vunpack.c.h.b16 %v2184
        %v2287 = vunpack.c.l.b16 %v2185
        %v2288 = vunpack.c.h.b16 %v2185
        %v2289 = vpack.c.b16 %v2227, %v2225
        %v2290 = vpack.c.b16 %v2228, %v2226
        %v2291 = vpack.c.b16 %v2231, %v2229
        %v2292 = vpack.c.b16 %v2232, %v2230
        %v2293 = vpack.c.b16 %v2235, %v2233
        %v2294 = vpack.c.b16 %v2236, %v2234
        %v2295 = vpack.c.b16 %v2239, %v2237
        %v2296 = vpack.c.b16 %v2240, %v2238
        %v2297 = vpack.c.b16 %v2243, %v2241
        %v2298 = vpack.c.b16 %v2244, %v2242
        %v2299 = vpack.c.b16 %v2247, %v2245
        %v2300 = vpack.c.b16 %v2248, %v2246
        %v2301 = vpack.c.b16 %v2251, %v2249
        %v2302 = vpack.c.b16 %v2252, %v2250
        %v2303 = vpack.c.b16 %v2255, %v2253
        %v2304 = vpack.c.b16 %v2256, %v2254
        %v2305 = vpack.c.b16 %v2259, %v2257
        %v2306 = vpack.c.b16 %v2260, %v2258
        %v2307 = vpack.c.b16 %v2263, %v2261
        %v2308 = vpack.c.b16 %v2264, %v2262
        %v2309 = vpack.c.b16 %v2267, %v2265
        %v2310 = vpack.c.b16 %v2268, %v2266
        %v2311 = vpack.c.b16 %v2271, %v2269
        %v2312 = vpack.c.b16 %v2272, %v2270
        %v2313 = vpack.c.b16 %v2275, %v2273
        %v2314 = vpack.c.b16 %v2276, %v2274
        %v2315 = vpack.c.b16 %v2279, %v2277
        %v2316 = vpack.c.b16 %v2280, %v2278
        %v2317 = vpack.c.b16 %v2283, %v2281
        %v2318 = vpack.c.b16 %v2284, %v2282
        %v2319 = vpack.c.b16 %v2287, %v2285
        %v2320 = vpack.c.b16 %v2288, %v2286
        %2353 = vmatpush.bf16.msra.mxu0 %v2303
        %2354 = vmatpush.bf16.msra.mxu0 %v2301
        %2355 = vmatpush.bf16.msra.mxu0 %v2299
        %2356 = vmatpush.bf16.msra.mxu0 %v2297
        %2357 = vmatpush.bf16.msra.mxu0 %v2295
        %2358 = vmatpush.bf16.msra.mxu0 %v2293
        %2359 = vmatpush.bf16.msra.mxu0 %v2291
        %2360 = vmatpush.bf16.msra.mxu0 %v2289
        %2361 = vmatmul.bf16.gmra.mxu0 %v2151
        %v2362 = vpop.f32.mrf.mxu0
        %v2363 = vadd.f32 %v2189, %v2362
        %v2364 = vpop.f32.mrf.mxu0
        %2365 = vdwg.mxu0
        %2366 = vmatpush.bf16.msra.mxu0 %v2319
        %2367 = vmatpush.bf16.msra.mxu0 %v2317
        %2368 = vmatpush.bf16.msra.mxu0 %v2315
        %2369 = vmatpush.bf16.msra.mxu0 %v2313
        %2370 = vmatpush.bf16.msra.mxu0 %v2311
        %2371 = vmatpush.bf16.msra.mxu0 %v2309
        %2372 = vmatpush.bf16.msra.mxu0 %v2307
        %2373 = vmatpush.bf16.msra.mxu0 %v2305
        %2374 = vmatmul.bf16.gmra.mxu0 %v2152
        %v2375 = vpop.f32.mrf.mxu0
        %v2376 = vadd.f32 %v2363, %v2375
        %v2377 = vpop.f32.mrf.mxu0
        %2378 = vdwg.mxu0
        %2379 = vmatpush.bf16.msra.mxu0 %v2304
        %2380 = vmatpush.bf16.msra.mxu0 %v2302
        %2381 = vmatpush.bf16.msra.mxu0 %v2300
        %2382 = vmatpush.bf16.msra.mxu0 %v2298
        %2383 = vmatpush.bf16.msra.mxu0 %v2296
        %2384 = vmatpush.bf16.msra.mxu0 %v2294
        %2385 = vmatpush.bf16.msra.mxu0 %v2292
        %2386 = vmatpush.bf16.msra.mxu0 %v2290
        %2387 = vmatmul.bf16.gmra.mxu0 %v2151
        %v2388 = vpop.f32.mrf.mxu0
        %v2389 = vadd.f32 %v2190, %v2388
        %v2390 = vpop.f32.mrf.mxu0
        %2391 = vdwg.mxu0
        %2392 = vmatpush.bf16.msra.mxu0 %v2320
        %2393 = vmatpush.bf16.msra.mxu0 %v2318
        %2394 = vmatpush.bf16.msra.mxu0 %v2316
        %2395 = vmatpush.bf16.msra.mxu0 %v2314
        %2396 = vmatpush.bf16.msra.mxu0 %v2312
        %2397 = vmatpush.bf16.msra.mxu0 %v2310
        %2398 = vmatpush.bf16.msra.mxu0 %v2308
        %2399 = vmatpush.bf16.msra.mxu0 %v2306
        %2400 = vmatmul.bf16.gmra.mxu0 %v2152
        %v2401 = vpop.f32.mrf.mxu0
        %v2402 = vadd.f32 %v2389, %v2401
        %v2403 = vpop.f32.mrf.mxu0
        %2404 = vdwg.mxu0
        %v2405 = vmax.f32 %v2376, 0.0
        %v2406 = vmax.f32 %v2402, 0.0
        %v2407 = vpack.c.bf16 %v2405, %v2405
        %v2408 = vpack.c.bf16 %v2406, %v2406
        %s2409 = scalar_lea.vmem %s478, 768 [#allocation12]
        %v2410 = vld [vmem:[%s2409] sm:$0xff]
        %v2411 = vld [vmem:[%s2409 + $0x8] sm:$0xff]
        %v2412 = vld [vmem:[%s2409 + $0x10] sm:$0xff]
        %v2413 = vld [vmem:[%s2409 + $0x18] sm:$0xff]
        %v2414 = vld [vmem:[%s2409 + $0x20] sm:$0xff]
        %v2415 = vld [vmem:[%s2409 + $0x28] sm:$0xff]
        %v2416 = vld [vmem:[%s2409 + $0x30] sm:$0xff]
        %v2417 = vld [vmem:[%s2409 + $0x38] sm:$0xff]
        %v2418 = vld [vmem:[%s2409 + $0x40] sm:$0xff]
        %v2419 = vld [vmem:[%s2409 + $0x48] sm:$0xff]
        %v2420 = vld [vmem:[%s2409 + $0x50] sm:$0xff]
        %v2421 = vld [vmem:[%s2409 + $0x58] sm:$0xff]
        %v2422 = vld [vmem:[%s2409 + $0x60] sm:$0xff]
        %v2423 = vld [vmem:[%s2409 + $0x68] sm:$0xff]
        %v2424 = vld [vmem:[%s2409 + $0x70] sm:$0xff]
        %v2425 = vld [vmem:[%s2409 + $0x78] sm:$0xff]
        %v2426 = vld [vmem:[%s2409 + $0x80] sm:$0xff]
        %v2427 = vld [vmem:[%s2409 + $0x88] sm:$0xff]
        %v2428 = vld [vmem:[%s2409 + $0x90] sm:$0xff]
        %v2429 = vld [vmem:[%s2409 + $0x98] sm:$0xff]
        %v2430 = vld [vmem:[%s2409 + $0xa0] sm:$0xff]
        %v2431 = vld [vmem:[%s2409 + $0xa8] sm:$0xff]
        %v2432 = vld [vmem:[%s2409 + $0xb0] sm:$0xff]
        %v2433 = vld [vmem:[%s2409 + $0xb8] sm:$0xff]
        %v2434 = vld [vmem:[%s2409 + $0xc0] sm:$0xff]
        %v2435 = vld [vmem:[%s2409 + $0xc8] sm:$0xff]
        %v2436 = vld [vmem:[%s2409 + $0xd0] sm:$0xff]
        %v2437 = vld [vmem:[%s2409 + $0xd8] sm:$0xff]
        %v2438 = vld [vmem:[%s2409 + $0xe0] sm:$0xff]
        %v2439 = vld [vmem:[%s2409 + $0xe8] sm:$0xff]
        %v2440 = vld [vmem:[%s2409 + $0xf0] sm:$0xff]
        %v2441 = vld [vmem:[%s2409 + $0xf8] sm:$0xff]
        %s2442 = scalar_lea.vmem %s488, 6 [#allocation14]
        %v2443 = vld [vmem:[%s2442] sm:$0x3]
        %v2445 = vperm.slane %v2443, 0
        %v2446 = vperm.slane %v2443, 1
        %v2481 = vunpack.c.l.b16 %v2410
        %v2482 = vunpack.c.h.b16 %v2410
        %v2483 = vunpack.c.l.b16 %v2411
        %v2484 = vunpack.c.h.b16 %v2411
        %v2485 = vunpack.c.l.b16 %v2412
        %v2486 = vunpack.c.h.b16 %v2412
        %v2487 = vunpack.c.l.b16 %v2413
        %v2488 = vunpack.c.h.b16 %v2413
        %v2489 = vunpack.c.l.b16 %v2414
        %v2490 = vunpack.c.h.b16 %v2414
        %v2491 = vunpack.c.l.b16 %v2415
        %v2492 = vunpack.c.h.b16 %v2415
        %v2493 = vunpack.c.l.b16 %v2416
        %v2494 = vunpack.c.h.b16 %v2416
        %v2495 = vunpack.c.l.b16 %v2417
        %v2496 = vunpack.c.h.b16 %v2417
        %v2497 = vunpack.c.l.b16 %v2418
        %v2498 = vunpack.c.h.b16 %v2418
        %v2499 = vunpack.c.l.b16 %v2419
        %v2500 = vunpack.c.h.b16 %v2419
        %v2501 = vunpack.c.l.b16 %v2420
        %v2502 = vunpack.c.h.b16 %v2420
        %v2503 = vunpack.c.l.b16 %v2421
        %v2504 = vunpack.c.h.b16 %v2421
        %v2505 = vunpack.c.l.b16 %v2422
        %v2506 = vunpack.c.h.b16 %v2422
        %v2507 = vunpack.c.l.b16 %v2423
        %v2508 = vunpack.c.h.b16 %v2423
        %v2509 = vunpack.c.l.b16 %v2424
        %v2510 = vunpack.c.h.b16 %v2424
        %v2511 = vunpack.c.l.b16 %v2425
        %v2512 = vunpack.c.h.b16 %v2425
        %v2513 = vunpack.c.l.b16 %v2426
        %v2514 = vunpack.c.h.b16 %v2426
        %v2515 = vunpack.c.l.b16 %v2427
        %v2516 = vunpack.c.h.b16 %v2427
        %v2517 = vunpack.c.l.b16 %v2428
        %v2518 = vunpack.c.h.b16 %v2428
        %v2519 = vunpack.c.l.b16 %v2429
        %v2520 = vunpack.c.h.b16 %v2429
        %v2521 = vunpack.c.l.b16 %v2430
        %v2522 = vunpack.c.h.b16 %v2430
        %v2523 = vunpack.c.l.b16 %v2431
        %v2524 = vunpack.c.h.b16 %v2431
        %v2525 = vunpack.c.l.b16 %v2432
        %v2526 = vunpack.c.h.b16 %v2432
        %v2527 = vunpack.c.l.b16 %v2433
        %v2528 = vunpack.c.h.b16 %v2433
        %v2529 = vunpack.c.l.b16 %v2434
        %v2530 = vunpack.c.h.b16 %v2434
        %v2531 = vunpack.c.l.b16 %v2435
        %v2532 = vunpack.c.h.b16 %v2435
        %v2533 = vunpack.c.l.b16 %v2436
        %v2534 = vunpack.c.h.b16 %v2436
        %v2535 = vunpack.c.l.b16 %v2437
        %v2536 = vunpack.c.h.b16 %v2437
        %v2537 = vunpack.c.l.b16 %v2438
        %v2538 = vunpack.c.h.b16 %v2438
        %v2539 = vunpack.c.l.b16 %v2439
        %v2540 = vunpack.c.h.b16 %v2439
        %v2541 = vunpack.c.l.b16 %v2440
        %v2542 = vunpack.c.h.b16 %v2440
        %v2543 = vunpack.c.l.b16 %v2441
        %v2544 = vunpack.c.h.b16 %v2441
        %v2545 = vpack.c.b16 %v2483, %v2481
        %v2546 = vpack.c.b16 %v2484, %v2482
        %v2547 = vpack.c.b16 %v2487, %v2485
        %v2548 = vpack.c.b16 %v2488, %v2486
        %v2549 = vpack.c.b16 %v2491, %v2489
        %v2550 = vpack.c.b16 %v2492, %v2490
        %v2551 = vpack.c.b16 %v2495, %v2493
        %v2552 = vpack.c.b16 %v2496, %v2494
        %v2553 = vpack.c.b16 %v2499, %v2497
        %v2554 = vpack.c.b16 %v2500, %v2498
        %v2555 = vpack.c.b16 %v2503, %v2501
        %v2556 = vpack.c.b16 %v2504, %v2502
        %v2557 = vpack.c.b16 %v2507, %v2505
        %v2558 = vpack.c.b16 %v2508, %v2506
        %v2559 = vpack.c.b16 %v2511, %v2509
        %v2560 = vpack.c.b16 %v2512, %v2510
        %v2561 = vpack.c.b16 %v2515, %v2513
        %v2562 = vpack.c.b16 %v2516, %v2514
        %v2563 = vpack.c.b16 %v2519, %v2517
        %v2564 = vpack.c.b16 %v2520, %v2518
        %v2565 = vpack.c.b16 %v2523, %v2521
        %v2566 = vpack.c.b16 %v2524, %v2522
        %v2567 = vpack.c.b16 %v2527, %v2525
        %v2568 = vpack.c.b16 %v2528, %v2526
        %v2569 = vpack.c.b16 %v2531, %v2529
        %v2570 = vpack.c.b16 %v2532, %v2530
        %v2571 = vpack.c.b16 %v2535, %v2533
        %v2572 = vpack.c.b16 %v2536, %v2534
        %v2573 = vpack.c.b16 %v2539, %v2537
        %v2574 = vpack.c.b16 %v2540, %v2538
        %v2575 = vpack.c.b16 %v2543, %v2541
        %v2576 = vpack.c.b16 %v2544, %v2542
        %2609 = vmatpush.bf16.msra.mxu0 %v2559
        %2610 = vmatpush.bf16.msra.mxu0 %v2557
        %2611 = vmatpush.bf16.msra.mxu0 %v2555
        %2612 = vmatpush.bf16.msra.mxu0 %v2553
        %2613 = vmatpush.bf16.msra.mxu0 %v2551
        %2614 = vmatpush.bf16.msra.mxu0 %v2549
        %2615 = vmatpush.bf16.msra.mxu0 %v2547
        %2616 = vmatpush.bf16.msra.mxu0 %v2545
        %2617 = vmatmul.bf16.gmra.mxu0 %v2407
        %v2618 = vpop.f32.mrf.mxu0
        %v2619 = vadd.f32 %v2445, %v2618
        %v2620 = vpop.f32.mrf.mxu0
        %2621 = vdwg.mxu0
        %2622 = vmatpush.bf16.msra.mxu0 %v2575
        %2623 = vmatpush.bf16.msra.mxu0 %v2573
        %2624 = vmatpush.bf16.msra.mxu0 %v2571
        %2625 = vmatpush.bf16.msra.mxu0 %v2569
        %2626 = vmatpush.bf16.msra.mxu0 %v2567
        %2627 = vmatpush.bf16.msra.mxu0 %v2565
        %2628 = vmatpush.bf16.msra.mxu0 %v2563
        %2629 = vmatpush.bf16.msra.mxu0 %v2561
        %2630 = vmatmul.bf16.gmra.mxu0 %v2408
        %v2631 = vpop.f32.mrf.mxu0
        %v2632 = vadd.f32 %v2619, %v2631
        %v2633 = vpop.f32.mrf.mxu0
        %2634 = vdwg.mxu0
        %2635 = vmatpush.bf16.msra.mxu0 %v2560
        %2636 = vmatpush.bf16.msra.mxu0 %v2558
        %2637 = vmatpush.bf16.msra.mxu0 %v2556
        %2638 = vmatpush.bf16.msra.mxu0 %v2554
        %2639 = vmatpush.bf16.msra.mxu0 %v2552
        %2640 = vmatpush.bf16.msra.mxu0 %v2550
        %2641 = vmatpush.bf16.msra.mxu0 %v2548
        %2642 = vmatpush.bf16.msra.mxu0 %v2546
        %2643 = vmatmul.bf16.gmra.mxu0 %v2407
        %v2644 = vpop.f32.mrf.mxu0
        %v2645 = vadd.f32 %v2446, %v2644
        %v2646 = vpop.f32.mrf.mxu0
        %2647 = vdwg.mxu0
        %2648 = vmatpush.bf16.msra.mxu0 %v2576
        %2649 = vmatpush.bf16.msra.mxu0 %v2574
        %2650 = vmatpush.bf16.msra.mxu0 %v2572
        %2651 = vmatpush.bf16.msra.mxu0 %v2570
        %2652 = vmatpush.bf16.msra.mxu0 %v2568
        %2653 = vmatpush.bf16.msra.mxu0 %v2566
        %2654 = vmatpush.bf16.msra.mxu0 %v2564
        %2655 = vmatpush.bf16.msra.mxu0 %v2562
        %2656 = vmatmul.bf16.gmra.mxu0 %v2408
        %v2657 = vpop.f32.mrf.mxu0
        %v2658 = vadd.f32 %v2645, %v2657
        %v2659 = vpop.f32.mrf.mxu0
        %2660 = vdwg.mxu0
        %v2661 = vadd.f32 %v2147, %v2632
        %v2662 = vadd.f32 %v2148, %v2658
        %v2663 = vmax.f32 %v2661, 0.0
        %v2664 = vmax.f32 %v2662, 0.0
        %v2665 = vpack.c.bf16 %v2663, %v2663
        %v2666 = vpack.c.bf16 %v2664, %v2664
        %s2667 = scalar_lea.vmem %s458, 1024 [#allocation9]
        %v2668 = vld [vmem:[%s2667] sm:$0xff]
        %v2669 = vld [vmem:[%s2667 + $0x8] sm:$0xff]
        %v2670 = vld [vmem:[%s2667 + $0x10] sm:$0xff]
        %v2671 = vld [vmem:[%s2667 + $0x18] sm:$0xff]
        %v2672 = vld [vmem:[%s2667 + $0x20] sm:$0xff]
        %v2673 = vld [vmem:[%s2667 + $0x28] sm:$0xff]
        %v2674 = vld [vmem:[%s2667 + $0x30] sm:$0xff]
        %v2675 = vld [vmem:[%s2667 + $0x38] sm:$0xff]
        %v2676 = vld [vmem:[%s2667 + $0x40] sm:$0xff]
        %v2677 = vld [vmem:[%s2667 + $0x48] sm:$0xff]
        %v2678 = vld [vmem:[%s2667 + $0x50] sm:$0xff]
        %v2679 = vld [vmem:[%s2667 + $0x58] sm:$0xff]
        %v2680 = vld [vmem:[%s2667 + $0x60] sm:$0xff]
        %v2681 = vld [vmem:[%s2667 + $0x68] sm:$0xff]
        %v2682 = vld [vmem:[%s2667 + $0x70] sm:$0xff]
        %v2683 = vld [vmem:[%s2667 + $0x78] sm:$0xff]
        %v2684 = vld [vmem:[%s2667 + $0x80] sm:$0xff]
        %v2685 = vld [vmem:[%s2667 + $0x88] sm:$0xff]
        %v2686 = vld [vmem:[%s2667 + $0x90] sm:$0xff]
        %v2687 = vld [vmem:[%s2667 + $0x98] sm:$0xff]
        %v2688 = vld [vmem:[%s2667 + $0xa0] sm:$0xff]
        %v2689 = vld [vmem:[%s2667 + $0xa8] sm:$0xff]
        %v2690 = vld [vmem:[%s2667 + $0xb0] sm:$0xff]
        %v2691 = vld [vmem:[%s2667 + $0xb8] sm:$0xff]
        %v2692 = vld [vmem:[%s2667 + $0xc0] sm:$0xff]
        %v2693 = vld [vmem:[%s2667 + $0xc8] sm:$0xff]
        %v2694 = vld [vmem:[%s2667 + $0xd0] sm:$0xff]
        %v2695 = vld [vmem:[%s2667 + $0xd8] sm:$0xff]
        %v2696 = vld [vmem:[%s2667 + $0xe0] sm:$0xff]
        %v2697 = vld [vmem:[%s2667 + $0xe8] sm:$0xff]
        %v2698 = vld [vmem:[%s2667 + $0xf0] sm:$0xff]
        %v2699 = vld [vmem:[%s2667 + $0xf8] sm:$0xff]
        %s2700 = scalar_lea.vmem %s468, 8 [#allocation11]
        %v2701 = vld [vmem:[%s2700] sm:$0x3]
        %v2703 = vperm.slane %v2701, 0
        %v2704 = vperm.slane %v2701, 1
        %v2739 = vunpack.c.l.b16 %v2668
        %v2740 = vunpack.c.h.b16 %v2668
        %v2741 = vunpack.c.l.b16 %v2669
        %v2742 = vunpack.c.h.b16 %v2669
        %v2743 = vunpack.c.l.b16 %v2670
        %v2744 = vunpack.c.h.b16 %v2670
        %v2745 = vunpack.c.l.b16 %v2671
        %v2746 = vunpack.c.h.b16 %v2671
        %v2747 = vunpack.c.l.b16 %v2672
        %v2748 = vunpack.c.h.b16 %v2672
        %v2749 = vunpack.c.l.b16 %v2673
        %v2750 = vunpack.c.h.b16 %v2673
        %v2751 = vunpack.c.l.b16 %v2674
        %v2752 = vunpack.c.h.b16 %v2674
        %v2753 = vunpack.c.l.b16 %v2675
        %v2754 = vunpack.c.h.b16 %v2675
        %v2755 = vunpack.c.l.b16 %v2676
        %v2756 = vunpack.c.h.b16 %v2676
        %v2757 = vunpack.c.l.b16 %v2677
        %v2758 = vunpack.c.h.b16 %v2677
        %v2759 = vunpack.c.l.b16 %v2678
        %v2760 = vunpack.c.h.b16 %v2678
        %v2761 = vunpack.c.l.b16 %v2679
        %v2762 = vunpack.c.h.b16 %v2679
        %v2763 = vunpack.c.l.b16 %v2680
        %v2764 = vunpack.c.h.b16 %v2680
        %v2765 = vunpack.c.l.b16 %v2681
        %v2766 = vunpack.c.h.b16 %v2681
        %v2767 = vunpack.c.l.b16 %v2682
        %v2768 = vunpack.c.h.b16 %v2682
        %v2769 = vunpack.c.l.b16 %v2683
        %v2770 = vunpack.c.h.b16 %v2683
        %v2771 = vunpack.c.l.b16 %v2684
        %v2772 = vunpack.c.h.b16 %v2684
        %v2773 = vunpack.c.l.b16 %v2685
        %v2774 = vunpack.c.h.b16 %v2685
        %v2775 = vunpack.c.l.b16 %v2686
        %v2776 = vunpack.c.h.b16 %v2686
        %v2777 = vunpack.c.l.b16 %v2687
        %v2778 = vunpack.c.h.b16 %v2687
        %v2779 = vunpack.c.l.b16 %v2688
        %v2780 = vunpack.c.h.b16 %v2688
        %v2781 = vunpack.c.l.b16 %v2689
        %v2782 = vunpack.c.h.b16 %v2689
        %v2783 = vunpack.c.l.b16 %v2690
        %v2784 = vunpack.c.h.b16 %v2690
        %v2785 = vunpack.c.l.b16 %v2691
        %v2786 = vunpack.c.h.b16 %v2691
        %v2787 = vunpack.c.l.b16 %v2692
        %v2788 = vunpack.c.h.b16 %v2692
        %v2789 = vunpack.c.l.b16 %v2693
        %v2790 = vunpack.c.h.b16 %v2693
        %v2791 = vunpack.c.l.b16 %v2694
        %v2792 = vunpack.c.h.b16 %v2694
        %v2793 = vunpack.c.l.b16 %v2695
        %v2794 = vunpack.c.h.b16 %v2695
        %v2795 = vunpack.c.l.b16 %v2696
        %v2796 = vunpack.c.h.b16 %v2696
        %v2797 = vunpack.c.l.b16 %v2697
        %v2798 = vunpack.c.h.b16 %v2697
        %v2799 = vunpack.c.l.b16 %v2698
        %v2800 = vunpack.c.h.b16 %v2698
        %v2801 = vunpack.c.l.b16 %v2699
        %v2802 = vunpack.c.h.b16 %v2699
        %v2803 = vpack.c.b16 %v2741, %v2739
        %v2804 = vpack.c.b16 %v2742, %v2740
        %v2805 = vpack.c.b16 %v2745, %v2743
        %v2806 = vpack.c.b16 %v2746, %v2744
        %v2807 = vpack.c.b16 %v2749, %v2747
        %v2808 = vpack.c.b16 %v2750, %v2748
        %v2809 = vpack.c.b16 %v2753, %v2751
        %v2810 = vpack.c.b16 %v2754, %v2752
        %v2811 = vpack.c.b16 %v2757, %v2755
        %v2812 = vpack.c.b16 %v2758, %v2756
        %v2813 = vpack.c.b16 %v2761, %v2759
        %v2814 = vpack.c.b16 %v2762, %v2760
        %v2815 = vpack.c.b16 %v2765, %v2763
        %v2816 = vpack.c.b16 %v2766, %v2764
        %v2817 = vpack.c.b16 %v2769, %v2767
        %v2818 = vpack.c.b16 %v2770, %v2768
        %v2819 = vpack.c.b16 %v2773, %v2771
        %v2820 = vpack.c.b16 %v2774, %v2772
        %v2821 = vpack.c.b16 %v2777, %v2775
        %v2822 = vpack.c.b16 %v2778, %v2776
        %v2823 = vpack.c.b16 %v2781, %v2779
        %v2824 = vpack.c.b16 %v2782, %v2780
        %v2825 = vpack.c.b16 %v2785, %v2783
        %v2826 = vpack.c.b16 %v2786, %v2784
        %v2827 = vpack.c.b16 %v2789, %v2787
        %v2828 = vpack.c.b16 %v2790, %v2788
        %v2829 = vpack.c.b16 %v2793, %v2791
        %v2830 = vpack.c.b16 %v2794, %v2792
        %v2831 = vpack.c.b16 %v2797, %v2795
        %v2832 = vpack.c.b16 %v2798, %v2796
        %v2833 = vpack.c.b16 %v2801, %v2799
        %v2834 = vpack.c.b16 %v2802, %v2800
        %2867 = vmatpush.bf16.msra.mxu0 %v2817
        %2868 = vmatpush.bf16.msra.mxu0 %v2815
        %2869 = vmatpush.bf16.msra.mxu0 %v2813
        %2870 = vmatpush.bf16.msra.mxu0 %v2811
        %2871 = vmatpush.bf16.msra.mxu0 %v2809
        %2872 = vmatpush.bf16.msra.mxu0 %v2807
        %2873 = vmatpush.bf16.msra.mxu0 %v2805
        %2874 = vmatpush.bf16.msra.mxu0 %v2803
        %2875 = vmatmul.bf16.gmra.mxu0 %v2665
        %v2876 = vpop.f32.mrf.mxu0
        %v2877 = vadd.f32 %v2703, %v2876
        %v2878 = vpop.f32.mrf.mxu0
        %2879 = vdwg.mxu0
        %2880 = vmatpush.bf16.msra.mxu0 %v2833
        %2881 = vmatpush.bf16.msra.mxu0 %v2831
        %2882 = vmatpush.bf16.msra.mxu0 %v2829
        %2883 = vmatpush.bf16.msra.mxu0 %v2827
        %2884 = vmatpush.bf16.msra.mxu0 %v2825
        %2885 = vmatpush.bf16.msra.mxu0 %v2823
        %2886 = vmatpush.bf16.msra.mxu0 %v2821
        %2887 = vmatpush.bf16.msra.mxu0 %v2819
        %2888 = vmatmul.bf16.gmra.mxu0 %v2666
        %v2889 = vpop.f32.mrf.mxu0
        %v2890 = vadd.f32 %v2877, %v2889
        %v2891 = vpop.f32.mrf.mxu0
        %2892 = vdwg.mxu0
        %2893 = vmatpush.bf16.msra.mxu0 %v2818
        %2894 = vmatpush.bf16.msra.mxu0 %v2816
        %2895 = vmatpush.bf16.msra.mxu0 %v2814
        %2896 = vmatpush.bf16.msra.mxu0 %v2812
        %2897 = vmatpush.bf16.msra.mxu0 %v2810
        %2898 = vmatpush.bf16.msra.mxu0 %v2808
        %2899 = vmatpush.bf16.msra.mxu0 %v2806
        %2900 = vmatpush.bf16.msra.mxu0 %v2804
        %2901 = vmatmul.bf16.gmra.mxu0 %v2665
        %v2902 = vpop.f32.mrf.mxu0
        %v2903 = vadd.f32 %v2704, %v2902
        %v2904 = vpop.f32.mrf.mxu0
        %2905 = vdwg.mxu0
        %2906 = vmatpush.bf16.msra.mxu0 %v2834
        %2907 = vmatpush.bf16.msra.mxu0 %v2832
        %2908 = vmatpush.bf16.msra.mxu0 %v2830
        %2909 = vmatpush.bf16.msra.mxu0 %v2828
        %2910 = vmatpush.bf16.msra.mxu0 %v2826
        %2911 = vmatpush.bf16.msra.mxu0 %v2824
        %2912 = vmatpush.bf16.msra.mxu0 %v2822
        %2913 = vmatpush.bf16.msra.mxu0 %v2820
        %2914 = vmatmul.bf16.gmra.mxu0 %v2666
        %v2915 = vpop.f32.mrf.mxu0
        %v2916 = vadd.f32 %v2903, %v2915
        %v2917 = vpop.f32.mrf.mxu0
        %2918 = vdwg.mxu0
        %v2919 = vmax.f32 %v2890, 0.0
        %v2920 = vmax.f32 %v2916, 0.0
        %v2921 = vpack.c.bf16 %v2919, %v2919
        %v2922 = vpack.c.bf16 %v2920, %v2920
        %s2923 = scalar_lea.vmem %s478, 1024 [#allocation12]
        %v2924 = vld [vmem:[%s2923] sm:$0xff]
        %v2925 = vld [vmem:[%s2923 + $0x8] sm:$0xff]
        %v2926 = vld [vmem:[%s2923 + $0x10] sm:$0xff]
        %v2927 = vld [vmem:[%s2923 + $0x18] sm:$0xff]
        %v2928 = vld [vmem:[%s2923 + $0x20] sm:$0xff]
        %v2929 = vld [vmem:[%s2923 + $0x28] sm:$0xff]
        %v2930 = vld [vmem:[%s2923 + $0x30] sm:$0xff]
        %v2931 = vld [vmem:[%s2923 + $0x38] sm:$0xff]
        %v2932 = vld [vmem:[%s2923 + $0x40] sm:$0xff]
        %v2933 = vld [vmem:[%s2923 + $0x48] sm:$0xff]
        %v2934 = vld [vmem:[%s2923 + $0x50] sm:$0xff]
        %v2935 = vld [vmem:[%s2923 + $0x58] sm:$0xff]
        %v2936 = vld [vmem:[%s2923 + $0x60] sm:$0xff]
        %v2937 = vld [vmem:[%s2923 + $0x68] sm:$0xff]
        %v2938 = vld [vmem:[%s2923 + $0x70] sm:$0xff]
        %v2939 = vld [vmem:[%s2923 + $0x78] sm:$0xff]
        %v2940 = vld [vmem:[%s2923 + $0x80] sm:$0xff]
        %v2941 = vld [vmem:[%s2923 + $0x88] sm:$0xff]
        %v2942 = vld [vmem:[%s2923 + $0x90] sm:$0xff]
        %v2943 = vld [vmem:[%s2923 + $0x98] sm:$0xff]
        %v2944 = vld [vmem:[%s2923 + $0xa0] sm:$0xff]
        %v2945 = vld [vmem:[%s2923 + $0xa8] sm:$0xff]
        %v2946 = vld [vmem:[%s2923 + $0xb0] sm:$0xff]
        %v2947 = vld [vmem:[%s2923 + $0xb8] sm:$0xff]
        %v2948 = vld [vmem:[%s2923 + $0xc0] sm:$0xff]
        %v2949 = vld [vmem:[%s2923 + $0xc8] sm:$0xff]
        %v2950 = vld [vmem:[%s2923 + $0xd0] sm:$0xff]
        %v2951 = vld [vmem:[%s2923 + $0xd8] sm:$0xff]
        %v2952 = vld [vmem:[%s2923 + $0xe0] sm:$0xff]
        %v2953 = vld [vmem:[%s2923 + $0xe8] sm:$0xff]
        %v2954 = vld [vmem:[%s2923 + $0xf0] sm:$0xff]
        %v2955 = vld [vmem:[%s2923 + $0xf8] sm:$0xff]
        %s2956 = scalar_lea.vmem %s488, 8 [#allocation14]
        %v2957 = vld [vmem:[%s2956] sm:$0x3]
        %v2959 = vperm.slane %v2957, 0
        %v2960 = vperm.slane %v2957, 1
        %v2995 = vunpack.c.l.b16 %v2924
        %v2996 = vunpack.c.h.b16 %v2924
        %v2997 = vunpack.c.l.b16 %v2925
        %v2998 = vunpack.c.h.b16 %v2925
        %v2999 = vunpack.c.l.b16 %v2926
        %v3000 = vunpack.c.h.b16 %v2926
        %v3001 = vunpack.c.l.b16 %v2927
        %v3002 = vunpack.c.h.b16 %v2927
        %v3003 = vunpack.c.l.b16 %v2928
        %v3004 = vunpack.c.h.b16 %v2928
        %v3005 = vunpack.c.l.b16 %v2929
        %v3006 = vunpack.c.h.b16 %v2929
        %v3007 = vunpack.c.l.b16 %v2930
        %v3008 = vunpack.c.h.b16 %v2930
        %v3009 = vunpack.c.l.b16 %v2931
        %v3010 = vunpack.c.h.b16 %v2931
        %v3011 = vunpack.c.l.b16 %v2932
        %v3012 = vunpack.c.h.b16 %v2932
        %v3013 = vunpack.c.l.b16 %v2933
        %v3014 = vunpack.c.h.b16 %v2933
        %v3015 = vunpack.c.l.b16 %v2934
        %v3016 = vunpack.c.h.b16 %v2934
        %v3017 = vunpack.c.l.b16 %v2935
        %v3018 = vunpack.c.h.b16 %v2935
        %v3019 = vunpack.c.l.b16 %v2936
        %v3020 = vunpack.c.h.b16 %v2936
        %v3021 = vunpack.c.l.b16 %v2937
        %v3022 = vunpack.c.h.b16 %v2937
        %v3023 = vunpack.c.l.b16 %v2938
        %v3024 = vunpack.c.h.b16 %v2938
        %v3025 = vunpack.c.l.b16 %v2939
        %v3026 = vunpack.c.h.b16 %v2939
        %v3027 = vunpack.c.l.b16 %v2940
        %v3028 = vunpack.c.h.b16 %v2940
        %v3029 = vunpack.c.l.b16 %v2941
        %v3030 = vunpack.c.h.b16 %v2941
        %v3031 = vunpack.c.l.b16 %v2942
        %v3032 = vunpack.c.h.b16 %v2942
        %v3033 = vunpack.c.l.b16 %v2943
        %v3034 = vunpack.c.h.b16 %v2943
        %v3035 = vunpack.c.l.b16 %v2944
        %v3036 = vunpack.c.h.b16 %v2944
        %v3037 = vunpack.c.l.b16 %v2945
        %v3038 = vunpack.c.h.b16 %v2945
        %v3039 = vunpack.c.l.b16 %v2946
        %v3040 = vunpack.c.h.b16 %v2946
        %v3041 = vunpack.c.l.b16 %v2947
        %v3042 = vunpack.c.h.b16 %v2947
        %v3043 = vunpack.c.l.b16 %v2948
        %v3044 = vunpack.c.h.b16 %v2948
        %v3045 = vunpack.c.l.b16 %v2949
        %v3046 = vunpack.c.h.b16 %v2949
        %v3047 = vunpack.c.l.b16 %v2950
        %v3048 = vunpack.c.h.b16 %v2950
        %v3049 = vunpack.c.l.b16 %v2951
        %v3050 = vunpack.c.h.b16 %v2951
        %v3051 = vunpack.c.l.b16 %v2952
        %v3052 = vunpack.c.h.b16 %v2952
        %v3053 = vunpack.c.l.b16 %v2953
        %v3054 = vunpack.c.h.b16 %v2953
        %v3055 = vunpack.c.l.b16 %v2954
        %v3056 = vunpack.c.h.b16 %v2954
        %v3057 = vunpack.c.l.b16 %v2955
        %v3058 = vunpack.c.h.b16 %v2955
        %v3059 = vpack.c.b16 %v2997, %v2995
        %v3060 = vpack.c.b16 %v2998, %v2996
        %v3061 = vpack.c.b16 %v3001, %v2999
        %v3062 = vpack.c.b16 %v3002, %v3000
        %v3063 = vpack.c.b16 %v3005, %v3003
        %v3064 = vpack.c.b16 %v3006, %v3004
        %v3065 = vpack.c.b16 %v3009, %v3007
        %v3066 = vpack.c.b16 %v3010, %v3008
        %v3067 = vpack.c.b16 %v3013, %v3011
        %v3068 = vpack.c.b16 %v3014, %v3012
        %v3069 = vpack.c.b16 %v3017, %v3015
        %v3070 = vpack.c.b16 %v3018, %v3016
        %v3071 = vpack.c.b16 %v3021, %v3019
        %v3072 = vpack.c.b16 %v3022, %v3020
        %v3073 = vpack.c.b16 %v3025, %v3023
        %v3074 = vpack.c.b16 %v3026, %v3024
        %v3075 = vpack.c.b16 %v3029, %v3027
        %v3076 = vpack.c.b16 %v3030, %v3028
        %v3077 = vpack.c.b16 %v3033, %v3031
        %v3078 = vpack.c.b16 %v3034, %v3032
        %v3079 = vpack.c.b16 %v3037, %v3035
        %v3080 = vpack.c.b16 %v3038, %v3036
        %v3081 = vpack.c.b16 %v3041, %v3039
        %v3082 = vpack.c.b16 %v3042, %v3040
        %v3083 = vpack.c.b16 %v3045, %v3043
        %v3084 = vpack.c.b16 %v3046, %v3044
        %v3085 = vpack.c.b16 %v3049, %v3047
        %v3086 = vpack.c.b16 %v3050, %v3048
        %v3087 = vpack.c.b16 %v3053, %v3051
        %v3088 = vpack.c.b16 %v3054, %v3052
        %v3089 = vpack.c.b16 %v3057, %v3055
        %v3090 = vpack.c.b16 %v3058, %v3056
        %3123 = vmatpush.bf16.msra.mxu0 %v3073
        %3124 = vmatpush.bf16.msra.mxu0 %v3071
        %3125 = vmatpush.bf16.msra.mxu0 %v3069
        %3126 = vmatpush.bf16.msra.mxu0 %v3067
        %3127 = vmatpush.bf16.msra.mxu0 %v3065
        %3128 = vmatpush.bf16.msra.mxu0 %v3063
        %3129 = vmatpush.bf16.msra.mxu0 %v3061
        %3130 = vmatpush.bf16.msra.mxu0 %v3059
        %3131 = vmatmul.bf16.gmra.mxu0 %v2921
        %v3132 = vpop.f32.mrf.mxu0
        %v3133 = vadd.f32 %v2959, %v3132
        %v3134 = vpop.f32.mrf.mxu0
        %3135 = vdwg.mxu0
        %3136 = vmatpush.bf16.msra.mxu0 %v3089
        %3137 = vmatpush.bf16.msra.mxu0 %v3087
        %3138 = vmatpush.bf16.msra.mxu0 %v3085
        %3139 = vmatpush.bf16.msra.mxu0 %v3083
        %3140 = vmatpush.bf16.msra.mxu0 %v3081
        %3141 = vmatpush.bf16.msra.mxu0 %v3079
        %3142 = vmatpush.bf16.msra.mxu0 %v3077
        %3143 = vmatpush.bf16.msra.mxu0 %v3075
        %3144 = vmatmul.bf16.gmra.mxu0 %v2922
        %v3145 = vpop.f32.mrf.mxu0
        %v3146 = vadd.f32 %v3133, %v3145
        %v3147 = vpop.f32.mrf.mxu0
        %3148 = vdwg.mxu0
        %3149 = vmatpush.bf16.msra.mxu0 %v3074
        %3150 = vmatpush.bf16.msra.mxu0 %v3072
        %3151 = vmatpush.bf16.msra.mxu0 %v3070
        %3152 = vmatpush.bf16.msra.mxu0 %v3068
        %3153 = vmatpush.bf16.msra.mxu0 %v3066
        %3154 = vmatpush.bf16.msra.mxu0 %v3064
        %3155 = vmatpush.bf16.msra.mxu0 %v3062
        %3156 = vmatpush.bf16.msra.mxu0 %v3060
        %3157 = vmatmul.bf16.gmra.mxu0 %v2921
        %v3158 = vpop.f32.mrf.mxu0
        %v3159 = vadd.f32 %v2960, %v3158
        %v3160 = vpop.f32.mrf.mxu0
        %3161 = vdwg.mxu0
        %3162 = vmatpush.bf16.msra.mxu0 %v3090
        %3163 = vmatpush.bf16.msra.mxu0 %v3088
        %3164 = vmatpush.bf16.msra.mxu0 %v3086
        %3165 = vmatpush.bf16.msra.mxu0 %v3084
        %3166 = vmatpush.bf16.msra.mxu0 %v3082
        %3167 = vmatpush.bf16.msra.mxu0 %v3080
        %3168 = vmatpush.bf16.msra.mxu0 %v3078
        %3169 = vmatpush.bf16.msra.mxu0 %v3076
        %3170 = vmatmul.bf16.gmra.mxu0 %v2922
        %v3171 = vpop.f32.mrf.mxu0
        %v3172 = vadd.f32 %v3159, %v3171
        %v3173 = vpop.f32.mrf.mxu0
        %3174 = vdwg.mxu0
        %v3175 = vadd.f32 %v2661, %v3146
        %v3176 = vadd.f32 %v2662, %v3172
        %v3177 = vmax.f32 %v3175, 0.0
        %v3178 = vmax.f32 %v3176, 0.0
        %v3179 = vpack.c.bf16 %v3177, %v3177
        %v3180 = vpack.c.bf16 %v3178, %v3178
        %s3181 = scalar_lea.vmem %s458, 1280 [#allocation9]
        %v3182 = vld [vmem:[%s3181] sm:$0xff]
        %v3183 = vld [vmem:[%s3181 + $0x8] sm:$0xff]
        %v3184 = vld [vmem:[%s3181 + $0x10] sm:$0xff]
        %v3185 = vld [vmem:[%s3181 + $0x18] sm:$0xff]
        %v3186 = vld [vmem:[%s3181 + $0x20] sm:$0xff]
        %v3187 = vld [vmem:[%s3181 + $0x28] sm:$0xff]
        %v3188 = vld [vmem:[%s3181 + $0x30] sm:$0xff]
        %v3189 = vld [vmem:[%s3181 + $0x38] sm:$0xff]
        %v3190 = vld [vmem:[%s3181 + $0x40] sm:$0xff]
        %v3191 = vld [vmem:[%s3181 + $0x48] sm:$0xff]
        %v3192 = vld [vmem:[%s3181 + $0x50] sm:$0xff]
        %v3193 = vld [vmem:[%s3181 + $0x58] sm:$0xff]
        %v3194 = vld [vmem:[%s3181 + $0x60] sm:$0xff]
        %v3195 = vld [vmem:[%s3181 + $0x68] sm:$0xff]
        %v3196 = vld [vmem:[%s3181 + $0x70] sm:$0xff]
        %v3197 = vld [vmem:[%s3181 + $0x78] sm:$0xff]
        %v3198 = vld [vmem:[%s3181 + $0x80] sm:$0xff]
        %v3199 = vld [vmem:[%s3181 + $0x88] sm:$0xff]
        %v3200 = vld [vmem:[%s3181 + $0x90] sm:$0xff]
        %v3201 = vld [vmem:[%s3181 + $0x98] sm:$0xff]
        %v3202 = vld [vmem:[%s3181 + $0xa0] sm:$0xff]
        %v3203 = vld [vmem:[%s3181 + $0xa8] sm:$0xff]
        %v3204 = vld [vmem:[%s3181 + $0xb0] sm:$0xff]
        %v3205 = vld [vmem:[%s3181 + $0xb8] sm:$0xff]
        %v3206 = vld [vmem:[%s3181 + $0xc0] sm:$0xff]
        %v3207 = vld [vmem:[%s3181 + $0xc8] sm:$0xff]
        %v3208 = vld [vmem:[%s3181 + $0xd0] sm:$0xff]
        %v3209 = vld [vmem:[%s3181 + $0xd8] sm:$0xff]
        %v3210 = vld [vmem:[%s3181 + $0xe0] sm:$0xff]
        %v3211 = vld [vmem:[%s3181 + $0xe8] sm:$0xff]
        %v3212 = vld [vmem:[%s3181 + $0xf0] sm:$0xff]
        %v3213 = vld [vmem:[%s3181 + $0xf8] sm:$0xff]
        %s3214 = scalar_lea.vmem %s468, 10 [#allocation11]
        %v3215 = vld [vmem:[%s3214] sm:$0x3]
        %v3217 = vperm.slane %v3215, 0
        %v3218 = vperm.slane %v3215, 1
        %v3253 = vunpack.c.l.b16 %v3182
        %v3254 = vunpack.c.h.b16 %v3182
        %v3255 = vunpack.c.l.b16 %v3183
        %v3256 = vunpack.c.h.b16 %v3183
        %v3257 = vunpack.c.l.b16 %v3184
        %v3258 = vunpack.c.h.b16 %v3184
        %v3259 = vunpack.c.l.b16 %v3185
        %v3260 = vunpack.c.h.b16 %v3185
        %v3261 = vunpack.c.l.b16 %v3186
        %v3262 = vunpack.c.h.b16 %v3186
        %v3263 = vunpack.c.l.b16 %v3187
        %v3264 = vunpack.c.h.b16 %v3187
        %v3265 = vunpack.c.l.b16 %v3188
        %v3266 = vunpack.c.h.b16 %v3188
        %v3267 = vunpack.c.l.b16 %v3189
        %v3268 = vunpack.c.h.b16 %v3189
        %v3269 = vunpack.c.l.b16 %v3190
        %v3270 = vunpack.c.h.b16 %v3190
        %v3271 = vunpack.c.l.b16 %v3191
        %v3272 = vunpack.c.h.b16 %v3191
        %v3273 = vunpack.c.l.b16 %v3192
        %v3274 = vunpack.c.h.b16 %v3192
        %v3275 = vunpack.c.l.b16 %v3193
        %v3276 = vunpack.c.h.b16 %v3193
        %v3277 = vunpack.c.l.b16 %v3194
        %v3278 = vunpack.c.h.b16 %v3194
        %v3279 = vunpack.c.l.b16 %v3195
        %v3280 = vunpack.c.h.b16 %v3195
        %v3281 = vunpack.c.l.b16 %v3196
        %v3282 = vunpack.c.h.b16 %v3196
        %v3283 = vunpack.c.l.b16 %v3197
        %v3284 = vunpack.c.h.b16 %v3197
        %v3285 = vunpack.c.l.b16 %v3198
        %v3286 = vunpack.c.h.b16 %v3198
        %v3287 = vunpack.c.l.b16 %v3199
        %v3288 = vunpack.c.h.b16 %v3199
        %v3289 = vunpack.c.l.b16 %v3200
        %v3290 = vunpack.c.h.b16 %v3200
        %v3291 = vunpack.c.l.b16 %v3201
        %v3292 = vunpack.c.h.b16 %v3201
        %v3293 = vunpack.c.l.b16 %v3202
        %v3294 = vunpack.c.h.b16 %v3202
        %v3295 = vunpack.c.l.b16 %v3203
        %v3296 = vunpack.c.h.b16 %v3203
        %v3297 = vunpack.c.l.b16 %v3204
        %v3298 = vunpack.c.h.b16 %v3204
        %v3299 = vunpack.c.l.b16 %v3205
        %v3300 = vunpack.c.h.b16 %v3205
        %v3301 = vunpack.c.l.b16 %v3206
        %v3302 = vunpack.c.h.b16 %v3206
        %v3303 = vunpack.c.l.b16 %v3207
        %v3304 = vunpack.c.h.b16 %v3207
        %v3305 = vunpack.c.l.b16 %v3208
        %v3306 = vunpack.c.h.b16 %v3208
        %v3307 = vunpack.c.l.b16 %v3209
        %v3308 = vunpack.c.h.b16 %v3209
        %v3309 = vunpack.c.l.b16 %v3210
        %v3310 = vunpack.c.h.b16 %v3210
        %v3311 = vunpack.c.l.b16 %v3211
        %v3312 = vunpack.c.h.b16 %v3211
        %v3313 = vunpack.c.l.b16 %v3212
        %v3314 = vunpack.c.h.b16 %v3212
        %v3315 = vunpack.c.l.b16 %v3213
        %v3316 = vunpack.c.h.b16 %v3213
        %v3317 = vpack.c.b16 %v3255, %v3253
        %v3318 = vpack.c.b16 %v3256, %v3254
        %v3319 = vpack.c.b16 %v3259, %v3257
        %v3320 = vpack.c.b16 %v3260, %v3258
        %v3321 = vpack.c.b16 %v3263, %v3261
        %v3322 = vpack.c.b16 %v3264, %v3262
        %v3323 = vpack.c.b16 %v3267, %v3265
        %v3324 = vpack.c.b16 %v3268, %v3266
        %v3325 = vpack.c.b16 %v3271, %v3269
        %v3326 = vpack.c.b16 %v3272, %v3270
        %v3327 = vpack.c.b16 %v3275, %v3273
        %v3328 = vpack.c.b16 %v3276, %v3274
        %v3329 = vpack.c.b16 %v3279, %v3277
        %v3330 = vpack.c.b16 %v3280, %v3278
        %v3331 = vpack.c.b16 %v3283, %v3281
        %v3332 = vpack.c.b16 %v3284, %v3282
        %v3333 = vpack.c.b16 %v3287, %v3285
        %v3334 = vpack.c.b16 %v3288, %v3286
        %v3335 = vpack.c.b16 %v3291, %v3289
        %v3336 = vpack.c.b16 %v3292, %v3290
        %v3337 = vpack.c.b16 %v3295, %v3293
        %v3338 = vpack.c.b16 %v3296, %v3294
        %v3339 = vpack.c.b16 %v3299, %v3297
        %v3340 = vpack.c.b16 %v3300, %v3298
        %v3341 = vpack.c.b16 %v3303, %v3301
        %v3342 = vpack.c.b16 %v3304, %v3302
        %v3343 = vpack.c.b16 %v3307, %v3305
        %v3344 = vpack.c.b16 %v3308, %v3306
        %v3345 = vpack.c.b16 %v3311, %v3309
        %v3346 = vpack.c.b16 %v3312, %v3310
        %v3347 = vpack.c.b16 %v3315, %v3313
        %v3348 = vpack.c.b16 %v3316, %v3314
        %3381 = vmatpush.bf16.msra.mxu0 %v3331
        %3382 = vmatpush.bf16.msra.mxu0 %v3329
        %3383 = vmatpush.bf16.msra.mxu0 %v3327
        %3384 = vmatpush.bf16.msra.mxu0 %v3325
        %3385 = vmatpush.bf16.msra.mxu0 %v3323
        %3386 = vmatpush.bf16.msra.mxu0 %v3321
        %3387 = vmatpush.bf16.msra.mxu0 %v3319
        %3388 = vmatpush.bf16.msra.mxu0 %v3317
        %3389 = vmatmul.bf16.gmra.mxu0 %v3179
        %v3390 = vpop.f32.mrf.mxu0
        %v3391 = vadd.f32 %v3217, %v3390
        %v3392 = vpop.f32.mrf.mxu0
        %3393 = vdwg.mxu0
        %3394 = vmatpush.bf16.msra.mxu0 %v3347
        %3395 = vmatpush.bf16.msra.mxu0 %v3345
        %3396 = vmatpush.bf16.msra.mxu0 %v3343
        %3397 = vmatpush.bf16.msra.mxu0 %v3341
        %3398 = vmatpush.bf16.msra.mxu0 %v3339
        %3399 = vmatpush.bf16.msra.mxu0 %v3337
        %3400 = vmatpush.bf16.msra.mxu0 %v3335
        %3401 = vmatpush.bf16.msra.mxu0 %v3333
        %3402 = vmatmul.bf16.gmra.mxu0 %v3180
        %v3403 = vpop.f32.mrf.mxu0
        %v3404 = vadd.f32 %v3391, %v3403
        %v3405 = vpop.f32.mrf.mxu0
        %3406 = vdwg.mxu0
        %3407 = vmatpush.bf16.msra.mxu0 %v3332
        %3408 = vmatpush.bf16.msra.mxu0 %v3330
        %3409 = vmatpush.bf16.msra.mxu0 %v3328
        %3410 = vmatpush.bf16.msra.mxu0 %v3326
        %3411 = vmatpush.bf16.msra.mxu0 %v3324
        %3412 = vmatpush.bf16.msra.mxu0 %v3322
        %3413 = vmatpush.bf16.msra.mxu0 %v3320
        %3414 = vmatpush.bf16.msra.mxu0 %v3318
        %3415 = vmatmul.bf16.gmra.mxu0 %v3179
        %v3416 = vpop.f32.mrf.mxu0
        %v3417 = vadd.f32 %v3218, %v3416
        %v3418 = vpop.f32.mrf.mxu0
        %3419 = vdwg.mxu0
        %3420 = vmatpush.bf16.msra.mxu0 %v3348
        %3421 = vmatpush.bf16.msra.mxu0 %v3346
        %3422 = vmatpush.bf16.msra.mxu0 %v3344
        %3423 = vmatpush.bf16.msra.mxu0 %v3342
        %3424 = vmatpush.bf16.msra.mxu0 %v3340
        %3425 = vmatpush.bf16.msra.mxu0 %v3338
        %3426 = vmatpush.bf16.msra.mxu0 %v3336
        %3427 = vmatpush.bf16.msra.mxu0 %v3334
        %3428 = vmatmul.bf16.gmra.mxu0 %v3180
        %v3429 = vpop.f32.mrf.mxu0
        %v3430 = vadd.f32 %v3417, %v3429
        %v3431 = vpop.f32.mrf.mxu0
        %3432 = vdwg.mxu0
        %v3433 = vmax.f32 %v3404, 0.0
        %v3434 = vmax.f32 %v3430, 0.0
        %v3435 = vpack.c.bf16 %v3433, %v3433
        %v3436 = vpack.c.bf16 %v3434, %v3434
        %s3437 = scalar_lea.vmem %s478, 1280 [#allocation12]
        %v3438 = vld [vmem:[%s3437] sm:$0xff]
        %v3439 = vld [vmem:[%s3437 + $0x8] sm:$0xff]
        %v3440 = vld [vmem:[%s3437 + $0x10] sm:$0xff]
        %v3441 = vld [vmem:[%s3437 + $0x18] sm:$0xff]
        %v3442 = vld [vmem:[%s3437 + $0x20] sm:$0xff]
        %v3443 = vld [vmem:[%s3437 + $0x28] sm:$0xff]
        %v3444 = vld [vmem:[%s3437 + $0x30] sm:$0xff]
        %v3445 = vld [vmem:[%s3437 + $0x38] sm:$0xff]
        %v3446 = vld [vmem:[%s3437 + $0x40] sm:$0xff]
        %v3447 = vld [vmem:[%s3437 + $0x48] sm:$0xff]
        %v3448 = vld [vmem:[%s3437 + $0x50] sm:$0xff]
        %v3449 = vld [vmem:[%s3437 + $0x58] sm:$0xff]
        %v3450 = vld [vmem:[%s3437 + $0x60] sm:$0xff]
        %v3451 = vld [vmem:[%s3437 + $0x68] sm:$0xff]
        %v3452 = vld [vmem:[%s3437 + $0x70] sm:$0xff]
        %v3453 = vld [vmem:[%s3437 + $0x78] sm:$0xff]
        %v3454 = vld [vmem:[%s3437 + $0x80] sm:$0xff]
        %v3455 = vld [vmem:[%s3437 + $0x88] sm:$0xff]
        %v3456 = vld [vmem:[%s3437 + $0x90] sm:$0xff]
        %v3457 = vld [vmem:[%s3437 + $0x98] sm:$0xff]
        %v3458 = vld [vmem:[%s3437 + $0xa0] sm:$0xff]
        %v3459 = vld [vmem:[%s3437 + $0xa8] sm:$0xff]
        %v3460 = vld [vmem:[%s3437 + $0xb0] sm:$0xff]
        %v3461 = vld [vmem:[%s3437 + $0xb8] sm:$0xff]
        %v3462 = vld [vmem:[%s3437 + $0xc0] sm:$0xff]
        %v3463 = vld [vmem:[%s3437 + $0xc8] sm:$0xff]
        %v3464 = vld [vmem:[%s3437 + $0xd0] sm:$0xff]
        %v3465 = vld [vmem:[%s3437 + $0xd8] sm:$0xff]
        %v3466 = vld [vmem:[%s3437 + $0xe0] sm:$0xff]
        %v3467 = vld [vmem:[%s3437 + $0xe8] sm:$0xff]
        %v3468 = vld [vmem:[%s3437 + $0xf0] sm:$0xff]
        %v3469 = vld [vmem:[%s3437 + $0xf8] sm:$0xff]
        %s3470 = scalar_lea.vmem %s488, 10 [#allocation14]
        %v3471 = vld [vmem:[%s3470] sm:$0x3]
        %v3473 = vperm.slane %v3471, 0
        %v3474 = vperm.slane %v3471, 1
        %v3509 = vunpack.c.l.b16 %v3438
        %v3510 = vunpack.c.h.b16 %v3438
        %v3511 = vunpack.c.l.b16 %v3439
        %v3512 = vunpack.c.h.b16 %v3439
        %v3513 = vunpack.c.l.b16 %v3440
        %v3514 = vunpack.c.h.b16 %v3440
        %v3515 = vunpack.c.l.b16 %v3441
        %v3516 = vunpack.c.h.b16 %v3441
        %v3517 = vunpack.c.l.b16 %v3442
        %v3518 = vunpack.c.h.b16 %v3442
        %v3519 = vunpack.c.l.b16 %v3443
        %v3520 = vunpack.c.h.b16 %v3443
        %v3521 = vunpack.c.l.b16 %v3444
        %v3522 = vunpack.c.h.b16 %v3444
        %v3523 = vunpack.c.l.b16 %v3445
        %v3524 = vunpack.c.h.b16 %v3445
        %v3525 = vunpack.c.l.b16 %v3446
        %v3526 = vunpack.c.h.b16 %v3446
        %v3527 = vunpack.c.l.b16 %v3447
        %v3528 = vunpack.c.h.b16 %v3447
        %v3529 = vunpack.c.l.b16 %v3448
        %v3530 = vunpack.c.h.b16 %v3448
        %v3531 = vunpack.c.l.b16 %v3449
        %v3532 = vunpack.c.h.b16 %v3449
        %v3533 = vunpack.c.l.b16 %v3450
        %v3534 = vunpack.c.h.b16 %v3450
        %v3535 = vunpack.c.l.b16 %v3451
        %v3536 = vunpack.c.h.b16 %v3451
        %v3537 = vunpack.c.l.b16 %v3452
        %v3538 = vunpack.c.h.b16 %v3452
        %v3539 = vunpack.c.l.b16 %v3453
        %v3540 = vunpack.c.h.b16 %v3453
        %v3541 = vunpack.c.l.b16 %v3454
        %v3542 = vunpack.c.h.b16 %v3454
        %v3543 = vunpack.c.l.b16 %v3455
        %v3544 = vunpack.c.h.b16 %v3455
        %v3545 = vunpack.c.l.b16 %v3456
        %v3546 = vunpack.c.h.b16 %v3456
        %v3547 = vunpack.c.l.b16 %v3457
        %v3548 = vunpack.c.h.b16 %v3457
        %v3549 = vunpack.c.l.b16 %v3458
        %v3550 = vunpack.c.h.b16 %v3458
        %v3551 = vunpack.c.l.b16 %v3459
        %v3552 = vunpack.c.h.b16 %v3459
        %v3553 = vunpack.c.l.b16 %v3460
        %v3554 = vunpack.c.h.b16 %v3460
        %v3555 = vunpack.c.l.b16 %v3461
        %v3556 = vunpack.c.h.b16 %v3461
        %v3557 = vunpack.c.l.b16 %v3462
        %v3558 = vunpack.c.h.b16 %v3462
        %v3559 = vunpack.c.l.b16 %v3463
        %v3560 = vunpack.c.h.b16 %v3463
        %v3561 = vunpack.c.l.b16 %v3464
        %v3562 = vunpack.c.h.b16 %v3464
        %v3563 = vunpack.c.l.b16 %v3465
        %v3564 = vunpack.c.h.b16 %v3465
        %v3565 = vunpack.c.l.b16 %v3466
        %v3566 = vunpack.c.h.b16 %v3466
        %v3567 = vunpack.c.l.b16 %v3467
        %v3568 = vunpack.c.h.b16 %v3467
        %v3569 = vunpack.c.l.b16 %v3468
        %v3570 = vunpack.c.h.b16 %v3468
        %v3571 = vunpack.c.l.b16 %v3469
        %v3572 = vunpack.c.h.b16 %v3469
        %v3573 = vpack.c.b16 %v3511, %v3509
        %v3574 = vpack.c.b16 %v3512, %v3510
        %v3575 = vpack.c.b16 %v3515, %v3513
        %v3576 = vpack.c.b16 %v3516, %v3514
        %v3577 = vpack.c.b16 %v3519, %v3517
        %v3578 = vpack.c.b16 %v3520, %v3518
        %v3579 = vpack.c.b16 %v3523, %v3521
        %v3580 = vpack.c.b16 %v3524, %v3522
        %v3581 = vpack.c.b16 %v3527, %v3525
        %v3582 = vpack.c.b16 %v3528, %v3526
        %v3583 = vpack.c.b16 %v3531, %v3529
        %v3584 = vpack.c.b16 %v3532, %v3530
        %v3585 = vpack.c.b16 %v3535, %v3533
        %v3586 = vpack.c.b16 %v3536, %v3534
        %v3587 = vpack.c.b16 %v3539, %v3537
        %v3588 = vpack.c.b16 %v3540, %v3538
        %v3589 = vpack.c.b16 %v3543, %v3541
        %v3590 = vpack.c.b16 %v3544, %v3542
        %v3591 = vpack.c.b16 %v3547, %v3545
        %v3592 = vpack.c.b16 %v3548, %v3546
        %v3593 = vpack.c.b16 %v3551, %v3549
        %v3594 = vpack.c.b16 %v3552, %v3550
        %v3595 = vpack.c.b16 %v3555, %v3553
        %v3596 = vpack.c.b16 %v3556, %v3554
        %v3597 = vpack.c.b16 %v3559, %v3557
        %v3598 = vpack.c.b16 %v3560, %v3558
        %v3599 = vpack.c.b16 %v3563, %v3561
        %v3600 = vpack.c.b16 %v3564, %v3562
        %v3601 = vpack.c.b16 %v3567, %v3565
        %v3602 = vpack.c.b16 %v3568, %v3566
        %v3603 = vpack.c.b16 %v3571, %v3569
        %v3604 = vpack.c.b16 %v3572, %v3570
        %3637 = vmatpush.bf16.msra.mxu0 %v3587
        %3638 = vmatpush.bf16.msra.mxu0 %v3585
        %3639 = vmatpush.bf16.msra.mxu0 %v3583
        %3640 = vmatpush.bf16.msra.mxu0 %v3581
        %3641 = vmatpush.bf16.msra.mxu0 %v3579
        %3642 = vmatpush.bf16.msra.mxu0 %v3577
        %3643 = vmatpush.bf16.msra.mxu0 %v3575
        %3644 = vmatpush.bf16.msra.mxu0 %v3573
        %3645 = vmatmul.bf16.gmra.mxu0 %v3435
        %v3646 = vpop.f32.mrf.mxu0
        %v3647 = vadd.f32 %v3473, %v3646
        %v3648 = vpop.f32.mrf.mxu0
        %3649 = vdwg.mxu0
        %3650 = vmatpush.bf16.msra.mxu0 %v3603
        %3651 = vmatpush.bf16.msra.mxu0 %v3601
        %3652 = vmatpush.bf16.msra.mxu0 %v3599
        %3653 = vmatpush.bf16.msra.mxu0 %v3597
        %3654 = vmatpush.bf16.msra.mxu0 %v3595
        %3655 = vmatpush.bf16.msra.mxu0 %v3593
        %3656 = vmatpush.bf16.msra.mxu0 %v3591
        %3657 = vmatpush.bf16.msra.mxu0 %v3589
        %3658 = vmatmul.bf16.gmra.mxu0 %v3436
        %v3659 = vpop.f32.mrf.mxu0
        %v3660 = vadd.f32 %v3647, %v3659
        %v3661 = vpop.f32.mrf.mxu0
        %3662 = vdwg.mxu0
        %3663 = vmatpush.bf16.msra.mxu0 %v3588
        %3664 = vmatpush.bf16.msra.mxu0 %v3586
        %3665 = vmatpush.bf16.msra.mxu0 %v3584
        %3666 = vmatpush.bf16.msra.mxu0 %v3582
        %3667 = vmatpush.bf16.msra.mxu0 %v3580
        %3668 = vmatpush.bf16.msra.mxu0 %v3578
        %3669 = vmatpush.bf16.msra.mxu0 %v3576
        %3670 = vmatpush.bf16.msra.mxu0 %v3574
        %3671 = vmatmul.bf16.gmra.mxu0 %v3435
        %v3672 = vpop.f32.mrf.mxu0
        %v3673 = vadd.f32 %v3474, %v3672
        %v3674 = vpop.f32.mrf.mxu0
        %3675 = vdwg.mxu0
        %3676 = vmatpush.bf16.msra.mxu0 %v3604
        %3677 = vmatpush.bf16.msra.mxu0 %v3602
        %3678 = vmatpush.bf16.msra.mxu0 %v3600
        %3679 = vmatpush.bf16.msra.mxu0 %v3598
        %3680 = vmatpush.bf16.msra.mxu0 %v3596
        %3681 = vmatpush.bf16.msra.mxu0 %v3594
        %3682 = vmatpush.bf16.msra.mxu0 %v3592
        %3683 = vmatpush.bf16.msra.mxu0 %v3590
        %3684 = vmatmul.bf16.gmra.mxu0 %v3436
        %v3685 = vpop.f32.mrf.mxu0
        %v3686 = vadd.f32 %v3673, %v3685
        %v3687 = vpop.f32.mrf.mxu0
        %3688 = vdwg.mxu0
        %v3689 = vadd.f32 %v3175, %v3660
        %v3690 = vadd.f32 %v3176, %v3686
        %v3691 = vmax.f32 %v3689, 0.0
        %v3692 = vmax.f32 %v3690, 0.0
        %v3693 = vpack.c.bf16 %v3691, %v3691
        %v3694 = vpack.c.bf16 %v3692, %v3692
        %s3695 = scalar_lea.vmem %s458, 1536 [#allocation9]
        %v3696 = vld [vmem:[%s3695] sm:$0xff]
        %v3697 = vld [vmem:[%s3695 + $0x8] sm:$0xff]
        %v3698 = vld [vmem:[%s3695 + $0x10] sm:$0xff]
        %v3699 = vld [vmem:[%s3695 + $0x18] sm:$0xff]
        %v3700 = vld [vmem:[%s3695 + $0x20] sm:$0xff]
        %v3701 = vld [vmem:[%s3695 + $0x28] sm:$0xff]
        %v3702 = vld [vmem:[%s3695 + $0x30] sm:$0xff]
        %v3703 = vld [vmem:[%s3695 + $0x38] sm:$0xff]
        %v3704 = vld [vmem:[%s3695 + $0x40] sm:$0xff]
        %v3705 = vld [vmem:[%s3695 + $0x48] sm:$0xff]
        %v3706 = vld [vmem:[%s3695 + $0x50] sm:$0xff]
        %v3707 = vld [vmem:[%s3695 + $0x58] sm:$0xff]
        %v3708 = vld [vmem:[%s3695 + $0x60] sm:$0xff]
        %v3709 = vld [vmem:[%s3695 + $0x68] sm:$0xff]
        %v3710 = vld [vmem:[%s3695 + $0x70] sm:$0xff]
        %v3711 = vld [vmem:[%s3695 + $0x78] sm:$0xff]
        %v3712 = vld [vmem:[%s3695 + $0x80] sm:$0xff]
        %v3713 = vld [vmem:[%s3695 + $0x88] sm:$0xff]
        %v3714 = vld [vmem:[%s3695 + $0x90] sm:$0xff]
        %v3715 = vld [vmem:[%s3695 + $0x98] sm:$0xff]
        %v3716 = vld [vmem:[%s3695 + $0xa0] sm:$0xff]
        %v3717 = vld [vmem:[%s3695 + $0xa8] sm:$0xff]
        %v3718 = vld [vmem:[%s3695 + $0xb0] sm:$0xff]
        %v3719 = vld [vmem:[%s3695 + $0xb8] sm:$0xff]
        %v3720 = vld [vmem:[%s3695 + $0xc0] sm:$0xff]
        %v3721 = vld [vmem:[%s3695 + $0xc8] sm:$0xff]
        %v3722 = vld [vmem:[%s3695 + $0xd0] sm:$0xff]
        %v3723 = vld [vmem:[%s3695 + $0xd8] sm:$0xff]
        %v3724 = vld [vmem:[%s3695 + $0xe0] sm:$0xff]
        %v3725 = vld [vmem:[%s3695 + $0xe8] sm:$0xff]
        %v3726 = vld [vmem:[%s3695 + $0xf0] sm:$0xff]
        %v3727 = vld [vmem:[%s3695 + $0xf8] sm:$0xff]
        %s3728 = scalar_lea.vmem %s468, 12 [#allocation11]
        %v3729 = vld [vmem:[%s3728] sm:$0x3]
        %v3731 = vperm.slane %v3729, 0
        %v3732 = vperm.slane %v3729, 1
        %v3767 = vunpack.c.l.b16 %v3696
        %v3768 = vunpack.c.h.b16 %v3696
        %v3769 = vunpack.c.l.b16 %v3697
        %v3770 = vunpack.c.h.b16 %v3697
        %v3771 = vunpack.c.l.b16 %v3698
        %v3772 = vunpack.c.h.b16 %v3698
        %v3773 = vunpack.c.l.b16 %v3699
        %v3774 = vunpack.c.h.b16 %v3699
        %v3775 = vunpack.c.l.b16 %v3700
        %v3776 = vunpack.c.h.b16 %v3700
        %v3777 = vunpack.c.l.b16 %v3701
        %v3778 = vunpack.c.h.b16 %v3701
        %v3779 = vunpack.c.l.b16 %v3702
        %v3780 = vunpack.c.h.b16 %v3702
        %v3781 = vunpack.c.l.b16 %v3703
        %v3782 = vunpack.c.h.b16 %v3703
        %v3783 = vunpack.c.l.b16 %v3704
        %v3784 = vunpack.c.h.b16 %v3704
        %v3785 = vunpack.c.l.b16 %v3705
        %v3786 = vunpack.c.h.b16 %v3705
        %v3787 = vunpack.c.l.b16 %v3706
        %v3788 = vunpack.c.h.b16 %v3706
        %v3789 = vunpack.c.l.b16 %v3707
        %v3790 = vunpack.c.h.b16 %v3707
        %v3791 = vunpack.c.l.b16 %v3708
        %v3792 = vunpack.c.h.b16 %v3708
        %v3793 = vunpack.c.l.b16 %v3709
        %v3794 = vunpack.c.h.b16 %v3709
        %v3795 = vunpack.c.l.b16 %v3710
        %v3796 = vunpack.c.h.b16 %v3710
        %v3797 = vunpack.c.l.b16 %v3711
        %v3798 = vunpack.c.h.b16 %v3711
        %v3799 = vunpack.c.l.b16 %v3712
        %v3800 = vunpack.c.h.b16 %v3712
        %v3801 = vunpack.c.l.b16 %v3713
        %v3802 = vunpack.c.h.b16 %v3713
        %v3803 = vunpack.c.l.b16 %v3714
        %v3804 = vunpack.c.h.b16 %v3714
        %v3805 = vunpack.c.l.b16 %v3715
        %v3806 = vunpack.c.h.b16 %v3715
        %v3807 = vunpack.c.l.b16 %v3716
        %v3808 = vunpack.c.h.b16 %v3716
        %v3809 = vunpack.c.l.b16 %v3717
        %v3810 = vunpack.c.h.b16 %v3717
        %v3811 = vunpack.c.l.b16 %v3718
        %v3812 = vunpack.c.h.b16 %v3718
        %v3813 = vunpack.c.l.b16 %v3719
        %v3814 = vunpack.c.h.b16 %v3719
        %v3815 = vunpack.c.l.b16 %v3720
        %v3816 = vunpack.c.h.b16 %v3720
        %v3817 = vunpack.c.l.b16 %v3721
        %v3818 = vunpack.c.h.b16 %v3721
        %v3819 = vunpack.c.l.b16 %v3722
        %v3820 = vunpack.c.h.b16 %v3722
        %v3821 = vunpack.c.l.b16 %v3723
        %v3822 = vunpack.c.h.b16 %v3723
        %v3823 = vunpack.c.l.b16 %v3724
        %v3824 = vunpack.c.h.b16 %v3724
        %v3825 = vunpack.c.l.b16 %v3725
        %v3826 = vunpack.c.h.b16 %v3725
        %v3827 = vunpack.c.l.b16 %v3726
        %v3828 = vunpack.c.h.b16 %v3726
        %v3829 = vunpack.c.l.b16 %v3727
        %v3830 = vunpack.c.h.b16 %v3727
        %v3831 = vpack.c.b16 %v3769, %v3767
        %v3832 = vpack.c.b16 %v3770, %v3768
        %v3833 = vpack.c.b16 %v3773, %v3771
        %v3834 = vpack.c.b16 %v3774, %v3772
        %v3835 = vpack.c.b16 %v3777, %v3775
        %v3836 = vpack.c.b16 %v3778, %v3776
        %v3837 = vpack.c.b16 %v3781, %v3779
        %v3838 = vpack.c.b16 %v3782, %v3780
        %v3839 = vpack.c.b16 %v3785, %v3783
        %v3840 = vpack.c.b16 %v3786, %v3784
        %v3841 = vpack.c.b16 %v3789, %v3787
        %v3842 = vpack.c.b16 %v3790, %v3788
        %v3843 = vpack.c.b16 %v3793, %v3791
        %v3844 = vpack.c.b16 %v3794, %v3792
        %v3845 = vpack.c.b16 %v3797, %v3795
        %v3846 = vpack.c.b16 %v3798, %v3796
        %v3847 = vpack.c.b16 %v3801, %v3799
        %v3848 = vpack.c.b16 %v3802, %v3800
        %v3849 = vpack.c.b16 %v3805, %v3803
        %v3850 = vpack.c.b16 %v3806, %v3804
        %v3851 = vpack.c.b16 %v3809, %v3807
        %v3852 = vpack.c.b16 %v3810, %v3808
        %v3853 = vpack.c.b16 %v3813, %v3811
        %v3854 = vpack.c.b16 %v3814, %v3812
        %v3855 = vpack.c.b16 %v3817, %v3815
        %v3856 = vpack.c.b16 %v3818, %v3816
        %v3857 = vpack.c.b16 %v3821, %v3819
        %v3858 = vpack.c.b16 %v3822, %v3820
        %v3859 = vpack.c.b16 %v3825, %v3823
        %v3860 = vpack.c.b16 %v3826, %v3824
        %v3861 = vpack.c.b16 %v3829, %v3827
        %v3862 = vpack.c.b16 %v3830, %v3828
        %3895 = vmatpush.bf16.msra.mxu0 %v3845
        %3896 = vmatpush.bf16.msra.mxu0 %v3843
        %3897 = vmatpush.bf16.msra.mxu0 %v3841
        %3898 = vmatpush.bf16.msra.mxu0 %v3839
        %3899 = vmatpush.bf16.msra.mxu0 %v3837
        %3900 = vmatpush.bf16.msra.mxu0 %v3835
        %3901 = vmatpush.bf16.msra.mxu0 %v3833
        %3902 = vmatpush.bf16.msra.mxu0 %v3831
        %3903 = vmatmul.bf16.gmra.mxu0 %v3693
        %v3904 = vpop.f32.mrf.mxu0
        %v3905 = vadd.f32 %v3731, %v3904
        %v3906 = vpop.f32.mrf.mxu0
        %3907 = vdwg.mxu0
        %3908 = vmatpush.bf16.msra.mxu0 %v3861
        %3909 = vmatpush.bf16.msra.mxu0 %v3859
        %3910 = vmatpush.bf16.msra.mxu0 %v3857
        %3911 = vmatpush.bf16.msra.mxu0 %v3855
        %3912 = vmatpush.bf16.msra.mxu0 %v3853
        %3913 = vmatpush.bf16.msra.mxu0 %v3851
        %3914 = vmatpush.bf16.msra.mxu0 %v3849
        %3915 = vmatpush.bf16.msra.mxu0 %v3847
        %3916 = vmatmul.bf16.gmra.mxu0 %v3694
        %v3917 = vpop.f32.mrf.mxu0
        %v3918 = vadd.f32 %v3905, %v3917
        %v3919 = vpop.f32.mrf.mxu0
        %3920 = vdwg.mxu0
        %3921 = vmatpush.bf16.msra.mxu0 %v3846
        %3922 = vmatpush.bf16.msra.mxu0 %v3844
        %3923 = vmatpush.bf16.msra.mxu0 %v3842
        %3924 = vmatpush.bf16.msra.mxu0 %v3840
        %3925 = vmatpush.bf16.msra.mxu0 %v3838
        %3926 = vmatpush.bf16.msra.mxu0 %v3836
        %3927 = vmatpush.bf16.msra.mxu0 %v3834
        %3928 = vmatpush.bf16.msra.mxu0 %v3832
        %3929 = vmatmul.bf16.gmra.mxu0 %v3693
        %v3930 = vpop.f32.mrf.mxu0
        %v3931 = vadd.f32 %v3732, %v3930
        %v3932 = vpop.f32.mrf.mxu0
        %3933 = vdwg.mxu0
        %3934 = vmatpush.bf16.msra.mxu0 %v3862
        %3935 = vmatpush.bf16.msra.mxu0 %v3860
        %3936 = vmatpush.bf16.msra.mxu0 %v3858
        %3937 = vmatpush.bf16.msra.mxu0 %v3856
        %3938 = vmatpush.bf16.msra.mxu0 %v3854
        %3939 = vmatpush.bf16.msra.mxu0 %v3852
        %3940 = vmatpush.bf16.msra.mxu0 %v3850
        %3941 = vmatpush.bf16.msra.mxu0 %v3848
        %3942 = vmatmul.bf16.gmra.mxu0 %v3694
        %v3943 = vpop.f32.mrf.mxu0
        %v3944 = vadd.f32 %v3931, %v3943
        %v3945 = vpop.f32.mrf.mxu0
        %3946 = vdwg.mxu0
        %v3947 = vmax.f32 %v3918, 0.0
        %v3948 = vmax.f32 %v3944, 0.0
        %v3949 = vpack.c.bf16 %v3947, %v3947
        %v3950 = vpack.c.bf16 %v3948, %v3948
        %s3951 = scalar_lea.vmem %s478, 1536 [#allocation12]
        %v3952 = vld [vmem:[%s3951] sm:$0xff]
        %v3953 = vld [vmem:[%s3951 + $0x8] sm:$0xff]
        %v3954 = vld [vmem:[%s3951 + $0x10] sm:$0xff]
        %v3955 = vld [vmem:[%s3951 + $0x18] sm:$0xff]
        %v3956 = vld [vmem:[%s3951 + $0x20] sm:$0xff]
        %v3957 = vld [vmem:[%s3951 + $0x28] sm:$0xff]
        %v3958 = vld [vmem:[%s3951 + $0x30] sm:$0xff]
        %v3959 = vld [vmem:[%s3951 + $0x38] sm:$0xff]
        %v3960 = vld [vmem:[%s3951 + $0x40] sm:$0xff]
        %v3961 = vld [vmem:[%s3951 + $0x48] sm:$0xff]
        %v3962 = vld [vmem:[%s3951 + $0x50] sm:$0xff]
        %v3963 = vld [vmem:[%s3951 + $0x58] sm:$0xff]
        %v3964 = vld [vmem:[%s3951 + $0x60] sm:$0xff]
        %v3965 = vld [vmem:[%s3951 + $0x68] sm:$0xff]
        %v3966 = vld [vmem:[%s3951 + $0x70] sm:$0xff]
        %v3967 = vld [vmem:[%s3951 + $0x78] sm:$0xff]
        %v3968 = vld [vmem:[%s3951 + $0x80] sm:$0xff]
        %v3969 = vld [vmem:[%s3951 + $0x88] sm:$0xff]
        %v3970 = vld [vmem:[%s3951 + $0x90] sm:$0xff]
        %v3971 = vld [vmem:[%s3951 + $0x98] sm:$0xff]
        %v3972 = vld [vmem:[%s3951 + $0xa0] sm:$0xff]
        %v3973 = vld [vmem:[%s3951 + $0xa8] sm:$0xff]
        %v3974 = vld [vmem:[%s3951 + $0xb0] sm:$0xff]
        %v3975 = vld [vmem:[%s3951 + $0xb8] sm:$0xff]
        %v3976 = vld [vmem:[%s3951 + $0xc0] sm:$0xff]
        %v3977 = vld [vmem:[%s3951 + $0xc8] sm:$0xff]
        %v3978 = vld [vmem:[%s3951 + $0xd0] sm:$0xff]
        %v3979 = vld [vmem:[%s3951 + $0xd8] sm:$0xff]
        %v3980 = vld [vmem:[%s3951 + $0xe0] sm:$0xff]
        %v3981 = vld [vmem:[%s3951 + $0xe8] sm:$0xff]
        %v3982 = vld [vmem:[%s3951 + $0xf0] sm:$0xff]
        %v3983 = vld [vmem:[%s3951 + $0xf8] sm:$0xff]
        %s3984 = scalar_lea.vmem %s488, 12 [#allocation14]
        %v3985 = vld [vmem:[%s3984] sm:$0x3]
        %v3987 = vperm.slane %v3985, 0
        %v3988 = vperm.slane %v3985, 1
        %v4023 = vunpack.c.l.b16 %v3952
        %v4024 = vunpack.c.h.b16 %v3952
        %v4025 = vunpack.c.l.b16 %v3953
        %v4026 = vunpack.c.h.b16 %v3953
        %v4027 = vunpack.c.l.b16 %v3954
        %v4028 = vunpack.c.h.b16 %v3954
        %v4029 = vunpack.c.l.b16 %v3955
        %v4030 = vunpack.c.h.b16 %v3955
        %v4031 = vunpack.c.l.b16 %v3956
        %v4032 = vunpack.c.h.b16 %v3956
        %v4033 = vunpack.c.l.b16 %v3957
        %v4034 = vunpack.c.h.b16 %v3957
        %v4035 = vunpack.c.l.b16 %v3958
        %v4036 = vunpack.c.h.b16 %v3958
        %v4037 = vunpack.c.l.b16 %v3959
        %v4038 = vunpack.c.h.b16 %v3959
        %v4039 = vunpack.c.l.b16 %v3960
        %v4040 = vunpack.c.h.b16 %v3960
        %v4041 = vunpack.c.l.b16 %v3961
        %v4042 = vunpack.c.h.b16 %v3961
        %v4043 = vunpack.c.l.b16 %v3962
        %v4044 = vunpack.c.h.b16 %v3962
        %v4045 = vunpack.c.l.b16 %v3963
        %v4046 = vunpack.c.h.b16 %v3963
        %v4047 = vunpack.c.l.b16 %v3964
        %v4048 = vunpack.c.h.b16 %v3964
        %v4049 = vunpack.c.l.b16 %v3965
        %v4050 = vunpack.c.h.b16 %v3965
        %v4051 = vunpack.c.l.b16 %v3966
        %v4052 = vunpack.c.h.b16 %v3966
        %v4053 = vunpack.c.l.b16 %v3967
        %v4054 = vunpack.c.h.b16 %v3967
        %v4055 = vunpack.c.l.b16 %v3968
        %v4056 = vunpack.c.h.b16 %v3968
        %v4057 = vunpack.c.l.b16 %v3969
        %v4058 = vunpack.c.h.b16 %v3969
        %v4059 = vunpack.c.l.b16 %v3970
        %v4060 = vunpack.c.h.b16 %v3970
        %v4061 = vunpack.c.l.b16 %v3971
        %v4062 = vunpack.c.h.b16 %v3971
        %v4063 = vunpack.c.l.b16 %v3972
        %v4064 = vunpack.c.h.b16 %v3972
        %v4065 = vunpack.c.l.b16 %v3973
        %v4066 = vunpack.c.h.b16 %v3973
        %v4067 = vunpack.c.l.b16 %v3974
        %v4068 = vunpack.c.h.b16 %v3974
        %v4069 = vunpack.c.l.b16 %v3975
        %v4070 = vunpack.c.h.b16 %v3975
        %v4071 = vunpack.c.l.b16 %v3976
        %v4072 = vunpack.c.h.b16 %v3976
        %v4073 = vunpack.c.l.b16 %v3977
        %v4074 = vunpack.c.h.b16 %v3977
        %v4075 = vunpack.c.l.b16 %v3978
        %v4076 = vunpack.c.h.b16 %v3978
        %v4077 = vunpack.c.l.b16 %v3979
        %v4078 = vunpack.c.h.b16 %v3979
        %v4079 = vunpack.c.l.b16 %v3980
        %v4080 = vunpack.c.h.b16 %v3980
        %v4081 = vunpack.c.l.b16 %v3981
        %v4082 = vunpack.c.h.b16 %v3981
        %v4083 = vunpack.c.l.b16 %v3982
        %v4084 = vunpack.c.h.b16 %v3982
        %v4085 = vunpack.c.l.b16 %v3983
        %v4086 = vunpack.c.h.b16 %v3983
        %v4087 = vpack.c.b16 %v4025, %v4023
        %v4088 = vpack.c.b16 %v4026, %v4024
        %v4089 = vpack.c.b16 %v4029, %v4027
        %v4090 = vpack.c.b16 %v4030, %v4028
        %v4091 = vpack.c.b16 %v4033, %v4031
        %v4092 = vpack.c.b16 %v4034, %v4032
        %v4093 = vpack.c.b16 %v4037, %v4035
        %v4094 = vpack.c.b16 %v4038, %v4036
        %v4095 = vpack.c.b16 %v4041, %v4039
        %v4096 = vpack.c.b16 %v4042, %v4040
        %v4097 = vpack.c.b16 %v4045, %v4043
        %v4098 = vpack.c.b16 %v4046, %v4044
        %v4099 = vpack.c.b16 %v4049, %v4047
        %v4100 = vpack.c.b16 %v4050, %v4048
        %v4101 = vpack.c.b16 %v4053, %v4051
        %v4102 = vpack.c.b16 %v4054, %v4052
        %v4103 = vpack.c.b16 %v4057, %v4055
        %v4104 = vpack.c.b16 %v4058, %v4056
        %v4105 = vpack.c.b16 %v4061, %v4059
        %v4106 = vpack.c.b16 %v4062, %v4060
        %v4107 = vpack.c.b16 %v4065, %v4063
        %v4108 = vpack.c.b16 %v4066, %v4064
        %v4109 = vpack.c.b16 %v4069, %v4067
        %v4110 = vpack.c.b16 %v4070, %v4068
        %v4111 = vpack.c.b16 %v4073, %v4071
        %v4112 = vpack.c.b16 %v4074, %v4072
        %v4113 = vpack.c.b16 %v4077, %v4075
        %v4114 = vpack.c.b16 %v4078, %v4076
        %v4115 = vpack.c.b16 %v4081, %v4079
        %v4116 = vpack.c.b16 %v4082, %v4080
        %v4117 = vpack.c.b16 %v4085, %v4083
        %v4118 = vpack.c.b16 %v4086, %v4084
        %4151 = vmatpush.bf16.msra.mxu0 %v4101
        %4152 = vmatpush.bf16.msra.mxu0 %v4099
        %4153 = vmatpush.bf16.msra.mxu0 %v4097
        %4154 = vmatpush.bf16.msra.mxu0 %v4095
        %4155 = vmatpush.bf16.msra.mxu0 %v4093
        %4156 = vmatpush.bf16.msra.mxu0 %v4091
        %4157 = vmatpush.bf16.msra.mxu0 %v4089
        %4158 = vmatpush.bf16.msra.mxu0 %v4087
        %4159 = vmatmul.bf16.gmra.mxu0 %v3949
        %v4160 = vpop.f32.mrf.mxu0
        %v4161 = vadd.f32 %v3987, %v4160
        %v4162 = vpop.f32.mrf.mxu0
        %4163 = vdwg.mxu0
        %4164 = vmatpush.bf16.msra.mxu0 %v4117
        %4165 = vmatpush.bf16.msra.mxu0 %v4115
        %4166 = vmatpush.bf16.msra.mxu0 %v4113
        %4167 = vmatpush.bf16.msra.mxu0 %v4111
        %4168 = vmatpush.bf16.msra.mxu0 %v4109
        %4169 = vmatpush.bf16.msra.mxu0 %v4107
        %4170 = vmatpush.bf16.msra.mxu0 %v4105
        %4171 = vmatpush.bf16.msra.mxu0 %v4103
        %4172 = vmatmul.bf16.gmra.mxu0 %v3950
        %v4173 = vpop.f32.mrf.mxu0
        %v4174 = vadd.f32 %v4161, %v4173
        %v4175 = vpop.f32.mrf.mxu0
        %4176 = vdwg.mxu0
        %4177 = vmatpush.bf16.msra.mxu0 %v4102
        %4178 = vmatpush.bf16.msra.mxu0 %v4100
        %4179 = vmatpush.bf16.msra.mxu0 %v4098
        %4180 = vmatpush.bf16.msra.mxu0 %v4096
        %4181 = vmatpush.bf16.msra.mxu0 %v4094
        %4182 = vmatpush.bf16.msra.mxu0 %v4092
        %4183 = vmatpush.bf16.msra.mxu0 %v4090
        %4184 = vmatpush.bf16.msra.mxu0 %v4088
        %4185 = vmatmul.bf16.gmra.mxu0 %v3949
        %v4186 = vpop.f32.mrf.mxu0
        %v4187 = vadd.f32 %v3988, %v4186
        %v4188 = vpop.f32.mrf.mxu0
        %4189 = vdwg.mxu0
        %4190 = vmatpush.bf16.msra.mxu0 %v4118
        %4191 = vmatpush.bf16.msra.mxu0 %v4116
        %4192 = vmatpush.bf16.msra.mxu0 %v4114
        %4193 = vmatpush.bf16.msra.mxu0 %v4112
        %4194 = vmatpush.bf16.msra.mxu0 %v4110
        %4195 = vmatpush.bf16.msra.mxu0 %v4108
        %4196 = vmatpush.bf16.msra.mxu0 %v4106
        %4197 = vmatpush.bf16.msra.mxu0 %v4104
        %4198 = vmatmul.bf16.gmra.mxu0 %v3950
        %v4199 = vpop.f32.mrf.mxu0
        %v4200 = vadd.f32 %v4187, %v4199
        %v4201 = vpop.f32.mrf.mxu0
        %4202 = vdwg.mxu0
        %v4203 = vadd.f32 %v3689, %v4174
        %v4204 = vadd.f32 %v3690, %v4200
        %4205 = vst [vmem:[#allocation2] sm:$0xff] %v4203
        %4206 = vst [vmem:[#allocation2 + $0x8] sm:$0xff] %v4204
        %p4207 = scmp.eq.s32.totalorder %s35, 4
        // Predicated region
        $region89: #{tpu_custom_call.1} parent=55 // pred_check
          %p4208 = pneg %p4207
        $region90: #{tpu_custom_call.1} parent=55 // pred_check_branch
          %4210 = sbr.rel (%p4208) target = $region92
        $region91: #{tpu_custom_call.1} parent=55 // pred_region
          %v4211 = vmax.f32 %v4203, 0.0
          %v4212 = vmax.f32 %v4204, 0.0
          %v4213 = vld [vmem:[%s7] sm:$0xff]
          %v4214 = vld [vmem:[%s7 + $0x8] sm:$0xff]
          %v4215 = vld [vmem:[%s7 + $0x10] sm:$0xff]
          %v4216 = vld [vmem:[%s7 + $0x18] sm:$0xff]
          %v4217 = vld [vmem:[%s7 + $0x20] sm:$0xff]
          %v4218 = vld [vmem:[%s7 + $0x28] sm:$0xff]
          %v4219 = vld [vmem:[%s7 + $0x30] sm:$0xff]
          %v4220 = vld [vmem:[%s7 + $0x38] sm:$0xff]
          %v4221 = vld [vmem:[%s7 + $0x40] sm:$0xff]
          %v4222 = vld [vmem:[%s7 + $0x48] sm:$0xff]
          %v4223 = vld [vmem:[%s7 + $0x50] sm:$0xff]
          %v4224 = vld [vmem:[%s7 + $0x58] sm:$0xff]
          %v4225 = vld [vmem:[%s7 + $0x60] sm:$0xff]
          %v4226 = vld [vmem:[%s7 + $0x68] sm:$0xff]
          %v4227 = vld [vmem:[%s7 + $0x70] sm:$0xff]
          %v4228 = vld [vmem:[%s7 + $0x78] sm:$0xff]
          %v4229 = vld [vmem:[%s7 + $0x80] sm:$0xff]
          %v4230 = vld [vmem:[%s7 + $0x88] sm:$0xff]
          %v4231 = vld [vmem:[%s7 + $0x90] sm:$0xff]
          %v4232 = vld [vmem:[%s7 + $0x98] sm:$0xff]
          %v4233 = vld [vmem:[%s7 + $0xa0] sm:$0xff]
          %v4234 = vld [vmem:[%s7 + $0xa8] sm:$0xff]
          %v4235 = vld [vmem:[%s7 + $0xb0] sm:$0xff]
          %v4236 = vld [vmem:[%s7 + $0xb8] sm:$0xff]
          %v4237 = vld [vmem:[%s7 + $0xc0] sm:$0xff]
          %v4238 = vld [vmem:[%s7 + $0xc8] sm:$0xff]
          %v4239 = vld [vmem:[%s7 + $0xd0] sm:$0xff]
          %v4240 = vld [vmem:[%s7 + $0xd8] sm:$0xff]
          %v4241 = vld [vmem:[%s7 + $0xe0] sm:$0xff]
          %v4242 = vld [vmem:[%s7 + $0xe8] sm:$0xff]
          %v4243 = vld [vmem:[%s7 + $0xf0] sm:$0xff]
          %v4244 = vld [vmem:[%s7 + $0xf8] sm:$0xff]
          %v4245 = vld [vmem:[#allocation3] sm:$0x1]
          %v4247 = vperm.slane %v4245, 0
          %4249 = vmatpush.msra.mxu0 %v4228
          %4250 = vmatpush.msra.mxu0 %v4227
          %4251 = vmatpush.msra.mxu0 %v4226
          %4252 = vmatpush.msra.mxu0 %v4225
          %4253 = vmatpush.msra.mxu0 %v4224
          %4254 = vmatpush.msra.mxu0 %v4223
          %4255 = vmatpush.msra.mxu0 %v4222
          %4256 = vmatpush.msra.mxu0 %v4221
          %4257 = vmatpush.msra.mxu0 %v4220
          %4258 = vmatpush.msra.mxu0 %v4219
          %4259 = vmatpush.msra.mxu0 %v4218
          %4260 = vmatpush.msra.mxu0 %v4217
          %4261 = vmatpush.msra.mxu0 %v4216
          %4262 = vmatpush.msra.mxu0 %v4215
          %4263 = vmatpush.msra.mxu0 %v4214
          %4264 = vmatpush.msra.mxu0 %v4213
          %4265 = vmatmul.f32.gmra.mxu0 %v4211
          %v4266 = vpop.f32.mrf.mxu0
          %v4267 = vadd.f32 %v4247, %v4266
          %4268 = vdwg.mxu0
          %4269 = vmatpush.msra.mxu0 %v4244
          %4270 = vmatpush.msra.mxu0 %v4243
          %4271 = vmatpush.msra.mxu0 %v4242
          %4272 = vmatpush.msra.mxu0 %v4241
          %4273 = vmatpush.msra.mxu0 %v4240
          %4274 = vmatpush.msra.mxu0 %v4239
          %4275 = vmatpush.msra.mxu0 %v4238
          %4276 = vmatpush.msra.mxu0 %v4237
          %4277 = vmatpush.msra.mxu0 %v4236
          %4278 = vmatpush.msra.mxu0 %v4235
          %4279 = vmatpush.msra.mxu0 %v4234
          %4280 = vmatpush.msra.mxu0 %v4233
          %4281 = vmatpush.msra.mxu0 %v4232
          %4282 = vmatpush.msra.mxu0 %v4231
          %4283 = vmatpush.msra.mxu0 %v4230
          %4284 = vmatpush.msra.mxu0 %v4229
          %4285 = vmatmul.f32.gmra.mxu0 %v4212
          %v4286 = vpop.f32.mrf.mxu0
          %v4287 = vadd.f32 %v4267, %v4286
          %4288 = vdwg.mxu0
          %vm4289 = vcmask 7168
          %4290 = vst.msk [vmem:[%s545] sm:$0xff] %vm4289, %v4287
        $region92: #{tpu_custom_call.1} parent=55 // pred_fallthru
          _
        %p4291 = scmp.lt.s32.totalorder %s34, 0
        %s4292 = scalar_select %p4291, %s34, 0
        %s4293 = smul.addr %s4292, 8
        %s4294 = scalar_lea.vmem %s9, %s4293
        // Predicated region
        $region93: #{tpu_custom_call.1} parent=55 // pred_check
          %p4295 = pneg %p274
        $region94: #{tpu_custom_call.1} parent=55 // pred_check_branch
          %4297 = sbr.rel (%p4295) target = $region96
        $region95: #{tpu_custom_call.1} parent=55 // pred_region
          _
        $region96: #{tpu_custom_call.1} parent=55 // pred_fallthru
          _
        // Predicated region
        $region97: #{tpu_custom_call.1} parent=55 // pred_check
          %p4298 = pneg %p274
        $region98: #{tpu_custom_call.1} parent=55 // pred_check_branch
          %4300 = sbr.rel (%p4298) target = $region100
        $region99: #{tpu_custom_call.1} parent=55 // pred_region
          %p4301 = scmp.lt.s32.totalorder %s34, 0
          %s4302 = scalar_select %p4301, %s34, 0
          %s4303 = smul.addr %s4302, 8
          %s4304 = scalar_lea.vmem %s9, %s4303
        $region100: #{tpu_custom_call.1} parent=55 // pred_fallthru
          _
      $region56: #{tpu_custom_call.1} parent=5 // pred_fallthru
        _
      %p4305 = scmp.le.s32.totalorder 2, %s25
      // Predicated region
      $region101: #{tpu_custom_call.1} parent=5 // pred_check
        %p4306 = pneg %p4305
      $region102: #{tpu_custom_call.1} parent=5 // pred_check_branch
        %4308 = sbr.rel (%p4306) target = $region104
      $region103: #{tpu_custom_call.1} parent=5 // pred_region
        %s4309 = ssub.s32 %s25, 2
      $region104: #{tpu_custom_call.1} parent=5 // pred_fallthru
        _
    $region6: #{tpu_custom_call.1} parent=1 // loop_footer
      %s29 = sadd.s32 1, %s25
    $region7: #{tpu_custom_call.1} parent=1 // loop_footer_branch
      %24 = sbr.rel target = $region3
    $region8: #{tpu_custom_call.1} parent=1 // loop_exit
      _
    %4310 = vsyncpa [#allocation5], 1
    %s4311 = scalar_lea.sflag [#allocation5], 1
    %4312 = vsyncpa %s4311, 1
    %4313 = vsyncpa [#allocation7], 1
    %4314 = vsyncpa [#allocation10], 1
    %s4315 = scalar_lea.sflag [#allocation10], 1
    %4316 = vsyncpa %s4315, 1
    %4317 = vsyncpa [#allocation13], 1
    %s4318 = scalar_lea.sflag [#allocation13], 1
    %4319 = vsyncpa %s4318, 1

</llo_original>
